<compile_context>
chip_gen: v7x
topology: tpu7x:2x2x1
jax: 0.10.0
libtpu: 0.0.40
codegen_flags: <defaults>
</compile_context>

<pallas_src>
import functools

import numpy as np
import jax
import jax.numpy as jnp
from jax.experimental import pallas as pl
from jax.experimental.pallas import tpu as pltpu


_ROW_ALIGN = 16      # bf16 sublane packing: keep Wp (hence dy*Wp offsets) multiples of 16
_MIN_TILE_ROWS = 8   # bound halo + per-grid-step overhead


def _round_up(x, m):
    return ((x + m - 1) // m) * m


# Generation-aware VMEM limit (cached). ~100 MiB on 128 MiB parts (v5e/v6e), ~51 MiB on
# v7x (64 MiB/TC); falls back to the known-good 48 MiB if the query is unavailable.
_VMEM_LIMIT = [None]


def _vmem_limit_bytes():
    if _VMEM_LIMIT[0] is None:
        try:
            phys = int(pltpu.get_tpu_info().vmem_capacity_bytes)
            if phys <= 0:
                raise ValueError("bad vmem capacity")
            _VMEM_LIMIT[0] = max(48 * 2**20, min(int(phys * 0.8), 100 * 2**20))
        except Exception:
            _VMEM_LIMIT[0] = 48 * 2**20
    return _VMEM_LIMIT[0]


def _tile_pixel_budget(cout, k_total):
    """Flattened output pixels per grid step: large for the overhead-bound small-Cout
    high-resolution layers, smaller for the big-K / Cout=512 layers so blocks + weights
    stay well inside VMEM (incl. v7x's 64 MiB/TC)."""
    if cout >= 512 or k_total >= 2048:
        return 1024
    if cout >= 256 or k_total >= 1024:
        return 2048
    return 4096


# ----------------------------------------------------------------------------
# Pallas kernel: conv as (n_inputs * n_dy) accumulated bf16 MXU matmuls + bias (+ReLU)
# ----------------------------------------------------------------------------
def _make_conv_kernel(n_in, n_dy, wp, relu, out_dtype):
    """refs = (x_0..x_{n_in-1}, w_0..w_{n_in-1}, b, o)

      x_i : ((th + n_dy - 1) * Wp, K_i) bf16  -- dx-folded, haloed row tile for this step
      w_i : (n_dy, K_i, Cout)          bf16  -- resident for the whole layer
      b   : (1, Cout)                  f32
      o   : (th * Wp, Cout)
    """
    def kernel(*refs):
        x_refs = refs[:n_in]
        w_refs = refs[n_in:2 * n_in]
        b_ref = refs[2 * n_in]
        o_ref = refs[2 * n_in + 1]
        m = o_ref.shape[0]                       # flattened output pixels per tile

        acc = None
        for xi in range(n_in):
            for dy in range(n_dy):
                # dy row-shift on the flattened (row*Wp) axis; offset is static and a
                # multiple of 16 (Wp is 16-aligned), so the bf16 load stays packed.
                lhs = x_refs[xi][pl.ds(dy * wp, m), :]
                contrib = jnp.dot(lhs, w_refs[xi][dy],
                                  preferred_element_type=jnp.float32)
                acc = contrib if acc is None else acc + contrib

        y = acc + b_ref[...]
        if relu:
            y = jnp.maximum(y, 0.0)
        o_ref[...] = y.astype(out_dtype)

    return kernel


def fold_weight(w_hwio):
    """HWIO (k, k, Cin, Cout) -> dx-folded bf16 (k, k*Cin, Cout)."""
    kh, kw, cin, cout = w_hwio.shape
    return w_hwio.reshape(kh, kw * cin, cout).astype(jnp.bfloat16)


def conv2d_pallas(xs, wfs, b2, relu, ksize, out_dtype=jnp.bfloat16, tile_pixels=None):
    """Stride-1 SAME conv (+bias, +optional ReLU) via a Pallas TPU kernel.

    xs : list of NHWC activations sharing (N, H, W); jointly contracted over channels
         (equivalent to concatenating them on the channel axis -> fused decoder skip-cat).
    wfs: matching list of pre-folded bf16 weights (ksize, ksize*Cin_i, Cout).
    b2 : (1, Cout) f32 bias.
    """
    n, h, w, _ = xs[0].shape
    cout = wfs[0].shape[-1]
    n_dy = ksize
    halo = ksize - 1
    p = ksize // 2

    # Width padded to a multiple of 16 so dy row shifts land on packed bf16 boundaries;
    # the zero columns only produce garbage output columns sliced off below.
    wp = max(_ROW_ALIGN, _round_up(w, _ROW_ALIGN))

    k_total = sum(wf.shape[1] for wf in wfs)
    if tile_pixels is None:
        tile_pixels = _tile_pixel_budget(cout, k_total)
    th = min(h, max(tile_pixels // wp, _MIN_TILE_ROWS, 1))
    n_tiles = (h + th - 1) // th
    h_pad = n_tiles * th                       # ragged heights -> compute-into-padding
    m = th * wp
    rows_in = (th + halo) * wp

    xfs = []
    for x, wf in zip(xs, wfs):
        kf = wf.shape[1]
        x = x.astype(jnp.bfloat16)
        if ksize == 3:
            xp = jnp.pad(x, ((0, 0), (p, p + (h_pad - h)), (p, p + (wp - w)), (0, 0)))
            # Fold the 3 dx taps into the contraction dim (3x copy, fused by XLA with the
            # haloed row-tile stacking below into a single HBM pass over the activation).
            xcat = jnp.concatenate([xp[:, :, dx:dx + wp, :] for dx in range(3)], axis=-1)
        else:  # 1x1 conv
            xcat = jnp.pad(x, ((0, 0), (0, h_pad - h), (0, wp - w), (0, 0)))
        # Haloed row tiles: tile ri holds padded rows [ri*th, ri*th + th + halo).
        if n_tiles == 1:
            xt = xcat[:, None]
        else:
            xt = jnp.stack(
                [xcat[:, ri * th: ri * th + th + halo] for ri in range(n_tiles)], axis=1)
        xfs.append(xt.reshape(n, n_tiles, rows_in, kf))

    kernel = _make_conv_kernel(len(xs), n_dy, wp, relu, out_dtype)
    in_specs = (
        # Activations: one haloed row tile per grid step (block-indexed, pipelined).
        [pl.BlockSpec((None, None, rows_in, xf.shape[-1]), lambda bi, ri: (bi, ri, 0, 0))
         for xf in xfs]
        # Weights / bias: index map constant -> fetched once, held for the whole layer.
        + [pl.BlockSpec(wf.shape, lambda bi, ri: (0, 0, 0)) for wf in wfs]
        + [pl.BlockSpec((1, cout), lambda bi, ri: (0, 0))]
    )
    out = pl.pallas_call(
        kernel,
        out_shape=jax.ShapeDtypeStruct((n, h_pad * wp, cout), out_dtype),
        grid=(n, n_tiles),
        in_specs=in_specs,
        out_specs=pl.BlockSpec((None, m, cout), lambda bi, ri: (bi, ri, 0)),
        compiler_params=pltpu.CompilerParams(
            dimension_semantics=("parallel", "parallel"),
            vmem_limit_bytes=_vmem_limit_bytes(),
        ),
    )(*xfs, *wfs, b2)

    return out.reshape(n, h_pad, wp, cout)[:, :h, :w, :]


# Pure-JAX reference conv (numerics matched: bf16 operands, f32 accumulation).
def conv2d_reference(xs, ws, b, relu, ksize, out_dtype=jnp.bfloat16):
    x = xs[0] if len(xs) == 1 else jnp.concatenate(xs, axis=-1)
    wt = ws[0] if len(ws) == 1 else jnp.concatenate(ws, axis=2)
    y = jax.lax.conv_general_dilated(
        x.astype(jnp.bfloat16), wt.astype(jnp.bfloat16),
        window_strides=(1, 1), padding="SAME",
        dimension_numbers=("NHWC", "HWIO", "NHWC"),
        preferred_element_type=jnp.float32)
    y = y + b.astype(jnp.float32).reshape(1, 1, 1, -1)
    if relu:
        y = jnp.maximum(y, 0.0)
    return y.astype(out_dtype)


# ----------------------------------------------------------------------------
# Glue ops (cheap data movement, kept in plain JAX)
# ----------------------------------------------------------------------------
def maxpool2x2(x):
    n, h, w, c = x.shape
    return x.reshape(n, h // 2, 2, w // 2, 2, c).max(axis=(2, 4))


def upsample_bilinear(x, hw):
    # jax.image.resize 'bilinear' uses half-pixel centers == torch align_corners=False.
    # Compute in f32, emit bf16 to halve the decoder up-branch HBM bytes.
    n, _, _, c = x.shape
    y = jax.image.resize(x.astype(jnp.float32), (n, hw[0], hw[1], c), method="bilinear")
    return y.astype(jnp.bfloat16)


# ----------------------------------------------------------------------------
# Parameters (deterministic synthetic init, shapes from UNetVgg.__init__)
# ----------------------------------------------------------------------------
def _conv_init(key, kh, kw, cin, cout):
    k_w, k_b = jax.random.split(key)
    fan_in = kh * kw * cin
    wt = jax.random.normal(k_w, (kh, kw, cin, cout), jnp.float32) * np.sqrt(2.0 / fan_in)
    bb = 0.01 * jax.random.normal(k_b, (cout,), jnp.float32)
    return wt, bb


def init_params(key, n_classes):
    specs = {
        "vgg0": [(3, 64), (64, 64)],
        "vgg1": [(64, 128), (128, 128)],
        "vgg2": [(128, 256), (256, 256), (256, 256)],
        "vgg3": [(256, 512), (512, 512), (512, 512)],
        "vgg4": [(512, 512), (512, 512), (512, 512)],
        "smooth3": [(1024, 256), (256, 256)],
        "smooth2": [(512, 128), (128, 128)],
        "smooth1": [(256, 64), (64, 64)],
        "smooth0": [(128, 64), (64, 64)],
    }
    params = {}
    for name, layers in specs.items():
        plist = []
        for cin, cout in layers:
            key, sub = jax.random.split(key)
            plist.append(_conv_init(sub, 3, 3, cin, cout))
        params[name] = plist
    key, sub = jax.random.split(key)
    params["final"] = _conv_init(sub, 1, 1, 64, n_classes)
    return params


_SKIP_CH = {"smooth3": 512, "smooth2": 256, "smooth1": 128, "smooth0": 64}


def prepare_pallas_layers(params, n_classes):
    """One-time (outside jit) weight prep: bf16 cast, (k, k*Cin, Cout) dx-fold, decoder
    skip/up Cin split, and final-conv Cout padded only to a multiple of 8."""
    prep = {}
    for name, plist in params.items():
        if name == "final":
            continue
        entries = []
        for i, (wt, bb) in enumerate(plist):
            b2 = bb.astype(jnp.float32).reshape(1, -1)
            if name.startswith("smooth") and i == 0:
                cs = _SKIP_CH[name]
                entries.append(([fold_weight(wt[:, :, :cs, :]),
                                 fold_weight(wt[:, :, cs:, :])], b2))
            else:
                entries.append(([fold_weight(wt)], b2))
        prep[name] = entries
    wt, bb = params["final"]
    cpad = _round_up(max(n_classes, 1), 8) - n_classes
    wt = jnp.pad(wt, ((0, 0), (0, 0), (0, 0), (0, cpad)))
    bb = jnp.pad(bb, ((0, cpad),))
    prep["final"] = ([fold_weight(wt)], bb.astype(jnp.float32).reshape(1, -1))
    return prep


def prepare_reference_layers(params, n_classes):
    prep = {}
    for name, plist in params.items():
        if name == "final":
            continue
        entries = []
        for i, (wt, bb) in enumerate(plist):
            if name.startswith("smooth") and i == 0:
                cs = _SKIP_CH[name]
                entries.append(([wt[:, :, :cs, :], wt[:, :, cs:, :]], bb))
            else:
                entries.append(([wt], bb))
        prep[name] = entries
    prep["final"] = ([params["final"][0]], params["final"][1])
    return prep


# ----------------------------------------------------------------------------
# UNetVgg forward (mirrors the PyTorch module)
# ----------------------------------------------------------------------------
def unet_vgg_forward(x_nchw, layers, conv_fn, n_classes):
    x = jnp.transpose(x_nchw, (0, 2, 3, 1))        # NCHW -> NHWC

    def vgg_block(y, entries, pool_first):
        if pool_first:
            y = maxpool2x2(y)                       # requires even H, W (input div by 16)
        for ws, b in entries:
            y = conv_fn([y], ws, b, True, 3, jnp.bfloat16)
        return y

    feat0 = vgg_block(x, layers["vgg0"], False)        # (N, H,    W,    64)
    feat1 = vgg_block(feat0, layers["vgg1"], True)     # (N, H/2,  W/2,  128)
    feat2 = vgg_block(feat1, layers["vgg2"], True)     # (N, H/4,  W/4,  256)
    feat3 = vgg_block(feat2, layers["vgg3"], True)     # (N, H/8,  W/8,  512)
    feat4 = vgg_block(feat3, layers["vgg4"], True)     # (N, H/16, W/16, 512)

    def up_cat_smooth(low, skip, entries):
        up = upsample_bilinear(low, (skip.shape[1], skip.shape[2]))
        (w0s, b0), (w1s, b1) = entries
        # torch.cat([skip, up], dim=1) fused into the conv: two inputs, weight split on Cin.
        y = conv_fn([skip, up], w0s, b0, True, 3, jnp.bfloat16)
        y = conv_fn([y], w1s, b1, True, 3, jnp.bfloat16)
        return y

    end3 = up_cat_smooth(feat4, feat3, layers["smooth3"])
    end2 = up_cat_smooth(end3, feat2, layers["smooth2"])
    end1 = up_cat_smooth(end2, feat1, layers["smooth1"])
    end0 = up_cat_smooth(end1, feat0, layers["smooth0"])

    wfs, bf = layers["final"]
    out = conv_fn([end0], wfs, bf, False, 1, jnp.float32)[..., :n_classes]
    return jnp.transpose(out, (0, 3, 1, 2))        # NHWC -> NCHW


# ----------------------------------------------------------------------------
if __name__ == "__main__":
    n_classes = 2
    key = jax.random.PRNGKey(0)
    kp, kx, kt = jax.random.split(key, 3)
    params = init_params(kp, n_classes)

    # --- Per-layer check: non-square H != W, ragged row tiling, fused two-input path ----
    k1, k2, k3, k4, k5 = jax.random.split(kt, 5)
    xa = jax.random.normal(k1, (1, 13, 40, 16), jnp.float32)
    xb = jax.random.normal(k2, (1, 13, 40, 8), jnp.float32)
    wa = 0.1 * jax.random.normal(k3, (3, 3, 16, 64), jnp.float32)
    wb = 0.1 * jax.random.normal(k4, (3, 3, 8, 64), jnp.float32)
    ba = jnp.linspace(-0.5, 0.5, 64, dtype=jnp.float32)
    y_pal = conv2d_pallas([xa, xb], [fold_weight(wa), fold_weight(wb)],
                          ba.reshape(1, -1), True, 3, jnp.float32, tile_pixels=128)
    y_ref = conv2d_reference([xa, xb], [wa, wb], ba, True, 3, jnp.float32)
    np.testing.assert_allclose(np.asarray(y_pal), np.asarray(y_ref), rtol=2e-2, atol=2e-2)

    w1 = 0.2 * jax.random.normal(k5, (1, 1, 16, 8), jnp.float32)
    b1 = jnp.zeros((8,), jnp.float32)
    y1p = conv2d_pallas([xa], [fold_weight(w1)], b1.reshape(1, -1),
                        False, 1, jnp.float32, tile_pixels=256)
    y1r = conv2d_reference([xa], [w1], b1, False, 1, jnp.float32)
    np.testing.assert_allclose(np.asarray(y1p), np.asarray(y1r), rtol=2e-2, atol=2e-2)

    # --- End-to-end check (non-square, H and W divisible by 16 for the 4 max-pools) -----
    x = jax.random.normal(kx, (2, 3, 32, 48), jnp.float32)
    pallas_layers = prepare_pallas_layers(params, n_classes)
    ref_layers = prepare_reference_layers(params, n_classes)

    pallas_fwd = jax.jit(functools.partial(
        unet_vgg_forward, conv_fn=conv2d_pallas, n_classes=n_classes))
    ref_fwd = jax.jit(functools.partial(
        unet_vgg_forward, conv_fn=conv2d_reference, n_classes=n_classes))

    out = jax.block_until_ready(pallas_fwd(x, pallas_layers))
    assert out.shape == (2, n_classes, 32, 48), out.shape
    assert bool(jnp.all(jnp.isfinite(out)))

    ref = jax.block_until_ready(ref_fwd(x, ref_layers))
    np.testing.assert_allclose(np.asarray(out), np.asarray(ref), rtol=1e-1, atol=1e-1)

    print("KERNEL_OK")
</pallas_src>

<mosaic_0001>
module attributes {stable_mosaic.version = 11 : i64} {
  func.func @kernel(%arg0: i32, %arg1: i32, %arg2: memref<1x1x480x48xbf16, #tpu.memory_space<vmem>>, %arg3: memref<1x1x480x24xbf16, #tpu.memory_space<vmem>>, %arg4: memref<3x48x64xbf16, #tpu.memory_space<vmem>>, %arg5: memref<3x24x64xbf16, #tpu.memory_space<vmem>>, %arg6: memref<1x64xf32, #tpu.memory_space<vmem>>, %arg7: memref<1x384x64xf32, #tpu.memory_space<vmem>>) attributes {dimension_semantics = [#tpu.dimension_semantics<parallel>, #tpu.dimension_semantics<parallel>], iteration_bounds = array<i64: 1, 2>, scalar_prefetch = 0 : i64, scratch_operands = 0 : i64, tpu.core_type = #tpu.core_type<tc>, window_params = [{transform_indices = @transform_0, window_bounds = array<i64: 1, 1, 480, 48>}, {transform_indices = @transform_1, window_bounds = array<i64: 1, 1, 480, 24>}, {pipeline_mode = #tpu.pipeline_mode<synchronous>, transform_indices = @transform_2, window_bounds = array<i64: 3, 48, 64>}, {pipeline_mode = #tpu.pipeline_mode<synchronous>, transform_indices = @transform_3, window_bounds = array<i64: 3, 24, 64>}, {pipeline_mode = #tpu.pipeline_mode<synchronous>, transform_indices = @transform_4, window_bounds = array<i64: 1, 64>}, {transform_indices = @transform_5, window_bounds = array<i64: 1, 384, 64>}]} {
    %c0 = arith.constant 0 : index
    %c0_0 = arith.constant 0 : index
    %c0_1 = arith.constant 0 : index
    %c0_2 = arith.constant 0 : index
    %0 = vector.load %arg2[%c0, %c0_0, %c0_1, %c0_2] : memref<1x1x480x48xbf16, #tpu.memory_space<vmem>>, vector<1x1x384x48xbf16>
    %1 = vector.shape_cast %0 : vector<1x1x384x48xbf16> to vector<384x48xbf16>
    %c0_3 = arith.constant 0 : index
    %c0_4 = arith.constant 0 : index
    %c0_5 = arith.constant 0 : index
    %2 = vector.load %arg4[%c0_3, %c0_4, %c0_5] : memref<3x48x64xbf16, #tpu.memory_space<vmem>>, vector<1x48x64xbf16>
    %3 = vector.shape_cast %2 : vector<1x48x64xbf16> to vector<48x64xbf16>
    %cst = arith.constant dense<0.000000e+00> : vector<384x64xf32>
    %4 = tpu.matmul %1, %3, %cst {dimension_numbers = #tpu.dot_dimension_numbers<[1], [0], [0], [1], [0, 0, 1, 1], [], []>} : vector<384x48xbf16>, vector<48x64xbf16>, vector<384x64xf32> -> vector<384x64xf32>
    %c0_6 = arith.constant 0 : index
    %c0_7 = arith.constant 0 : index
    %c48 = arith.constant 48 : index
    %c0_8 = arith.constant 0 : index
    %5 = vector.load %arg2[%c0_6, %c0_7, %c48, %c0_8] : memref<1x1x480x48xbf16, #tpu.memory_space<vmem>>, vector<1x1x384x48xbf16>
    %6 = vector.shape_cast %5 : vector<1x1x384x48xbf16> to vector<384x48xbf16>
    %c1 = arith.constant 1 : index
    %c0_9 = arith.constant 0 : index
    %c0_10 = arith.constant 0 : index
    %7 = vector.load %arg4[%c1, %c0_9, %c0_10] : memref<3x48x64xbf16, #tpu.memory_space<vmem>>, vector<1x48x64xbf16>
    %8 = vector.shape_cast %7 : vector<1x48x64xbf16> to vector<48x64xbf16>
    %cst_11 = arith.constant dense<0.000000e+00> : vector<384x64xf32>
    %9 = tpu.matmul %6, %8, %cst_11 {dimension_numbers = #tpu.dot_dimension_numbers<[1], [0], [0], [1], [0, 0, 1, 1], [], []>} : vector<384x48xbf16>, vector<48x64xbf16>, vector<384x64xf32> -> vector<384x64xf32>
    %10 = arith.addf %4, %9 : vector<384x64xf32>
    %c0_12 = arith.constant 0 : index
    %c0_13 = arith.constant 0 : index
    %c96 = arith.constant 96 : index
    %c0_14 = arith.constant 0 : index
    %11 = vector.load %arg2[%c0_12, %c0_13, %c96, %c0_14] : memref<1x1x480x48xbf16, #tpu.memory_space<vmem>>, vector<1x1x384x48xbf16>
    %12 = vector.shape_cast %11 : vector<1x1x384x48xbf16> to vector<384x48xbf16>
    %c2 = arith.constant 2 : index
    %c0_15 = arith.constant 0 : index
    %c0_16 = arith.constant 0 : index
    %13 = vector.load %arg4[%c2, %c0_15, %c0_16] : memref<3x48x64xbf16, #tpu.memory_space<vmem>>, vector<1x48x64xbf16>
    %14 = vector.shape_cast %13 : vector<1x48x64xbf16> to vector<48x64xbf16>
    %cst_17 = arith.constant dense<0.000000e+00> : vector<384x64xf32>
    %15 = tpu.matmul %12, %14, %cst_17 {dimension_numbers = #tpu.dot_dimension_numbers<[1], [0], [0], [1], [0, 0, 1, 1], [], []>} : vector<384x48xbf16>, vector<48x64xbf16>, vector<384x64xf32> -> vector<384x64xf32>
    %16 = arith.addf %10, %15 : vector<384x64xf32>
    %c0_18 = arith.constant 0 : index
    %c0_19 = arith.constant 0 : index
    %c0_20 = arith.constant 0 : index
    %c0_21 = arith.constant 0 : index
    %17 = vector.load %arg3[%c0_18, %c0_19, %c0_20, %c0_21] : memref<1x1x480x24xbf16, #tpu.memory_space<vmem>>, vector<1x1x384x24xbf16>
    %18 = vector.shape_cast %17 : vector<1x1x384x24xbf16> to vector<384x24xbf16>
    %c0_22 = arith.constant 0 : index
    %c0_23 = arith.constant 0 : index
    %c0_24 = arith.constant 0 : index
    %19 = vector.load %arg5[%c0_22, %c0_23, %c0_24] : memref<3x24x64xbf16, #tpu.memory_space<vmem>>, vector<1x24x64xbf16>
    %20 = vector.shape_cast %19 : vector<1x24x64xbf16> to vector<24x64xbf16>
    %cst_25 = arith.constant dense<0.000000e+00> : vector<384x64xf32>
    %21 = tpu.matmul %18, %20, %cst_25 {dimension_numbers = #tpu.dot_dimension_numbers<[1], [0], [0], [1], [0, 0, 1, 1], [], []>} : vector<384x24xbf16>, vector<24x64xbf16>, vector<384x64xf32> -> vector<384x64xf32>
    %22 = arith.addf %16, %21 : vector<384x64xf32>
    %c0_26 = arith.constant 0 : index
    %c0_27 = arith.constant 0 : index
    %c48_28 = arith.constant 48 : index
    %c0_29 = arith.constant 0 : index
    %23 = vector.load %arg3[%c0_26, %c0_27, %c48_28, %c0_29] : memref<1x1x480x24xbf16, #tpu.memory_space<vmem>>, vector<1x1x384x24xbf16>
    %24 = vector.shape_cast %23 : vector<1x1x384x24xbf16> to vector<384x24xbf16>
    %c1_30 = arith.constant 1 : index
    %c0_31 = arith.constant 0 : index
    %c0_32 = arith.constant 0 : index
    %25 = vector.load %arg5[%c1_30, %c0_31, %c0_32] : memref<3x24x64xbf16, #tpu.memory_space<vmem>>, vector<1x24x64xbf16>
    %26 = vector.shape_cast %25 : vector<1x24x64xbf16> to vector<24x64xbf16>
    %cst_33 = arith.constant dense<0.000000e+00> : vector<384x64xf32>
    %27 = tpu.matmul %24, %26, %cst_33 {dimension_numbers = #tpu.dot_dimension_numbers<[1], [0], [0], [1], [0, 0, 1, 1], [], []>} : vector<384x24xbf16>, vector<24x64xbf16>, vector<384x64xf32> -> vector<384x64xf32>
    %28 = arith.addf %22, %27 : vector<384x64xf32>
    %c0_34 = arith.constant 0 : index
    %c0_35 = arith.constant 0 : index
    %c96_36 = arith.constant 96 : index
    %c0_37 = arith.constant 0 : index
    %29 = vector.load %arg3[%c0_34, %c0_35, %c96_36, %c0_37] : memref<1x1x480x24xbf16, #tpu.memory_space<vmem>>, vector<1x1x384x24xbf16>
    %30 = vector.shape_cast %29 : vector<1x1x384x24xbf16> to vector<384x24xbf16>
    %c2_38 = arith.constant 2 : index
    %c0_39 = arith.constant 0 : index
    %c0_40 = arith.constant 0 : index
    %31 = vector.load %arg5[%c2_38, %c0_39, %c0_40] : memref<3x24x64xbf16, #tpu.memory_space<vmem>>, vector<1x24x64xbf16>
    %32 = vector.shape_cast %31 : vector<1x24x64xbf16> to vector<24x64xbf16>
    %cst_41 = arith.constant dense<0.000000e+00> : vector<384x64xf32>
    %33 = tpu.matmul %30, %32, %cst_41 {dimension_numbers = #tpu.dot_dimension_numbers<[1], [0], [0], [1], [0, 0, 1, 1], [], []>} : vector<384x24xbf16>, vector<24x64xbf16>, vector<384x64xf32> -> vector<384x64xf32>
    %34 = arith.addf %28, %33 : vector<384x64xf32>
    %c0_42 = arith.constant 0 : index
    %c0_43 = arith.constant 0 : index
    %35 = vector.load %arg6[%c0_42, %c0_43] : memref<1x64xf32, #tpu.memory_space<vmem>>, vector<1x64xf32>
    %36 = vector.broadcast %35 : vector<1x64xf32> to vector<384x64xf32>
    %37 = arith.addf %34, %36 : vector<384x64xf32>
    %cst_44 = arith.constant 0.000000e+00 : f32
    %38 = vector.broadcast %cst_44 : f32 to vector<384x64xf32>
    %39 = arith.maximumf %37, %38 : vector<384x64xf32>
    %c0_45 = arith.constant 0 : index
    %c0_46 = arith.constant 0 : index
    %c0_47 = arith.constant 0 : index
    %40 = vector.load %arg7[%c0_45, %c0_46, %c0_47] : memref<1x384x64xf32, #tpu.memory_space<vmem>>, vector<1x384x64xf32>
    %41 = vector.shape_cast %40 : vector<1x384x64xf32> to vector<384x64xf32>
    %42 = vector.shape_cast %39 : vector<384x64xf32> to vector<1x384x64xf32>
    tpu.vector_store %arg7[%c0_45, %c0_46, %c0_47], %42 {strides = array<i32>} : memref<1x384x64xf32, #tpu.memory_space<vmem>>, vector<1x384x64xf32>,
    return
  }
  func.func @transform_0(%arg0: i32, %arg1: i32) -> (i32, i32, i32, i32) {
    %c0_i32 = arith.constant 0 : i32
    %c0_i32_0 = arith.constant 0 : i32
    %c0_i32_1 = arith.constant 0 : i32
    return %arg0, %arg1, %c0_i32, %c0_i32_0 : i32, i32, i32, i32
  }
  func.func @transform_1(%arg0: i32, %arg1: i32) -> (i32, i32, i32, i32) {
    %c0_i32 = arith.constant 0 : i32
    %c0_i32_0 = arith.constant 0 : i32
    %c0_i32_1 = arith.constant 0 : i32
    return %arg0, %arg1, %c0_i32, %c0_i32_0 : i32, i32, i32, i32
  }
  func.func @transform_2(%arg0: i32, %arg1: i32) -> (i32, i32, i32) {
    %c0_i32 = arith.constant 0 : i32
    %c0_i32_0 = arith.constant 0 : i32
    %c0_i32_1 = arith.constant 0 : i32
    %c0_i32_2 = arith.constant 0 : i32
    return %c0_i32, %c0_i32_0, %c0_i32_1 : i32, i32, i32
  }
  func.func @transform_3(%arg0: i32, %arg1: i32) -> (i32, i32, i32) {
    %c0_i32 = arith.constant 0 : i32
    %c0_i32_0 = arith.constant 0 : i32
    %c0_i32_1 = arith.constant 0 : i32
    %c0_i32_2 = arith.constant 0 : i32
    return %c0_i32, %c0_i32_0, %c0_i32_1 : i32, i32, i32
  }
  func.func @transform_4(%arg0: i32, %arg1: i32) -> (i32, i32) {
    %c0_i32 = arith.constant 0 : i32
    %c0_i32_0 = arith.constant 0 : i32
    %c0_i32_1 = arith.constant 0 : i32
    return %c0_i32, %c0_i32_0 : i32, i32
  }
  func.func @transform_5(%arg0: i32, %arg1: i32) -> (i32, i32, i32) {
    %c0_i32 = arith.constant 0 : i32
    %c0_i32_0 = arith.constant 0 : i32
    return %arg0, %arg1, %c0_i32 : i32, i32, i32
  }
}

</mosaic_0001>

<llo_original>
// kernel: tpu_custom_call.1
$region0: #{tpu_custom_call.1}
  #allocation0 [shape = 'u32[]', space=smem, size = 0x4, offset = 0x4, fixed_abs, tag = 'smem constant byte address 0x4 - core index']
  #allocation1 [shape = 'u32[144,128]{1,0:T(1,128)}', space=vmem, size = 0x12000, scoped, tag = 'internal scratch']
  %s0 = inlined_call_operand.vmem [shape: bf16[1,2,480,48], index: 0, kind: input, shape index: {}]
  %s1 = inlined_call_operand.vmem [shape: bf16[1,2,480,24], index: 1, kind: input, shape index: {}]
  %s2 = inlined_call_operand.vmem [shape: bf16[3,48,64], index: 2, kind: input, shape index: {}]
  %s3 = inlined_call_operand.vmem [shape: bf16[3,24,64], index: 3, kind: input, shape index: {}]
  %s4 = inlined_call_operand.vmem [shape: f32[1,64], index: 4, kind: input, shape index: {}]
  %s5 = inlined_call_operand.vmem [shape: f32[1,768,64], index: 5, kind: output, shape index: {}]
  %s6 = sld [smem:[#allocation0]]
  $region53: #{tpu_custom_call.1} parent=0
    _
  %s8 = ssub.s32 1, %s6
  %s9 = scalar_select 0, %s8, %s6
  loop: start=0, step=1, limit=4
  $region2: #{tpu_custom_call.1} parent=0 // loop_pre_header
    _
  $region3: #{tpu_custom_call.1} parent=0 // loop_header
    %s11 = sphi 0, %s15
    %p12 = scmp.ge.s32.totalorder %s11, 4
    %s18 = sphi 0, %s30
    %s19 = sphi 0, %s26
    %s20 = sphi 0, %s18
    %s21 = sphi 0, %s19
    %s22 = sphi 0, %s20
    %s23 = sphi 0, %s21
    %s35 = sphi 0, %s37
    %s38 = sphi 0, %s35
    %s39 = sphi 0, %s38
    %s55 = sphi 0, %s39
    %s63 = sphi 0, %s65
    %s66 = sphi 0, %s63
    %s67 = sphi 0, %s66
    %s83 = sphi 0, %s67
    %s87 = sphi 0, %s87
    %s89 = sphi 0, %s87
    %s90 = sphi 0, %s89
    %s104 = sphi 0, %s90
    %s108 = sphi 0, %s108
    %s110 = sphi 0, %s108
    %s111 = sphi 0, %s110
    %s125 = sphi 0, %s111
    %s129 = sphi 0, %s129
    %s131 = sphi 0, %s129
    %s132 = sphi 0, %s131
    %s146 = sphi 0, %s132
    %s154 = sphi 0, %s156
    %s157 = sphi 0, %s154
    %s158 = sphi 0, %s157
    %s174 = sphi 0, %s158
  $region4: #{tpu_custom_call.1} parent=0 // loop_header_branch
    %14 = sbr.rel (%p12) target = $region8
  $region5: #{tpu_custom_call.1} parent=0 // loop_body
    %s16 = ssub.s32 %s11, 1
    %s17 = ssub.s32 %s11, 2
    %s24 = sadd.s32 1, %s19
    %p25 = scmp.ge.s32.totalorder %s24, 2
    %s26 = scalar_select %p25, 0, %s24
    %s27 = sadd.s32 1, %s18
    %s28 = scalar_select %p25, %s27, %s18
    %p29 = scmp.ge.s32.totalorder %s28, 1
    %s30 = scalar_select %p29, 0, %s28
    %s31 = ssub.s32 %s18, %s30
    %s32 = ssub.s32 %s19, %s26
    %s33 = sor.u32 %s31, %s32
    %p34 = scmp.eq.s32.totalorder %s33, 0
    %s36 = sadd.s32 %s35, 1
    %s37 = scalar_select %p34, %s35, %s36
    %p40 = pneg %p34
    %p41 = scmp.eq.s32.totalorder %s11, 1
    %p42 = por %p40, %p41
    %p43 = scmp.ne.s32.totalorder %s35, %s38
    %p44 = scmp.eq.s32.totalorder %s11, 0
    %p45 = por %p43, %p44
    %p46 = scmp.ne.s32.totalorder %s35, %s38
    %p47 = scmp.eq.s32.totalorder %s16, 1
    %p48 = por %p46, %p47
    %p49 = scmp.ne.s32.totalorder %s38, %s39
    %p50 = scmp.eq.s32.totalorder %s16, 0
    %p51 = por %p49, %p50
    %p52 = scmp.ne.s32.totalorder %s38, %s39
    %p53 = scmp.eq.s32.totalorder %s17, 1
    %p54 = por %p52, %p53
    %p56 = scmp.ne.s32.totalorder %s39, %s55
    %p57 = scmp.eq.s32.totalorder %s17, 0
    %p58 = por %p56, %p57
    %s59 = ssub.s32 %s18, %s30
    %s60 = ssub.s32 %s19, %s26
    %s61 = sor.u32 %s59, %s60
    %p62 = scmp.eq.s32.totalorder %s61, 0
    %s64 = sadd.s32 %s63, 1
    %s65 = scalar_select %p62, %s63, %s64
    %p68 = pneg %p62
    %p69 = scmp.eq.s32.totalorder %s11, 1
    %p70 = por %p68, %p69
    %p71 = scmp.ne.s32.totalorder %s63, %s66
    %p72 = scmp.eq.s32.totalorder %s11, 0
    %p73 = por %p71, %p72
    %p74 = scmp.ne.s32.totalorder %s63, %s66
    %p75 = scmp.eq.s32.totalorder %s16, 1
    %p76 = por %p74, %p75
    %p77 = scmp.ne.s32.totalorder %s66, %s67
    %p78 = scmp.eq.s32.totalorder %s16, 0
    %p79 = por %p77, %p78
    %p80 = scmp.ne.s32.totalorder %s66, %s67
    %p81 = scmp.eq.s32.totalorder %s17, 1
    %p82 = por %p80, %p81
    %p84 = scmp.ne.s32.totalorder %s67, %s83
    %p85 = scmp.eq.s32.totalorder %s17, 0
    %p86 = por %p84, %p85
    %s88 = sadd.s32 %s87, 1
    %p91 = scmp.eq.s32.totalorder %s11, 1
    %p92 = scmp.ne.s32.totalorder %s87, %s89
    %p93 = scmp.eq.s32.totalorder %s11, 0
    %p94 = por %p92, %p93
    %p95 = scmp.ne.s32.totalorder %s87, %s89
    %p96 = scmp.eq.s32.totalorder %s16, 1
    %p97 = por %p95, %p96
    %p98 = scmp.ne.s32.totalorder %s89, %s90
    %p99 = scmp.eq.s32.totalorder %s16, 0
    %p100 = por %p98, %p99
    %p101 = scmp.ne.s32.totalorder %s89, %s90
    %p102 = scmp.eq.s32.totalorder %s17, 1
    %p103 = por %p101, %p102
    %p105 = scmp.ne.s32.totalorder %s90, %s104
    %p106 = scmp.eq.s32.totalorder %s17, 0
    %p107 = por %p105, %p106
    %s109 = sadd.s32 %s108, 1
    %p112 = scmp.eq.s32.totalorder %s11, 1
    %p113 = scmp.ne.s32.totalorder %s108, %s110
    %p114 = scmp.eq.s32.totalorder %s11, 0
    %p115 = por %p113, %p114
    %p116 = scmp.ne.s32.totalorder %s108, %s110
    %p117 = scmp.eq.s32.totalorder %s16, 1
    %p118 = por %p116, %p117
    %p119 = scmp.ne.s32.totalorder %s110, %s111
    %p120 = scmp.eq.s32.totalorder %s16, 0
    %p121 = por %p119, %p120
    %p122 = scmp.ne.s32.totalorder %s110, %s111
    %p123 = scmp.eq.s32.totalorder %s17, 1
    %p124 = por %p122, %p123
    %p126 = scmp.ne.s32.totalorder %s111, %s125
    %p127 = scmp.eq.s32.totalorder %s17, 0
    %p128 = por %p126, %p127
    %s130 = sadd.s32 %s129, 1
    %p133 = scmp.eq.s32.totalorder %s11, 1
    %p134 = scmp.ne.s32.totalorder %s129, %s131
    %p135 = scmp.eq.s32.totalorder %s11, 0
    %p136 = por %p134, %p135
    %p137 = scmp.ne.s32.totalorder %s129, %s131
    %p138 = scmp.eq.s32.totalorder %s16, 1
    %p139 = por %p137, %p138
    %p140 = scmp.ne.s32.totalorder %s131, %s132
    %p141 = scmp.eq.s32.totalorder %s16, 0
    %p142 = por %p140, %p141
    %p143 = scmp.ne.s32.totalorder %s131, %s132
    %p144 = scmp.eq.s32.totalorder %s17, 1
    %p145 = por %p143, %p144
    %p147 = scmp.ne.s32.totalorder %s132, %s146
    %p148 = scmp.eq.s32.totalorder %s17, 0
    %p149 = por %p147, %p148
    %s150 = ssub.s32 %s18, %s30
    %s151 = ssub.s32 %s19, %s26
    %s152 = sor.u32 %s150, %s151
    %p153 = scmp.eq.s32.totalorder %s152, 0
    %s155 = sadd.s32 %s154, 1
    %s156 = scalar_select %p153, %s154, %s155
    %p159 = pneg %p153
    %p160 = scmp.eq.s32.totalorder %s11, 1
    %p161 = por %p159, %p160
    %p162 = scmp.ne.s32.totalorder %s154, %s157
    %p163 = scmp.eq.s32.totalorder %s11, 0
    %p164 = por %p162, %p163
    %p165 = scmp.ne.s32.totalorder %s154, %s157
    %p166 = scmp.eq.s32.totalorder %s16, 1
    %p167 = por %p165, %p166
    %p168 = scmp.ne.s32.totalorder %s157, %s158
    %p169 = scmp.eq.s32.totalorder %s16, 0
    %p170 = por %p168, %p169
    %p171 = scmp.ne.s32.totalorder %s157, %s158
    %p172 = scmp.eq.s32.totalorder %s17, 1
    %p173 = por %p171, %p172
    %p175 = scmp.ne.s32.totalorder %s158, %s174
    %p176 = scmp.eq.s32.totalorder %s17, 0
    %p177 = por %p175, %p176
    %p178 = scmp.le.s32.totalorder 1, %s11
    %p179 = scmp.lt.s32.totalorder %s11, 3
    %p180 = pnand %p178, %p179
    %p181 = pneg %p180
    // Predicated region
    $region9: #{tpu_custom_call.1} parent=5 // pred_check
      _
    $region10: #{tpu_custom_call.1} parent=5 // pred_check_branch
      %183 = sbr.rel (%p180) target = $region12
    $region11: #{tpu_custom_call.1} parent=5 // pred_region
      %s184 = ssub.s32 %s11, 1
      // Predicated region
      $region13: #{tpu_custom_call.1} parent=11 // pred_check
        %p185 = pneg %p100
      $region14: #{tpu_custom_call.1} parent=11 // pred_check_branch
        %187 = sbr.rel (%p185) target = $region16
      $region15: #{tpu_custom_call.1} parent=11 // pred_region
        _
      $region16: #{tpu_custom_call.1} parent=11 // pred_fallthru
        _
      // Predicated region
      $region17: #{tpu_custom_call.1} parent=11 // pred_check
        %p188 = pneg %p121
      $region18: #{tpu_custom_call.1} parent=11 // pred_check_branch
        %190 = sbr.rel (%p188) target = $region20
      $region19: #{tpu_custom_call.1} parent=11 // pred_region
        _
      $region20: #{tpu_custom_call.1} parent=11 // pred_fallthru
        _
      // Predicated region
      $region21: #{tpu_custom_call.1} parent=11 // pred_check
        %p191 = pneg %p142
      $region22: #{tpu_custom_call.1} parent=11 // pred_check_branch
        %193 = sbr.rel (%p191) target = $region24
      $region23: #{tpu_custom_call.1} parent=11 // pred_region
        _
      $region24: #{tpu_custom_call.1} parent=11 // pred_fallthru
        _
    $region12: #{tpu_custom_call.1} parent=5 // pred_fallthru
      _
    %p194 = scmp.lt.s32.totalorder %s11, 2
    // Predicated region
    $region25: #{tpu_custom_call.1} parent=5 // pred_check
      %p195 = pneg %p194
    $region26: #{tpu_custom_call.1} parent=5 // pred_check_branch
      %197 = sbr.rel (%p195) target = $region28
    $region27: #{tpu_custom_call.1} parent=5 // pred_region
      // Predicated region
      $region29: #{tpu_custom_call.1} parent=27 // pred_check
        %p198 = pneg %p45
      $region30: #{tpu_custom_call.1} parent=27 // pred_check_branch
        %200 = sbr.rel (%p198) target = $region32
      $region31: #{tpu_custom_call.1} parent=27 // pred_region
        %p201 = scmp.lt.s32.totalorder %s18, 0
        %s202 = scalar_select %p201, %s18, 0
        %p203 = scmp.lt.s32.totalorder %s19, 1
        %s204 = scalar_select %p203, %s19, 1
        %s205 = smul.addr %s204, 60
        %s206 = smul.addr %s202, 120
        %s207 = sadd.s32 %s205, %s206
        %s208 = smul.addr %s207, 4
        %s209 = scalar_lea.vmem %s0, %s208
      $region32: #{tpu_custom_call.1} parent=27 // pred_fallthru
        _
      // Predicated region
      $region33: #{tpu_custom_call.1} parent=27 // pred_check
        %p210 = pneg %p73
      $region34: #{tpu_custom_call.1} parent=27 // pred_check_branch
        %212 = sbr.rel (%p210) target = $region36
      $region35: #{tpu_custom_call.1} parent=27 // pred_region
        %p213 = scmp.lt.s32.totalorder %s18, 0
        %s214 = scalar_select %p213, %s18, 0
        %p215 = scmp.lt.s32.totalorder %s19, 1
        %s216 = scalar_select %p215, %s19, 1
        %s217 = smul.addr %s216, 60
        %s218 = smul.addr %s214, 120
        %s219 = sadd.s32 %s217, %s218
        %s220 = smul.addr %s219, 4
        %s221 = scalar_lea.vmem %s1, %s220
      $region36: #{tpu_custom_call.1} parent=27 // pred_fallthru
        _
    $region28: #{tpu_custom_call.1} parent=5 // pred_fallthru
      _
    %p222 = scmp.le.s32.totalorder 1, %s11
    %p223 = scmp.lt.s32.totalorder %s11, 3
    %p224 = pnand %p222, %p223
    %p225 = pneg %p224
    // Predicated region
    $region37: #{tpu_custom_call.1} parent=5 // pred_check
      _
    $region38: #{tpu_custom_call.1} parent=5 // pred_check_branch
      %227 = sbr.rel (%p224) target = $region40
    $region39: #{tpu_custom_call.1} parent=5 // pred_region
      %s228 = ssub.s32 %s11, 1
      %p229 = scmp.lt.s32.totalorder %s20, 0
      %s230 = scalar_select %p229, %s20, 0
      %p231 = scmp.lt.s32.totalorder %s21, 1
      %s232 = scalar_select %p231, %s21, 1
      %s233 = smul.addr %s232, 60
      %s234 = smul.addr %s230, 120
      %s235 = sadd.s32 %s233, %s234
      %s236 = smul.addr %s235, 4
      %s237 = scalar_lea.vmem %s0, %s236
      %p238 = pneg %p51
      %p239 = pneg %p48
      %p240 = scmp.lt.s32.totalorder %s20, 0
      %s241 = scalar_select %p240, %s20, 0
      %p242 = scmp.lt.s32.totalorder %s21, 1
      %s243 = scalar_select %p242, %s21, 1
      %s244 = smul.addr %s243, 60
      %s245 = smul.addr %s241, 120
      %s246 = sadd.s32 %s244, %s245
      %s247 = smul.addr %s246, 4
      %s248 = scalar_lea.vmem %s1, %s247
      %p249 = pneg %p79
      %p250 = pneg %p76
      %p251 = pneg %p100
      %p252 = pneg %p97
      %p253 = pneg %p121
      %p254 = pneg %p118
      %p255 = pneg %p142
      %p256 = pneg %p139
      %p257 = pneg %p170
      %p258 = pneg %p167
      %s259 = smul.u32 48, %s21
      %p260 = scmp.lt.s32.totalorder %s20, 0
      %s261 = scalar_select %p260, %s20, 0
      %p262 = scmp.lt.s32.totalorder %s259, 95
      %s263 = scalar_select %p262, %s259, 95
      %s264 = smul.addr %s261, 96
      %s265 = sadd.s32 %s263, %s264
      %s266 = smul.addr %s265, 8
      %s267 = scalar_lea.vmem %s5, %s266
      %p268 = scmp.lt.s32.totalorder %s20, 0
      %s269 = scalar_select %p268, %s20, 0
      %p270 = scmp.lt.s32.totalorder %s21, 1
      %s271 = scalar_select %p270, %s21, 1
      %s272 = smul.addr %s271, 60
      %s273 = smul.addr %s269, 120
      %s274 = sadd.s32 %s272, %s273
      %s275 = smul.addr %s274, 4
      %s276 = scalar_lea.vmem %s0, %s275
      %p277 = scmp.lt.s32.totalorder %s20, 0
      %s278 = scalar_select %p277, %s20, 0
      %p279 = scmp.lt.s32.totalorder %s21, 1
      %s280 = scalar_select %p279, %s21, 1
      %s281 = smul.addr %s280, 60
      %s282 = smul.addr %s278, 120
      %s283 = sadd.s32 %s281, %s282
      %s284 = smul.addr %s283, 4
      %s285 = scalar_lea.vmem %s1, %s284
      %s286 = smul.u32 48, %s21
      %p287 = scmp.lt.s32.totalorder %s20, 0
      %s288 = scalar_select %p287, %s20, 0
      %p289 = scmp.lt.s32.totalorder %s286, 95
      %s290 = scalar_select %p289, %s286, 95
      %s291 = smul.addr %s288, 96
      %s292 = sadd.s32 %s290, %s291
      %s293 = smul.addr %s292, 8
      %s294 = scalar_lea.vmem %s5, %s293
      %s295 = smul.u32 48, %s21
      %v297 = vld [vmem:[%s276] sm:$0xf]
      %v298 = vld [vmem:[%s276 + $0x4] sm:$0xf]
      %v299 = vld [vmem:[%s276 + $0x8] sm:$0xf]
      %v300 = vld [vmem:[%s276 + $0xc] sm:$0xf]
      %v301 = vld [vmem:[%s276 + $0x10] sm:$0xf]
      %v302 = vld [vmem:[%s276 + $0x14] sm:$0xf]
      %v303 = vld [vmem:[%s276 + $0x18] sm:$0xf]
      %v304 = vld [vmem:[%s276 + $0x1c] sm:$0xf]
      %v305 = vld [vmem:[%s276 + $0x20] sm:$0xf]
      %v306 = vld [vmem:[%s276 + $0x24] sm:$0xf]
      %v307 = vld [vmem:[%s276 + $0x28] sm:$0xf]
      %v308 = vld [vmem:[%s276 + $0x2c] sm:$0xf]
      %v309 = vld [vmem:[%s276 + $0x30] sm:$0xf]
      %v310 = vld [vmem:[%s276 + $0x34] sm:$0xf]
      %v311 = vld [vmem:[%s276 + $0x38] sm:$0xf]
      %v312 = vld [vmem:[%s276 + $0x3c] sm:$0xf]
      %v313 = vld [vmem:[%s276 + $0x40] sm:$0xf]
      %v314 = vld [vmem:[%s276 + $0x44] sm:$0xf]
      %v315 = vld [vmem:[%s276 + $0x48] sm:$0xf]
      %v316 = vld [vmem:[%s276 + $0x4c] sm:$0xf]
      %v317 = vld [vmem:[%s276 + $0x50] sm:$0xf]
      %v318 = vld [vmem:[%s276 + $0x54] sm:$0xf]
      %v319 = vld [vmem:[%s276 + $0x58] sm:$0xf]
      %v320 = vld [vmem:[%s276 + $0x5c] sm:$0xf]
      %v321 = vld [vmem:[%s276 + $0x60] sm:$0xf]
      %v322 = vld [vmem:[%s276 + $0x64] sm:$0xf]
      %v323 = vld [vmem:[%s276 + $0x68] sm:$0xf]
      %v324 = vld [vmem:[%s276 + $0x6c] sm:$0xf]
      %v325 = vld [vmem:[%s276 + $0x70] sm:$0xf]
      %v326 = vld [vmem:[%s276 + $0x74] sm:$0xf]
      %v327 = vld [vmem:[%s276 + $0x78] sm:$0xf]
      %v328 = vld [vmem:[%s276 + $0x7c] sm:$0xf]
      %v329 = vld [vmem:[%s276 + $0x80] sm:$0xf]
      %v330 = vld [vmem:[%s276 + $0x84] sm:$0xf]
      %v331 = vld [vmem:[%s276 + $0x88] sm:$0xf]
      %v332 = vld [vmem:[%s276 + $0x8c] sm:$0xf]
      %v333 = vld [vmem:[%s276 + $0x90] sm:$0xf]
      %v334 = vld [vmem:[%s276 + $0x94] sm:$0xf]
      %v335 = vld [vmem:[%s276 + $0x98] sm:$0xf]
      %v336 = vld [vmem:[%s276 + $0x9c] sm:$0xf]
      %v337 = vld [vmem:[%s276 + $0xa0] sm:$0xf]
      %v338 = vld [vmem:[%s276 + $0xa4] sm:$0xf]
      %v339 = vld [vmem:[%s276 + $0xa8] sm:$0xf]
      %v340 = vld [vmem:[%s276 + $0xac] sm:$0xf]
      %v341 = vld [vmem:[%s276 + $0xb0] sm:$0xf]
      %v342 = vld [vmem:[%s276 + $0xb4] sm:$0xf]
      %v343 = vld [vmem:[%s276 + $0xb8] sm:$0xf]
      %v344 = vld [vmem:[%s276 + $0xbc] sm:$0xf]
      %v345 = vld [vmem:[%s2] sm:$0xf]
      %v346 = vld [vmem:[%s2 + $0x4] sm:$0xf]
      %v347 = vld [vmem:[%s2 + $0x8] sm:$0xf]
      %v348 = vld [vmem:[%s2 + $0xc] sm:$0xf]
      %v349 = vld [vmem:[%s2 + $0x10] sm:$0xf]
      %v350 = vld [vmem:[%s2 + $0x14] sm:$0xf]
      %v351 = vld [vmem:[%s276 + $0xc0] sm:$0xf]
      %v352 = vld [vmem:[%s276 + $0xc4] sm:$0xf]
      %v353 = vld [vmem:[%s276 + $0xc8] sm:$0xf]
      %v354 = vld [vmem:[%s276 + $0xcc] sm:$0xf]
      %v355 = vld [vmem:[%s276 + $0xd0] sm:$0xf]
      %v356 = vld [vmem:[%s276 + $0xd4] sm:$0xf]
      %s357 = scalar_lea.vmem %s2, 24
      %v358 = vld [vmem:[%s357] sm:$0xf]
      %v359 = vld [vmem:[%s357 + $0x4] sm:$0xf]
      %v360 = vld [vmem:[%s357 + $0x8] sm:$0xf]
      %v361 = vld [vmem:[%s357 + $0xc] sm:$0xf]
      %v362 = vld [vmem:[%s357 + $0x10] sm:$0xf]
      %v363 = vld [vmem:[%s357 + $0x14] sm:$0xf]
      %v412 = vunpack.c.l.b16 %v303
      %v413 = vunpack.c.l.b16 %v304
      %v414 = vunpack.c.l.b16 %v305
      %v415 = vunpack.c.l.b16 %v306
      %v416 = vunpack.c.l.b16 %v307
      %v417 = vunpack.c.l.b16 %v308
      %v418 = vunpack.c.l.b16 %v309
      %v419 = vunpack.c.l.b16 %v310
      %v420 = vunpack.c.l.b16 %v311
      %v421 = vunpack.c.l.b16 %v312
      %v422 = vunpack.c.l.b16 %v313
      %v423 = vunpack.c.l.b16 %v314
      %v424 = vunpack.c.l.b16 %v315
      %v425 = vunpack.c.l.b16 %v316
      %v426 = vunpack.c.l.b16 %v317
      %v427 = vunpack.c.l.b16 %v318
      %v428 = vunpack.c.l.b16 %v319
      %v429 = vunpack.c.l.b16 %v320
      %v430 = vunpack.c.l.b16 %v321
      %v431 = vunpack.c.l.b16 %v322
      %v432 = vunpack.c.l.b16 %v323
      %v433 = vunpack.c.l.b16 %v324
      %v434 = vunpack.c.l.b16 %v325
      %v435 = vunpack.c.l.b16 %v326
      %v436 = vunpack.c.l.b16 %v327
      %v437 = vunpack.c.l.b16 %v328
      %v438 = vunpack.c.l.b16 %v329
      %v439 = vunpack.c.l.b16 %v330
      %v440 = vunpack.c.l.b16 %v331
      %v441 = vunpack.c.l.b16 %v332
      %v442 = vunpack.c.l.b16 %v333
      %v443 = vunpack.c.l.b16 %v334
      %v444 = vunpack.c.l.b16 %v335
      %v445 = vunpack.c.l.b16 %v336
      %v446 = vunpack.c.l.b16 %v337
      %v447 = vunpack.c.l.b16 %v338
      %v448 = vunpack.c.l.b16 %v339
      %v449 = vunpack.c.l.b16 %v340
      %v450 = vunpack.c.l.b16 %v341
      %v451 = vunpack.c.l.b16 %v342
      %v452 = vunpack.c.l.b16 %v343
      %v453 = vunpack.c.l.b16 %v344
      %v454 = vunpack.c.l.b16 %v351
      %v455 = vunpack.c.l.b16 %v352
      %v456 = vunpack.c.l.b16 %v353
      %v457 = vunpack.c.l.b16 %v354
      %v458 = vunpack.c.l.b16 %v355
      %v459 = vunpack.c.l.b16 %v356
      %v460 = vpack.c.b16 %v413, %v412
      %v461 = vpack.c.b16 %v415, %v414
      %v462 = vpack.c.b16 %v417, %v416
      %v463 = vpack.c.b16 %v419, %v418
      %v464 = vpack.c.b16 %v421, %v420
      %v465 = vpack.c.b16 %v423, %v422
      %v466 = vpack.c.b16 %v425, %v424
      %v467 = vpack.c.b16 %v427, %v426
      %v468 = vpack.c.b16 %v429, %v428
      %v469 = vpack.c.b16 %v431, %v430
      %v470 = vpack.c.b16 %v433, %v432
      %v471 = vpack.c.b16 %v435, %v434
      %v472 = vpack.c.b16 %v437, %v436
      %v473 = vpack.c.b16 %v439, %v438
      %v474 = vpack.c.b16 %v441, %v440
      %v475 = vpack.c.b16 %v443, %v442
      %v476 = vpack.c.b16 %v445, %v444
      %v477 = vpack.c.b16 %v447, %v446
      %v478 = vpack.c.b16 %v449, %v448
      %v479 = vpack.c.b16 %v451, %v450
      %v480 = vpack.c.b16 %v453, %v452
      %v481 = vpack.c.b16 %v455, %v454
      %v482 = vpack.c.b16 %v457, %v456
      %v483 = vpack.c.b16 %v459, %v458
      %v490 = vunpack.c.l.b16 %v358
      %v491 = vunpack.c.l.b16 %v359
      %v492 = vunpack.c.l.b16 %v360
      %v493 = vunpack.c.l.b16 %v361
      %v494 = vunpack.c.l.b16 %v362
      %v495 = vunpack.c.l.b16 %v363
      %v496 = vpack.c.b16 %v491, %v490
      %v497 = vpack.c.b16 %v493, %v492
      %v498 = vpack.c.b16 %v495, %v494
      %vm502 = vcmask 392192
      %v504 = vsel %vm502, %v460, 0
      %v507 = vsel %vm502, %v461, 0
      %v510 = vsel %vm502, %v462, 0
      %v513 = vsel %vm502, %v463, 0
      %v516 = vsel %vm502, %v464, 0
      %v519 = vsel %vm502, %v465, 0
      %v522 = vsel %vm502, %v466, 0
      %v525 = vsel %vm502, %v467, 0
      %v528 = vsel %vm502, %v468, 0
      %v531 = vsel %vm502, %v469, 0
      %v534 = vsel %vm502, %v470, 0
      %v537 = vsel %vm502, %v471, 0
      %v540 = vsel %vm502, %v472, 0
      %v543 = vsel %vm502, %v473, 0
      %v546 = vsel %vm502, %v474, 0
      %v549 = vsel %vm502, %v475, 0
      %v552 = vsel %vm502, %v476, 0
      %v555 = vsel %vm502, %v477, 0
      %v558 = vsel %vm502, %v478, 0
      %v561 = vsel %vm502, %v479, 0
      %v564 = vsel %vm502, %v480, 0
      %v567 = vsel %vm502, %v481, 0
      %v570 = vsel %vm502, %v482, 0
      %v573 = vsel %vm502, %v483, 0
      %575 = vmatprep.subr.bf16.mxu0 0
      %576 = vmatpush1.bf16.msra.mxu0 %v496
      %577 = vmatprep.subr.bf16.mxu0 0
      %578 = vmatpush1.bf16.msra.mxu0 %v497
      %579 = vmatprep.subr.bf16.mxu0 0
      %580 = vmatpush1.bf16.msra.mxu0 %v498
      %581 = vmatprep.subr.bf16.mxu0 0
      %582 = vmatpush1.bf16.msra.mxu0 0
      %583 = vmatprep.subr.bf16.mxu0 0
      %584 = vmatpush1.bf16.msra.mxu0 0
      %585 = vmatprep.subr.bf16.mxu0 0
      %586 = vmatpush1.bf16.msra.mxu0 0
      %587 = vmatprep.subr.bf16.mxu0 0
      %588 = vmatpush1.bf16.msra.mxu0 0
      %589 = vmatprep.subr.bf16.mxu0 0
      %590 = vmatpush1.bf16.msra.mxu0 0
      %591 = vmatprep.subr.bf16.mxu0 0
      %592 = vmatpush1.bf16.msra.mxu0 0
      %593 = vmatprep.subr.bf16.mxu0 0
      %594 = vmatpush1.bf16.msra.mxu0 0
      %595 = vmatprep.subr.bf16.mxu0 0
      %596 = vmatpush1.bf16.msra.mxu0 0
      %597 = vmatprep.subr.bf16.mxu0 0
      %598 = vmatpush1.bf16.msra.mxu0 0
      %599 = vmatprep.subr.bf16.mxu0 0
      %600 = vmatpush1.bf16.msra.mxu0 0
      %601 = vmatprep.subr.bf16.mxu0 0
      %602 = vmatpush1.bf16.msra.mxu0 0
      %603 = vmatprep.subr.bf16.mxu0 0
      %604 = vmatpush1.bf16.msra.mxu0 0
      %605 = vmatprep.subr.bf16.mxu0 0
      %606 = vmatpush1.bf16.msra.mxu0 0
      %607 = vmatprep.mubr.bf16.mxu0 0
      %608 = vmatmul.mubr.bf16.gmra.mrb[0].mxu0 %v504
      %v609 = vpop.f32.mrb[0].mxu0
      %v610 = vadd.f32 0.0, %v609
      %v611 = vpop.f32.mrb[0].mxu0
      %v612 = vpop.f32.mrb[0].mxu0
      %v613 = vadd.f32 0.0, %v612
      %v614 = vpop.f32.mrb[0].mxu0
      %615 = vmatprep.mubr.bf16.mxu0 0
      %616 = vmatmul.mubr.bf16.gmra.mrb[0].mxu0 %v507
      %v617 = vpop.f32.mrb[0].mxu0
      %v618 = vadd.f32 0.0, %v617
      %v619 = vpop.f32.mrb[0].mxu0
      %v620 = vpop.f32.mrb[0].mxu0
      %v621 = vadd.f32 0.0, %v620
      %v622 = vpop.f32.mrb[0].mxu0
      %623 = vmatprep.mubr.bf16.mxu0 0
      %624 = vmatmul.mubr.bf16.gmra.mrb[0].mxu0 %v510
      %v625 = vpop.f32.mrb[0].mxu0
      %v626 = vadd.f32 0.0, %v625
      %v627 = vpop.f32.mrb[0].mxu0
      %v628 = vpop.f32.mrb[0].mxu0
      %v629 = vadd.f32 0.0, %v628
      %v630 = vpop.f32.mrb[0].mxu0
      %631 = vmatprep.mubr.bf16.mxu0 0
      %632 = vmatmul.mubr.bf16.gmra.mrb[0].mxu0 %v513
      %v633 = vpop.f32.mrb[0].mxu0
      %v634 = vadd.f32 0.0, %v633
      %v635 = vpop.f32.mrb[0].mxu0
      %v636 = vpop.f32.mrb[0].mxu0
      %v637 = vadd.f32 0.0, %v636
      %v638 = vpop.f32.mrb[0].mxu0
      %639 = vmatprep.mubr.bf16.mxu0 0
      %640 = vmatmul.mubr.bf16.gmra.mrb[0].mxu0 %v516
      %v641 = vpop.f32.mrb[0].mxu0
      %v642 = vadd.f32 0.0, %v641
      %v643 = vpop.f32.mrb[0].mxu0
      %v644 = vpop.f32.mrb[0].mxu0
      %v645 = vadd.f32 0.0, %v644
      %v646 = vpop.f32.mrb[0].mxu0
      %647 = vmatprep.mubr.bf16.mxu0 0
      %648 = vmatmul.mubr.bf16.gmra.mrb[0].mxu0 %v519
      %v649 = vpop.f32.mrb[0].mxu0
      %v650 = vadd.f32 0.0, %v649
      %v651 = vpop.f32.mrb[0].mxu0
      %v652 = vpop.f32.mrb[0].mxu0
      %v653 = vadd.f32 0.0, %v652
      %v654 = vpop.f32.mrb[0].mxu0
      %655 = vmatprep.mubr.bf16.mxu0 0
      %656 = vmatmul.mubr.bf16.gmra.mrb[0].mxu0 %v522
      %v657 = vpop.f32.mrb[0].mxu0
      %v658 = vadd.f32 0.0, %v657
      %v659 = vpop.f32.mrb[0].mxu0
      %v660 = vpop.f32.mrb[0].mxu0
      %v661 = vadd.f32 0.0, %v660
      %v662 = vpop.f32.mrb[0].mxu0
      %663 = vmatprep.mubr.bf16.mxu0 0
      %664 = vmatmul.mubr.bf16.gmra.mrb[0].mxu0 %v525
      %v665 = vpop.f32.mrb[0].mxu0
      %v666 = vadd.f32 0.0, %v665
      %v667 = vpop.f32.mrb[0].mxu0
      %v668 = vpop.f32.mrb[0].mxu0
      %v669 = vadd.f32 0.0, %v668
      %v670 = vpop.f32.mrb[0].mxu0
      %671 = vmatprep.mubr.bf16.mxu0 0
      %672 = vmatmul.mubr.bf16.gmra.mrb[0].mxu0 %v528
      %v673 = vpop.f32.mrb[0].mxu0
      %v674 = vadd.f32 0.0, %v673
      %v675 = vpop.f32.mrb[0].mxu0
      %v676 = vpop.f32.mrb[0].mxu0
      %v677 = vadd.f32 0.0, %v676
      %v678 = vpop.f32.mrb[0].mxu0
      %679 = vmatprep.mubr.bf16.mxu0 0
      %680 = vmatmul.mubr.bf16.gmra.mrb[0].mxu0 %v531
      %v681 = vpop.f32.mrb[0].mxu0
      %v682 = vadd.f32 0.0, %v681
      %v683 = vpop.f32.mrb[0].mxu0
      %v684 = vpop.f32.mrb[0].mxu0
      %v685 = vadd.f32 0.0, %v684
      %v686 = vpop.f32.mrb[0].mxu0
      %687 = vmatprep.mubr.bf16.mxu0 0
      %688 = vmatmul.mubr.bf16.gmra.mrb[0].mxu0 %v534
      %v689 = vpop.f32.mrb[0].mxu0
      %v690 = vadd.f32 0.0, %v689
      %v691 = vpop.f32.mrb[0].mxu0
      %v692 = vpop.f32.mrb[0].mxu0
      %v693 = vadd.f32 0.0, %v692
      %v694 = vpop.f32.mrb[0].mxu0
      %695 = vmatprep.mubr.bf16.mxu0 0
      %696 = vmatmul.mubr.bf16.gmra.mrb[0].mxu0 %v537
      %v697 = vpop.f32.mrb[0].mxu0
      %v698 = vadd.f32 0.0, %v697
      %v699 = vpop.f32.mrb[0].mxu0
      %v700 = vpop.f32.mrb[0].mxu0
      %v701 = vadd.f32 0.0, %v700
      %v702 = vpop.f32.mrb[0].mxu0
      %703 = vmatprep.mubr.bf16.mxu0 0
      %704 = vmatmul.mubr.bf16.gmra.mrb[0].mxu0 %v540
      %v705 = vpop.f32.mrb[0].mxu0
      %v706 = vadd.f32 0.0, %v705
      %v707 = vpop.f32.mrb[0].mxu0
      %v708 = vpop.f32.mrb[0].mxu0
      %v709 = vadd.f32 0.0, %v708
      %v710 = vpop.f32.mrb[0].mxu0
      %711 = vmatprep.mubr.bf16.mxu0 0
      %712 = vmatmul.mubr.bf16.gmra.mrb[0].mxu0 %v543
      %v713 = vpop.f32.mrb[0].mxu0
      %v714 = vadd.f32 0.0, %v713
      %v715 = vpop.f32.mrb[0].mxu0
      %v716 = vpop.f32.mrb[0].mxu0
      %v717 = vadd.f32 0.0, %v716
      %v718 = vpop.f32.mrb[0].mxu0
      %719 = vmatprep.mubr.bf16.mxu0 0
      %720 = vmatmul.mubr.bf16.gmra.mrb[0].mxu0 %v546
      %v721 = vpop.f32.mrb[0].mxu0
      %v722 = vadd.f32 0.0, %v721
      %v723 = vpop.f32.mrb[0].mxu0
      %v724 = vpop.f32.mrb[0].mxu0
      %v725 = vadd.f32 0.0, %v724
      %v726 = vpop.f32.mrb[0].mxu0
      %727 = vmatprep.mubr.bf16.mxu0 0
      %728 = vmatmul.mubr.bf16.gmra.mrb[0].mxu0 %v549
      %v729 = vpop.f32.mrb[0].mxu0
      %v730 = vadd.f32 0.0, %v729
      %v731 = vpop.f32.mrb[0].mxu0
      %v732 = vpop.f32.mrb[0].mxu0
      %v733 = vadd.f32 0.0, %v732
      %v734 = vpop.f32.mrb[0].mxu0
      %735 = vmatprep.mubr.bf16.mxu0 0
      %736 = vmatmul.mubr.bf16.gmra.mrb[0].mxu0 %v552
      %v737 = vpop.f32.mrb[0].mxu0
      %v738 = vadd.f32 0.0, %v737
      %v739 = vpop.f32.mrb[0].mxu0
      %v740 = vpop.f32.mrb[0].mxu0
      %v741 = vadd.f32 0.0, %v740
      %v742 = vpop.f32.mrb[0].mxu0
      %743 = vmatprep.mubr.bf16.mxu0 0
      %744 = vmatmul.mubr.bf16.gmra.mrb[0].mxu0 %v555
      %v745 = vpop.f32.mrb[0].mxu0
      %v746 = vadd.f32 0.0, %v745
      %v747 = vpop.f32.mrb[0].mxu0
      %v748 = vpop.f32.mrb[0].mxu0
      %v749 = vadd.f32 0.0, %v748
      %v750 = vpop.f32.mrb[0].mxu0
      %751 = vmatprep.mubr.bf16.mxu0 0
      %752 = vmatmul.mubr.bf16.gmra.mrb[0].mxu0 %v558
      %v753 = vpop.f32.mrb[0].mxu0
      %v754 = vadd.f32 0.0, %v753
      %v755 = vpop.f32.mrb[0].mxu0
      %v756 = vpop.f32.mrb[0].mxu0
      %v757 = vadd.f32 0.0, %v756
      %v758 = vpop.f32.mrb[0].mxu0
      %759 = vmatprep.mubr.bf16.mxu0 0
      %760 = vmatmul.mubr.bf16.gmra.mrb[0].mxu0 %v561
      %v761 = vpop.f32.mrb[0].mxu0
      %v762 = vadd.f32 0.0, %v761
      %v763 = vpop.f32.mrb[0].mxu0
      %v764 = vpop.f32.mrb[0].mxu0
      %v765 = vadd.f32 0.0, %v764
      %v766 = vpop.f32.mrb[0].mxu0
      %767 = vmatprep.mubr.bf16.mxu0 0
      %768 = vmatmul.mubr.bf16.gmra.mrb[0].mxu0 %v564
      %v769 = vpop.f32.mrb[0].mxu0
      %v770 = vadd.f32 0.0, %v769
      %v771 = vpop.f32.mrb[0].mxu0
      %v772 = vpop.f32.mrb[0].mxu0
      %v773 = vadd.f32 0.0, %v772
      %v774 = vpop.f32.mrb[0].mxu0
      %775 = vmatprep.mubr.bf16.mxu0 0
      %776 = vmatmul.mubr.bf16.gmra.mrb[0].mxu0 %v567
      %v777 = vpop.f32.mrb[0].mxu0
      %v778 = vadd.f32 0.0, %v777
      %v779 = vpop.f32.mrb[0].mxu0
      %v780 = vpop.f32.mrb[0].mxu0
      %v781 = vadd.f32 0.0, %v780
      %v782 = vpop.f32.mrb[0].mxu0
      %783 = vmatprep.mubr.bf16.mxu0 0
      %784 = vmatmul.mubr.bf16.gmra.mrb[0].mxu0 %v570
      %v785 = vpop.f32.mrb[0].mxu0
      %v786 = vadd.f32 0.0, %v785
      %v787 = vpop.f32.mrb[0].mxu0
      %v788 = vpop.f32.mrb[0].mxu0
      %v789 = vadd.f32 0.0, %v788
      %v790 = vpop.f32.mrb[0].mxu0
      %791 = vmatprep.mubr.bf16.mxu0 0
      %792 = vmatmul.mubr.bf16.gmra.mrb[0].mxu0 %v573
      %v793 = vpop.f32.mrb[0].mxu0
      %v794 = vadd.f32 0.0, %v793
      %v795 = vpop.f32.mrb[0].mxu0
      %v796 = vpop.f32.mrb[0].mxu0
      %v797 = vadd.f32 0.0, %v796
      %v798 = vpop.f32.mrb[0].mxu0
      %799 = vdwg.mxu0
      %v806 = vunpack.c.l.b16 %v297
      %v807 = vunpack.c.l.b16 %v298
      %v808 = vunpack.c.l.b16 %v299
      %v809 = vunpack.c.l.b16 %v300
      %v810 = vunpack.c.l.b16 %v301
      %v811 = vunpack.c.l.b16 %v302
      %v812 = vpack.c.b16 %v807, %v806
      %v813 = vpack.c.b16 %v809, %v808
      %v814 = vpack.c.b16 %v811, %v810
      %v821 = vunpack.c.l.b16 %v345
      %v822 = vunpack.c.l.b16 %v346
      %v823 = vunpack.c.l.b16 %v347
      %v824 = vunpack.c.l.b16 %v348
      %v825 = vunpack.c.l.b16 %v349
      %v826 = vunpack.c.l.b16 %v350
      %v827 = vpack.c.b16 %v822, %v821
      %v828 = vpack.c.b16 %v824, %v823
      %v829 = vpack.c.b16 %v826, %v825
      %v834 = vsel %vm502, %v812, 0
      %v837 = vsel %vm502, %v813, 0
      %v840 = vsel %vm502, %v814, 0
      %842 = vmatprep.subr.bf16.mxu0 0
      %843 = vmatpush1.bf16.msra.mxu0 %v827
      %844 = vmatprep.subr.bf16.mxu0 0
      %845 = vmatpush1.bf16.msra.mxu0 %v828
      %846 = vmatprep.subr.bf16.mxu0 0
      %847 = vmatpush1.bf16.msra.mxu0 %v829
      %848 = vmatprep.subr.bf16.mxu0 0
      %849 = vmatpush1.bf16.msra.mxu0 0
      %850 = vmatprep.subr.bf16.mxu0 0
      %851 = vmatpush1.bf16.msra.mxu0 0
      %852 = vmatprep.subr.bf16.mxu0 0
      %853 = vmatpush1.bf16.msra.mxu0 0
      %854 = vmatprep.subr.bf16.mxu0 0
      %855 = vmatpush1.bf16.msra.mxu0 0
      %856 = vmatprep.subr.bf16.mxu0 0
      %857 = vmatpush1.bf16.msra.mxu0 0
      %858 = vmatprep.subr.bf16.mxu0 0
      %859 = vmatpush1.bf16.msra.mxu0 0
      %860 = vmatprep.subr.bf16.mxu0 0
      %861 = vmatpush1.bf16.msra.mxu0 0
      %862 = vmatprep.subr.bf16.mxu0 0
      %863 = vmatpush1.bf16.msra.mxu0 0
      %864 = vmatprep.subr.bf16.mxu0 0
      %865 = vmatpush1.bf16.msra.mxu0 0
      %866 = vmatprep.subr.bf16.mxu0 0
      %867 = vmatpush1.bf16.msra.mxu0 0
      %868 = vmatprep.subr.bf16.mxu0 0
      %869 = vmatpush1.bf16.msra.mxu0 0
      %870 = vmatprep.subr.bf16.mxu0 0
      %871 = vmatpush1.bf16.msra.mxu0 0
      %872 = vmatprep.subr.bf16.mxu0 0
      %873 = vmatpush1.bf16.msra.mxu0 0
      %874 = vmatprep.mubr.bf16.mxu0 0
      %875 = vmatmul.mubr.bf16.gmra.mrb[0].mxu0 %v834
      %v876 = vpop.f32.mrb[0].mxu0
      %v877 = vadd.f32 %v610, %v876
      %v878 = vpop.f32.mrb[0].mxu0
      %v879 = vpop.f32.mrb[0].mxu0
      %v880 = vadd.f32 %v613, %v879
      %v881 = vpop.f32.mrb[0].mxu0
      %882 = vmatprep.mubr.bf16.mxu0 0
      %883 = vmatmul.mubr.bf16.gmra.mrb[0].mxu0 %v837
      %v884 = vpop.f32.mrb[0].mxu0
      %v885 = vadd.f32 %v618, %v884
      %v886 = vpop.f32.mrb[0].mxu0
      %v887 = vpop.f32.mrb[0].mxu0
      %v888 = vadd.f32 %v621, %v887
      %v889 = vpop.f32.mrb[0].mxu0
      %890 = vmatprep.mubr.bf16.mxu0 0
      %891 = vmatmul.mubr.bf16.gmra.mrb[0].mxu0 %v840
      %v892 = vpop.f32.mrb[0].mxu0
      %v893 = vadd.f32 %v626, %v892
      %v894 = vpop.f32.mrb[0].mxu0
      %v895 = vpop.f32.mrb[0].mxu0
      %v896 = vadd.f32 %v629, %v895
      %v897 = vpop.f32.mrb[0].mxu0
      %898 = vmatprep.mubr.bf16.mxu0 0
      %899 = vmatmul.mubr.bf16.gmra.mrb[0].mxu0 %v504
      %v900 = vpop.f32.mrb[0].mxu0
      %v901 = vadd.f32 %v634, %v900
      %v902 = vpop.f32.mrb[0].mxu0
      %v903 = vpop.f32.mrb[0].mxu0
      %v904 = vadd.f32 %v637, %v903
      %v905 = vpop.f32.mrb[0].mxu0
      %906 = vmatprep.mubr.bf16.mxu0 0
      %907 = vmatmul.mubr.bf16.gmra.mrb[0].mxu0 %v507
      %v908 = vpop.f32.mrb[0].mxu0
      %v909 = vadd.f32 %v642, %v908
      %v910 = vpop.f32.mrb[0].mxu0
      %v911 = vpop.f32.mrb[0].mxu0
      %v912 = vadd.f32 %v645, %v911
      %v913 = vpop.f32.mrb[0].mxu0
      %914 = vmatprep.mubr.bf16.mxu0 0
      %915 = vmatmul.mubr.bf16.gmra.mrb[0].mxu0 %v510
      %v916 = vpop.f32.mrb[0].mxu0
      %v917 = vadd.f32 %v650, %v916
      %v918 = vpop.f32.mrb[0].mxu0
      %v919 = vpop.f32.mrb[0].mxu0
      %v920 = vadd.f32 %v653, %v919
      %v921 = vpop.f32.mrb[0].mxu0
      %922 = vmatprep.mubr.bf16.mxu0 0
      %923 = vmatmul.mubr.bf16.gmra.mrb[0].mxu0 %v513
      %v924 = vpop.f32.mrb[0].mxu0
      %v925 = vadd.f32 %v658, %v924
      %v926 = vpop.f32.mrb[0].mxu0
      %v927 = vpop.f32.mrb[0].mxu0
      %v928 = vadd.f32 %v661, %v927
      %v929 = vpop.f32.mrb[0].mxu0
      %930 = vmatprep.mubr.bf16.mxu0 0
      %931 = vmatmul.mubr.bf16.gmra.mrb[0].mxu0 %v516
      %v932 = vpop.f32.mrb[0].mxu0
      %v933 = vadd.f32 %v666, %v932
      %v934 = vpop.f32.mrb[0].mxu0
      %v935 = vpop.f32.mrb[0].mxu0
      %v936 = vadd.f32 %v669, %v935
      %v937 = vpop.f32.mrb[0].mxu0
      %938 = vmatprep.mubr.bf16.mxu0 0
      %939 = vmatmul.mubr.bf16.gmra.mrb[0].mxu0 %v519
      %v940 = vpop.f32.mrb[0].mxu0
      %v941 = vadd.f32 %v674, %v940
      %v942 = vpop.f32.mrb[0].mxu0
      %v943 = vpop.f32.mrb[0].mxu0
      %v944 = vadd.f32 %v677, %v943
      %v945 = vpop.f32.mrb[0].mxu0
      %946 = vmatprep.mubr.bf16.mxu0 0
      %947 = vmatmul.mubr.bf16.gmra.mrb[0].mxu0 %v522
      %v948 = vpop.f32.mrb[0].mxu0
      %v949 = vadd.f32 %v682, %v948
      %v950 = vpop.f32.mrb[0].mxu0
      %v951 = vpop.f32.mrb[0].mxu0
      %v952 = vadd.f32 %v685, %v951
      %v953 = vpop.f32.mrb[0].mxu0
      %954 = vmatprep.mubr.bf16.mxu0 0
      %955 = vmatmul.mubr.bf16.gmra.mrb[0].mxu0 %v525
      %v956 = vpop.f32.mrb[0].mxu0
      %v957 = vadd.f32 %v690, %v956
      %v958 = vpop.f32.mrb[0].mxu0
      %v959 = vpop.f32.mrb[0].mxu0
      %v960 = vadd.f32 %v693, %v959
      %v961 = vpop.f32.mrb[0].mxu0
      %962 = vmatprep.mubr.bf16.mxu0 0
      %963 = vmatmul.mubr.bf16.gmra.mrb[0].mxu0 %v528
      %v964 = vpop.f32.mrb[0].mxu0
      %v965 = vadd.f32 %v698, %v964
      %v966 = vpop.f32.mrb[0].mxu0
      %v967 = vpop.f32.mrb[0].mxu0
      %v968 = vadd.f32 %v701, %v967
      %v969 = vpop.f32.mrb[0].mxu0
      %970 = vmatprep.mubr.bf16.mxu0 0
      %971 = vmatmul.mubr.bf16.gmra.mrb[0].mxu0 %v531
      %v972 = vpop.f32.mrb[0].mxu0
      %v973 = vadd.f32 %v706, %v972
      %v974 = vpop.f32.mrb[0].mxu0
      %v975 = vpop.f32.mrb[0].mxu0
      %v976 = vadd.f32 %v709, %v975
      %v977 = vpop.f32.mrb[0].mxu0
      %978 = vmatprep.mubr.bf16.mxu0 0
      %979 = vmatmul.mubr.bf16.gmra.mrb[0].mxu0 %v534
      %v980 = vpop.f32.mrb[0].mxu0
      %v981 = vadd.f32 %v714, %v980
      %v982 = vpop.f32.mrb[0].mxu0
      %v983 = vpop.f32.mrb[0].mxu0
      %v984 = vadd.f32 %v717, %v983
      %v985 = vpop.f32.mrb[0].mxu0
      %986 = vmatprep.mubr.bf16.mxu0 0
      %987 = vmatmul.mubr.bf16.gmra.mrb[0].mxu0 %v537
      %v988 = vpop.f32.mrb[0].mxu0
      %v989 = vadd.f32 %v722, %v988
      %v990 = vpop.f32.mrb[0].mxu0
      %v991 = vpop.f32.mrb[0].mxu0
      %v992 = vadd.f32 %v725, %v991
      %v993 = vpop.f32.mrb[0].mxu0
      %994 = vmatprep.mubr.bf16.mxu0 0
      %995 = vmatmul.mubr.bf16.gmra.mrb[0].mxu0 %v540
      %v996 = vpop.f32.mrb[0].mxu0
      %v997 = vadd.f32 %v730, %v996
      %v998 = vpop.f32.mrb[0].mxu0
      %v999 = vpop.f32.mrb[0].mxu0
      %v1000 = vadd.f32 %v733, %v999
      %v1001 = vpop.f32.mrb[0].mxu0
      %1002 = vmatprep.mubr.bf16.mxu0 0
      %1003 = vmatmul.mubr.bf16.gmra.mrb[0].mxu0 %v543
      %v1004 = vpop.f32.mrb[0].mxu0
      %v1005 = vadd.f32 %v738, %v1004
      %v1006 = vpop.f32.mrb[0].mxu0
      %v1007 = vpop.f32.mrb[0].mxu0
      %v1008 = vadd.f32 %v741, %v1007
      %v1009 = vpop.f32.mrb[0].mxu0
      %1010 = vmatprep.mubr.bf16.mxu0 0
      %1011 = vmatmul.mubr.bf16.gmra.mrb[0].mxu0 %v546
      %v1012 = vpop.f32.mrb[0].mxu0
      %v1013 = vadd.f32 %v746, %v1012
      %v1014 = vpop.f32.mrb[0].mxu0
      %v1015 = vpop.f32.mrb[0].mxu0
      %v1016 = vadd.f32 %v749, %v1015
      %v1017 = vpop.f32.mrb[0].mxu0
      %1018 = vmatprep.mubr.bf16.mxu0 0
      %1019 = vmatmul.mubr.bf16.gmra.mrb[0].mxu0 %v549
      %v1020 = vpop.f32.mrb[0].mxu0
      %v1021 = vadd.f32 %v754, %v1020
      %v1022 = vpop.f32.mrb[0].mxu0
      %v1023 = vpop.f32.mrb[0].mxu0
      %v1024 = vadd.f32 %v757, %v1023
      %v1025 = vpop.f32.mrb[0].mxu0
      %1026 = vmatprep.mubr.bf16.mxu0 0
      %1027 = vmatmul.mubr.bf16.gmra.mrb[0].mxu0 %v552
      %v1028 = vpop.f32.mrb[0].mxu0
      %v1029 = vadd.f32 %v762, %v1028
      %v1030 = vpop.f32.mrb[0].mxu0
      %v1031 = vpop.f32.mrb[0].mxu0
      %v1032 = vadd.f32 %v765, %v1031
      %v1033 = vpop.f32.mrb[0].mxu0
      %1034 = vmatprep.mubr.bf16.mxu0 0
      %1035 = vmatmul.mubr.bf16.gmra.mrb[0].mxu0 %v555
      %v1036 = vpop.f32.mrb[0].mxu0
      %v1037 = vadd.f32 %v770, %v1036
      %v1038 = vpop.f32.mrb[0].mxu0
      %v1039 = vpop.f32.mrb[0].mxu0
      %v1040 = vadd.f32 %v773, %v1039
      %v1041 = vpop.f32.mrb[0].mxu0
      %1042 = vmatprep.mubr.bf16.mxu0 0
      %1043 = vmatmul.mubr.bf16.gmra.mrb[0].mxu0 %v558
      %v1044 = vpop.f32.mrb[0].mxu0
      %v1045 = vadd.f32 %v778, %v1044
      %v1046 = vpop.f32.mrb[0].mxu0
      %v1047 = vpop.f32.mrb[0].mxu0
      %v1048 = vadd.f32 %v781, %v1047
      %v1049 = vpop.f32.mrb[0].mxu0
      %1050 = vmatprep.mubr.bf16.mxu0 0
      %1051 = vmatmul.mubr.bf16.gmra.mrb[0].mxu0 %v561
      %v1052 = vpop.f32.mrb[0].mxu0
      %v1053 = vadd.f32 %v786, %v1052
      %v1054 = vpop.f32.mrb[0].mxu0
      %v1055 = vpop.f32.mrb[0].mxu0
      %v1056 = vadd.f32 %v789, %v1055
      %v1057 = vpop.f32.mrb[0].mxu0
      %1058 = vmatprep.mubr.bf16.mxu0 0
      %1059 = vmatmul.mubr.bf16.gmra.mrb[0].mxu0 %v564
      %v1060 = vpop.f32.mrb[0].mxu0
      %v1061 = vadd.f32 %v794, %v1060
      %v1062 = vpop.f32.mrb[0].mxu0
      %v1063 = vpop.f32.mrb[0].mxu0
      %v1064 = vadd.f32 %v797, %v1063
      %v1065 = vpop.f32.mrb[0].mxu0
      %1066 = vdwg.mxu0
      %v1067 = vld [vmem:[%s276 + $0x30] sm:$0xf]
      %v1068 = vld [vmem:[%s276 + $0x34] sm:$0xf]
      %v1069 = vld [vmem:[%s276 + $0x38] sm:$0xf]
      %v1070 = vld [vmem:[%s276 + $0x3c] sm:$0xf]
      %v1071 = vld [vmem:[%s276 + $0x40] sm:$0xf]
      %v1072 = vld [vmem:[%s276 + $0x44] sm:$0xf]
      %v1073 = vld [vmem:[%s276 + $0x48] sm:$0xf]
      %v1074 = vld [vmem:[%s276 + $0x4c] sm:$0xf]
      %v1075 = vld [vmem:[%s276 + $0x50] sm:$0xf]
      %v1076 = vld [vmem:[%s276 + $0x54] sm:$0xf]
      %v1077 = vld [vmem:[%s276 + $0x58] sm:$0xf]
      %v1078 = vld [vmem:[%s276 + $0x5c] sm:$0xf]
      %v1079 = vld [vmem:[%s276 + $0x60] sm:$0xf]
      %v1080 = vld [vmem:[%s276 + $0x64] sm:$0xf]
      %v1081 = vld [vmem:[%s276 + $0x68] sm:$0xf]
      %v1082 = vld [vmem:[%s276 + $0x6c] sm:$0xf]
      %v1083 = vld [vmem:[%s276 + $0x70] sm:$0xf]
      %v1084 = vld [vmem:[%s276 + $0x74] sm:$0xf]
      %v1085 = vld [vmem:[%s276 + $0x78] sm:$0xf]
      %v1086 = vld [vmem:[%s276 + $0x7c] sm:$0xf]
      %v1087 = vld [vmem:[%s276 + $0x80] sm:$0xf]
      %v1088 = vld [vmem:[%s276 + $0x84] sm:$0xf]
      %v1089 = vld [vmem:[%s276 + $0x88] sm:$0xf]
      %v1090 = vld [vmem:[%s276 + $0x8c] sm:$0xf]
      %v1091 = vld [vmem:[%s276 + $0x90] sm:$0xf]
      %v1092 = vld [vmem:[%s276 + $0x94] sm:$0xf]
      %v1093 = vld [vmem:[%s276 + $0x98] sm:$0xf]
      %v1094 = vld [vmem:[%s276 + $0x9c] sm:$0xf]
      %v1095 = vld [vmem:[%s276 + $0xa0] sm:$0xf]
      %v1096 = vld [vmem:[%s276 + $0xa4] sm:$0xf]
      %v1097 = vld [vmem:[%s276 + $0xa8] sm:$0xf]
      %v1098 = vld [vmem:[%s276 + $0xac] sm:$0xf]
      %v1099 = vld [vmem:[%s276 + $0xb0] sm:$0xf]
      %v1100 = vld [vmem:[%s276 + $0xb4] sm:$0xf]
      %v1101 = vld [vmem:[%s276 + $0xb8] sm:$0xf]
      %v1102 = vld [vmem:[%s276 + $0xbc] sm:$0xf]
      %v1103 = vld [vmem:[%s276 + $0xc0] sm:$0xf]
      %v1104 = vld [vmem:[%s276 + $0xc4] sm:$0xf]
      %v1105 = vld [vmem:[%s276 + $0xc8] sm:$0xf]
      %v1106 = vld [vmem:[%s276 + $0xcc] sm:$0xf]
      %v1107 = vld [vmem:[%s276 + $0xd0] sm:$0xf]
      %v1108 = vld [vmem:[%s276 + $0xd4] sm:$0xf]
      %v1109 = vld [vmem:[%s276 + $0xd8] sm:$0xf]
      %v1110 = vld [vmem:[%s276 + $0xdc] sm:$0xf]
      %v1111 = vld [vmem:[%s276 + $0xe0] sm:$0xf]
      %v1112 = vld [vmem:[%s276 + $0xe4] sm:$0xf]
      %v1113 = vld [vmem:[%s276 + $0xe8] sm:$0xf]
      %v1114 = vld [vmem:[%s276 + $0xec] sm:$0xf]
      %s1115 = scalar_lea.vmem %s2, 48
      %v1116 = vld [vmem:[%s1115] sm:$0xf]
      %v1117 = vld [vmem:[%s1115 + $0x4] sm:$0xf]
      %v1118 = vld [vmem:[%s1115 + $0x8] sm:$0xf]
      %v1119 = vld [vmem:[%s1115 + $0xc] sm:$0xf]
      %v1120 = vld [vmem:[%s1115 + $0x10] sm:$0xf]
      %v1121 = vld [vmem:[%s1115 + $0x14] sm:$0xf]
      %v1170 = vunpack.c.l.b16 %v1067
      %v1171 = vunpack.c.l.b16 %v1068
      %v1172 = vunpack.c.l.b16 %v1069
      %v1173 = vunpack.c.l.b16 %v1070
      %v1174 = vunpack.c.l.b16 %v1071
      %v1175 = vunpack.c.l.b16 %v1072
      %v1176 = vunpack.c.l.b16 %v1073
      %v1177 = vunpack.c.l.b16 %v1074
      %v1178 = vunpack.c.l.b16 %v1075
      %v1179 = vunpack.c.l.b16 %v1076
      %v1180 = vunpack.c.l.b16 %v1077
      %v1181 = vunpack.c.l.b16 %v1078
      %v1182 = vunpack.c.l.b16 %v1079
      %v1183 = vunpack.c.l.b16 %v1080
      %v1184 = vunpack.c.l.b16 %v1081
      %v1185 = vunpack.c.l.b16 %v1082
      %v1186 = vunpack.c.l.b16 %v1083
      %v1187 = vunpack.c.l.b16 %v1084
      %v1188 = vunpack.c.l.b16 %v1085
      %v1189 = vunpack.c.l.b16 %v1086
      %v1190 = vunpack.c.l.b16 %v1087
      %v1191 = vunpack.c.l.b16 %v1088
      %v1192 = vunpack.c.l.b16 %v1089
      %v1193 = vunpack.c.l.b16 %v1090
      %v1194 = vunpack.c.l.b16 %v1091
      %v1195 = vunpack.c.l.b16 %v1092
      %v1196 = vunpack.c.l.b16 %v1093
      %v1197 = vunpack.c.l.b16 %v1094
      %v1198 = vunpack.c.l.b16 %v1095
      %v1199 = vunpack.c.l.b16 %v1096
      %v1200 = vunpack.c.l.b16 %v1097
      %v1201 = vunpack.c.l.b16 %v1098
      %v1202 = vunpack.c.l.b16 %v1099
      %v1203 = vunpack.c.l.b16 %v1100
      %v1204 = vunpack.c.l.b16 %v1101
      %v1205 = vunpack.c.l.b16 %v1102
      %v1206 = vunpack.c.l.b16 %v1103
      %v1207 = vunpack.c.l.b16 %v1104
      %v1208 = vunpack.c.l.b16 %v1105
      %v1209 = vunpack.c.l.b16 %v1106
      %v1210 = vunpack.c.l.b16 %v1107
      %v1211 = vunpack.c.l.b16 %v1108
      %v1212 = vunpack.c.l.b16 %v1109
      %v1213 = vunpack.c.l.b16 %v1110
      %v1214 = vunpack.c.l.b16 %v1111
      %v1215 = vunpack.c.l.b16 %v1112
      %v1216 = vunpack.c.l.b16 %v1113
      %v1217 = vunpack.c.l.b16 %v1114
      %v1218 = vpack.c.b16 %v1171, %v1170
      %v1219 = vpack.c.b16 %v1173, %v1172
      %v1220 = vpack.c.b16 %v1175, %v1174
      %v1221 = vpack.c.b16 %v1177, %v1176
      %v1222 = vpack.c.b16 %v1179, %v1178
      %v1223 = vpack.c.b16 %v1181, %v1180
      %v1224 = vpack.c.b16 %v1183, %v1182
      %v1225 = vpack.c.b16 %v1185, %v1184
      %v1226 = vpack.c.b16 %v1187, %v1186
      %v1227 = vpack.c.b16 %v1189, %v1188
      %v1228 = vpack.c.b16 %v1191, %v1190
      %v1229 = vpack.c.b16 %v1193, %v1192
      %v1230 = vpack.c.b16 %v1195, %v1194
      %v1231 = vpack.c.b16 %v1197, %v1196
      %v1232 = vpack.c.b16 %v1199, %v1198
      %v1233 = vpack.c.b16 %v1201, %v1200
      %v1234 = vpack.c.b16 %v1203, %v1202
      %v1235 = vpack.c.b16 %v1205, %v1204
      %v1236 = vpack.c.b16 %v1207, %v1206
      %v1237 = vpack.c.b16 %v1209, %v1208
      %v1238 = vpack.c.b16 %v1211, %v1210
      %v1239 = vpack.c.b16 %v1213, %v1212
      %v1240 = vpack.c.b16 %v1215, %v1214
      %v1241 = vpack.c.b16 %v1217, %v1216
      %v1248 = vunpack.c.l.b16 %v1116
      %v1249 = vunpack.c.l.b16 %v1117
      %v1250 = vunpack.c.l.b16 %v1118
      %v1251 = vunpack.c.l.b16 %v1119
      %v1252 = vunpack.c.l.b16 %v1120
      %v1253 = vunpack.c.l.b16 %v1121
      %v1254 = vpack.c.b16 %v1249, %v1248
      %v1255 = vpack.c.b16 %v1251, %v1250
      %v1256 = vpack.c.b16 %v1253, %v1252
      %v1261 = vsel %vm502, %v1218, 0
      %v1264 = vsel %vm502, %v1219, 0
      %v1267 = vsel %vm502, %v1220, 0
      %v1270 = vsel %vm502, %v1221, 0
      %v1273 = vsel %vm502, %v1222, 0
      %v1276 = vsel %vm502, %v1223, 0
      %v1279 = vsel %vm502, %v1224, 0
      %v1282 = vsel %vm502, %v1225, 0
      %v1285 = vsel %vm502, %v1226, 0
      %v1288 = vsel %vm502, %v1227, 0
      %v1291 = vsel %vm502, %v1228, 0
      %v1294 = vsel %vm502, %v1229, 0
      %v1297 = vsel %vm502, %v1230, 0
      %v1300 = vsel %vm502, %v1231, 0
      %v1303 = vsel %vm502, %v1232, 0
      %v1306 = vsel %vm502, %v1233, 0
      %v1309 = vsel %vm502, %v1234, 0
      %v1312 = vsel %vm502, %v1235, 0
      %v1315 = vsel %vm502, %v1236, 0
      %v1318 = vsel %vm502, %v1237, 0
      %v1321 = vsel %vm502, %v1238, 0
      %v1324 = vsel %vm502, %v1239, 0
      %v1327 = vsel %vm502, %v1240, 0
      %v1330 = vsel %vm502, %v1241, 0
      %1332 = vmatprep.subr.bf16.mxu0 0
      %1333 = vmatpush1.bf16.msra.mxu0 %v1254
      %1334 = vmatprep.subr.bf16.mxu0 0
      %1335 = vmatpush1.bf16.msra.mxu0 %v1255
      %1336 = vmatprep.subr.bf16.mxu0 0
      %1337 = vmatpush1.bf16.msra.mxu0 %v1256
      %1338 = vmatprep.subr.bf16.mxu0 0
      %1339 = vmatpush1.bf16.msra.mxu0 0
      %1340 = vmatprep.subr.bf16.mxu0 0
      %1341 = vmatpush1.bf16.msra.mxu0 0
      %1342 = vmatprep.subr.bf16.mxu0 0
      %1343 = vmatpush1.bf16.msra.mxu0 0
      %1344 = vmatprep.subr.bf16.mxu0 0
      %1345 = vmatpush1.bf16.msra.mxu0 0
      %1346 = vmatprep.subr.bf16.mxu0 0
      %1347 = vmatpush1.bf16.msra.mxu0 0
      %1348 = vmatprep.subr.bf16.mxu0 0
      %1349 = vmatpush1.bf16.msra.mxu0 0
      %1350 = vmatprep.subr.bf16.mxu0 0
      %1351 = vmatpush1.bf16.msra.mxu0 0
      %1352 = vmatprep.subr.bf16.mxu0 0
      %1353 = vmatpush1.bf16.msra.mxu0 0
      %1354 = vmatprep.subr.bf16.mxu0 0
      %1355 = vmatpush1.bf16.msra.mxu0 0
      %1356 = vmatprep.subr.bf16.mxu0 0
      %1357 = vmatpush1.bf16.msra.mxu0 0
      %1358 = vmatprep.subr.bf16.mxu0 0
      %1359 = vmatpush1.bf16.msra.mxu0 0
      %1360 = vmatprep.subr.bf16.mxu0 0
      %1361 = vmatpush1.bf16.msra.mxu0 0
      %1362 = vmatprep.subr.bf16.mxu0 0
      %1363 = vmatpush1.bf16.msra.mxu0 0
      %1364 = vmatprep.mubr.bf16.mxu0 0
      %1365 = vmatmul.mubr.bf16.gmra.mrb[0].mxu0 %v1261
      %v1366 = vpop.f32.mrb[0].mxu0
      %v1367 = vadd.f32 0.0, %v1366
      %v1368 = vpop.f32.mrb[0].mxu0
      %v1369 = vpop.f32.mrb[0].mxu0
      %v1370 = vadd.f32 0.0, %v1369
      %v1371 = vpop.f32.mrb[0].mxu0
      %1372 = vmatprep.mubr.bf16.mxu0 0
      %1373 = vmatmul.mubr.bf16.gmra.mrb[0].mxu0 %v1264
      %v1374 = vpop.f32.mrb[0].mxu0
      %v1375 = vadd.f32 0.0, %v1374
      %v1376 = vpop.f32.mrb[0].mxu0
      %v1377 = vpop.f32.mrb[0].mxu0
      %v1378 = vadd.f32 0.0, %v1377
      %v1379 = vpop.f32.mrb[0].mxu0
      %1380 = vmatprep.mubr.bf16.mxu0 0
      %1381 = vmatmul.mubr.bf16.gmra.mrb[0].mxu0 %v1267
      %v1382 = vpop.f32.mrb[0].mxu0
      %v1383 = vadd.f32 0.0, %v1382
      %v1384 = vpop.f32.mrb[0].mxu0
      %v1385 = vpop.f32.mrb[0].mxu0
      %v1386 = vadd.f32 0.0, %v1385
      %v1387 = vpop.f32.mrb[0].mxu0
      %1388 = vmatprep.mubr.bf16.mxu0 0
      %1389 = vmatmul.mubr.bf16.gmra.mrb[0].mxu0 %v1270
      %v1390 = vpop.f32.mrb[0].mxu0
      %v1391 = vadd.f32 0.0, %v1390
      %v1392 = vpop.f32.mrb[0].mxu0
      %v1393 = vpop.f32.mrb[0].mxu0
      %v1394 = vadd.f32 0.0, %v1393
      %v1395 = vpop.f32.mrb[0].mxu0
      %1396 = vmatprep.mubr.bf16.mxu0 0
      %1397 = vmatmul.mubr.bf16.gmra.mrb[0].mxu0 %v1273
      %v1398 = vpop.f32.mrb[0].mxu0
      %v1399 = vadd.f32 0.0, %v1398
      %v1400 = vpop.f32.mrb[0].mxu0
      %v1401 = vpop.f32.mrb[0].mxu0
      %v1402 = vadd.f32 0.0, %v1401
      %v1403 = vpop.f32.mrb[0].mxu0
      %1404 = vmatprep.mubr.bf16.mxu0 0
      %1405 = vmatmul.mubr.bf16.gmra.mrb[0].mxu0 %v1276
      %v1406 = vpop.f32.mrb[0].mxu0
      %v1407 = vadd.f32 0.0, %v1406
      %v1408 = vpop.f32.mrb[0].mxu0
      %v1409 = vpop.f32.mrb[0].mxu0
      %v1410 = vadd.f32 0.0, %v1409
      %v1411 = vpop.f32.mrb[0].mxu0
      %1412 = vmatprep.mubr.bf16.mxu0 0
      %1413 = vmatmul.mubr.bf16.gmra.mrb[0].mxu0 %v1279
      %v1414 = vpop.f32.mrb[0].mxu0
      %v1415 = vadd.f32 0.0, %v1414
      %v1416 = vpop.f32.mrb[0].mxu0
      %v1417 = vpop.f32.mrb[0].mxu0
      %v1418 = vadd.f32 0.0, %v1417
      %v1419 = vpop.f32.mrb[0].mxu0
      %1420 = vmatprep.mubr.bf16.mxu0 0
      %1421 = vmatmul.mubr.bf16.gmra.mrb[0].mxu0 %v1282
      %v1422 = vpop.f32.mrb[0].mxu0
      %v1423 = vadd.f32 0.0, %v1422
      %v1424 = vpop.f32.mrb[0].mxu0
      %v1425 = vpop.f32.mrb[0].mxu0
      %v1426 = vadd.f32 0.0, %v1425
      %v1427 = vpop.f32.mrb[0].mxu0
      %1428 = vmatprep.mubr.bf16.mxu0 0
      %1429 = vmatmul.mubr.bf16.gmra.mrb[0].mxu0 %v1285
      %v1430 = vpop.f32.mrb[0].mxu0
      %v1431 = vadd.f32 0.0, %v1430
      %v1432 = vpop.f32.mrb[0].mxu0
      %v1433 = vpop.f32.mrb[0].mxu0
      %v1434 = vadd.f32 0.0, %v1433
      %v1435 = vpop.f32.mrb[0].mxu0
      %1436 = vmatprep.mubr.bf16.mxu0 0
      %1437 = vmatmul.mubr.bf16.gmra.mrb[0].mxu0 %v1288
      %v1438 = vpop.f32.mrb[0].mxu0
      %v1439 = vadd.f32 0.0, %v1438
      %v1440 = vpop.f32.mrb[0].mxu0
      %v1441 = vpop.f32.mrb[0].mxu0
      %v1442 = vadd.f32 0.0, %v1441
      %v1443 = vpop.f32.mrb[0].mxu0
      %1444 = vmatprep.mubr.bf16.mxu0 0
      %1445 = vmatmul.mubr.bf16.gmra.mrb[0].mxu0 %v1291
      %v1446 = vpop.f32.mrb[0].mxu0
      %v1447 = vadd.f32 0.0, %v1446
      %v1448 = vpop.f32.mrb[0].mxu0
      %v1449 = vpop.f32.mrb[0].mxu0
      %v1450 = vadd.f32 0.0, %v1449
      %v1451 = vpop.f32.mrb[0].mxu0
      %1452 = vmatprep.mubr.bf16.mxu0 0
      %1453 = vmatmul.mubr.bf16.gmra.mrb[0].mxu0 %v1294
      %v1454 = vpop.f32.mrb[0].mxu0
      %v1455 = vadd.f32 0.0, %v1454
      %v1456 = vpop.f32.mrb[0].mxu0
      %v1457 = vpop.f32.mrb[0].mxu0
      %v1458 = vadd.f32 0.0, %v1457
      %v1459 = vpop.f32.mrb[0].mxu0
      %1460 = vmatprep.mubr.bf16.mxu0 0
      %1461 = vmatmul.mubr.bf16.gmra.mrb[0].mxu0 %v1297
      %v1462 = vpop.f32.mrb[0].mxu0
      %v1463 = vadd.f32 0.0, %v1462
      %v1464 = vpop.f32.mrb[0].mxu0
      %v1465 = vpop.f32.mrb[0].mxu0
      %v1466 = vadd.f32 0.0, %v1465
      %v1467 = vpop.f32.mrb[0].mxu0
      %1468 = vmatprep.mubr.bf16.mxu0 0
      %1469 = vmatmul.mubr.bf16.gmra.mrb[0].mxu0 %v1300
      %v1470 = vpop.f32.mrb[0].mxu0
      %v1471 = vadd.f32 0.0, %v1470
      %v1472 = vpop.f32.mrb[0].mxu0
      %v1473 = vpop.f32.mrb[0].mxu0
      %v1474 = vadd.f32 0.0, %v1473
      %v1475 = vpop.f32.mrb[0].mxu0
      %1476 = vmatprep.mubr.bf16.mxu0 0
      %1477 = vmatmul.mubr.bf16.gmra.mrb[0].mxu0 %v1303
      %v1478 = vpop.f32.mrb[0].mxu0
      %v1479 = vadd.f32 0.0, %v1478
      %v1480 = vpop.f32.mrb[0].mxu0
      %v1481 = vpop.f32.mrb[0].mxu0
      %v1482 = vadd.f32 0.0, %v1481
      %v1483 = vpop.f32.mrb[0].mxu0
      %1484 = vmatprep.mubr.bf16.mxu0 0
      %1485 = vmatmul.mubr.bf16.gmra.mrb[0].mxu0 %v1306
      %v1486 = vpop.f32.mrb[0].mxu0
      %v1487 = vadd.f32 0.0, %v1486
      %v1488 = vpop.f32.mrb[0].mxu0
      %v1489 = vpop.f32.mrb[0].mxu0
      %v1490 = vadd.f32 0.0, %v1489
      %v1491 = vpop.f32.mrb[0].mxu0
      %1492 = vmatprep.mubr.bf16.mxu0 0
      %1493 = vmatmul.mubr.bf16.gmra.mrb[0].mxu0 %v1309
      %v1494 = vpop.f32.mrb[0].mxu0
      %v1495 = vadd.f32 0.0, %v1494
      %v1496 = vpop.f32.mrb[0].mxu0
      %v1497 = vpop.f32.mrb[0].mxu0
      %v1498 = vadd.f32 0.0, %v1497
      %v1499 = vpop.f32.mrb[0].mxu0
      %1500 = vmatprep.mubr.bf16.mxu0 0
      %1501 = vmatmul.mubr.bf16.gmra.mrb[0].mxu0 %v1312
      %v1502 = vpop.f32.mrb[0].mxu0
      %v1503 = vadd.f32 0.0, %v1502
      %v1504 = vpop.f32.mrb[0].mxu0
      %v1505 = vpop.f32.mrb[0].mxu0
      %v1506 = vadd.f32 0.0, %v1505
      %v1507 = vpop.f32.mrb[0].mxu0
      %1508 = vmatprep.mubr.bf16.mxu0 0
      %1509 = vmatmul.mubr.bf16.gmra.mrb[0].mxu0 %v1315
      %v1510 = vpop.f32.mrb[0].mxu0
      %v1511 = vadd.f32 0.0, %v1510
      %v1512 = vpop.f32.mrb[0].mxu0
      %v1513 = vpop.f32.mrb[0].mxu0
      %v1514 = vadd.f32 0.0, %v1513
      %v1515 = vpop.f32.mrb[0].mxu0
      %1516 = vmatprep.mubr.bf16.mxu0 0
      %1517 = vmatmul.mubr.bf16.gmra.mrb[0].mxu0 %v1318
      %v1518 = vpop.f32.mrb[0].mxu0
      %v1519 = vadd.f32 0.0, %v1518
      %v1520 = vpop.f32.mrb[0].mxu0
      %v1521 = vpop.f32.mrb[0].mxu0
      %v1522 = vadd.f32 0.0, %v1521
      %v1523 = vpop.f32.mrb[0].mxu0
      %1524 = vmatprep.mubr.bf16.mxu0 0
      %1525 = vmatmul.mubr.bf16.gmra.mrb[0].mxu0 %v1321
      %v1526 = vpop.f32.mrb[0].mxu0
      %v1527 = vadd.f32 0.0, %v1526
      %v1528 = vpop.f32.mrb[0].mxu0
      %v1529 = vpop.f32.mrb[0].mxu0
      %v1530 = vadd.f32 0.0, %v1529
      %v1531 = vpop.f32.mrb[0].mxu0
      %1532 = vmatprep.mubr.bf16.mxu0 0
      %1533 = vmatmul.mubr.bf16.gmra.mrb[0].mxu0 %v1324
      %v1534 = vpop.f32.mrb[0].mxu0
      %v1535 = vadd.f32 0.0, %v1534
      %v1536 = vpop.f32.mrb[0].mxu0
      %v1537 = vpop.f32.mrb[0].mxu0
      %v1538 = vadd.f32 0.0, %v1537
      %v1539 = vpop.f32.mrb[0].mxu0
      %1540 = vmatprep.mubr.bf16.mxu0 0
      %1541 = vmatmul.mubr.bf16.gmra.mrb[0].mxu0 %v1327
      %v1542 = vpop.f32.mrb[0].mxu0
      %v1543 = vadd.f32 0.0, %v1542
      %v1544 = vpop.f32.mrb[0].mxu0
      %v1545 = vpop.f32.mrb[0].mxu0
      %v1546 = vadd.f32 0.0, %v1545
      %v1547 = vpop.f32.mrb[0].mxu0
      %1548 = vmatprep.mubr.bf16.mxu0 0
      %1549 = vmatmul.mubr.bf16.gmra.mrb[0].mxu0 %v1330
      %v1550 = vpop.f32.mrb[0].mxu0
      %v1551 = vadd.f32 0.0, %v1550
      %v1552 = vpop.f32.mrb[0].mxu0
      %v1553 = vpop.f32.mrb[0].mxu0
      %v1554 = vadd.f32 0.0, %v1553
      %v1555 = vpop.f32.mrb[0].mxu0
      %1556 = vdwg.mxu0
      %v1557 = vadd.f32 %v877, %v1367
      %v1558 = vadd.f32 %v880, %v1370
      %v1559 = vadd.f32 %v885, %v1375
      %v1560 = vadd.f32 %v888, %v1378
      %v1561 = vadd.f32 %v893, %v1383
      %v1562 = vadd.f32 %v896, %v1386
      %v1563 = vadd.f32 %v901, %v1391
      %v1564 = vadd.f32 %v904, %v1394
      %v1565 = vadd.f32 %v909, %v1399
      %v1566 = vadd.f32 %v912, %v1402
      %v1567 = vadd.f32 %v917, %v1407
      %v1568 = vadd.f32 %v920, %v1410
      %v1569 = vadd.f32 %v925, %v1415
      %v1570 = vadd.f32 %v928, %v1418
      %v1571 = vadd.f32 %v933, %v1423
      %v1572 = vadd.f32 %v936, %v1426
      %v1573 = vadd.f32 %v941, %v1431
      %v1574 = vadd.f32 %v944, %v1434
      %v1575 = vadd.f32 %v949, %v1439
      %v1576 = vadd.f32 %v952, %v1442
      %v1577 = vadd.f32 %v957, %v1447
      %v1578 = vadd.f32 %v960, %v1450
      %v1579 = vadd.f32 %v965, %v1455
      %v1580 = vadd.f32 %v968, %v1458
      %v1581 = vadd.f32 %v973, %v1463
      %v1582 = vadd.f32 %v976, %v1466
      %v1583 = vadd.f32 %v981, %v1471
      %v1584 = vadd.f32 %v984, %v1474
      %v1585 = vadd.f32 %v989, %v1479
      %v1586 = vadd.f32 %v992, %v1482
      %v1587 = vadd.f32 %v997, %v1487
      %v1588 = vadd.f32 %v1000, %v1490
      %v1589 = vadd.f32 %v1005, %v1495
      %v1590 = vadd.f32 %v1008, %v1498
      %v1591 = vadd.f32 %v1013, %v1503
      %v1592 = vadd.f32 %v1016, %v1506
      %v1593 = vadd.f32 %v1021, %v1511
      %v1594 = vadd.f32 %v1024, %v1514
      %v1595 = vadd.f32 %v1029, %v1519
      %v1596 = vadd.f32 %v1032, %v1522
      %v1597 = vadd.f32 %v1037, %v1527
      %v1598 = vadd.f32 %v1040, %v1530
      %v1599 = vadd.f32 %v1045, %v1535
      %v1600 = vadd.f32 %v1048, %v1538
      %v1601 = vadd.f32 %v1053, %v1543
      %v1602 = vadd.f32 %v1056, %v1546
      %v1603 = vadd.f32 %v1061, %v1551
      %v1604 = vadd.f32 %v1064, %v1554
      %v1605 = vld [vmem:[%s285] sm:$0xf]
      %v1606 = vld [vmem:[%s285 + $0x4] sm:$0xf]
      %v1607 = vld [vmem:[%s285 + $0x8] sm:$0xf]
      %v1608 = vld [vmem:[%s285 + $0xc] sm:$0xf]
      %v1609 = vld [vmem:[%s285 + $0x10] sm:$0xf]
      %v1610 = vld [vmem:[%s285 + $0x14] sm:$0xf]
      %v1611 = vld [vmem:[%s285 + $0x18] sm:$0xf]
      %v1612 = vld [vmem:[%s285 + $0x1c] sm:$0xf]
      %v1613 = vld [vmem:[%s285 + $0x20] sm:$0xf]
      %v1614 = vld [vmem:[%s285 + $0x24] sm:$0xf]
      %v1615 = vld [vmem:[%s285 + $0x28] sm:$0xf]
      %v1616 = vld [vmem:[%s285 + $0x2c] sm:$0xf]
      %v1617 = vld [vmem:[%s285 + $0x30] sm:$0xf]
      %v1618 = vld [vmem:[%s285 + $0x34] sm:$0xf]
      %v1619 = vld [vmem:[%s285 + $0x38] sm:$0xf]
      %v1620 = vld [vmem:[%s285 + $0x3c] sm:$0xf]
      %v1621 = vld [vmem:[%s285 + $0x40] sm:$0xf]
      %v1622 = vld [vmem:[%s285 + $0x44] sm:$0xf]
      %v1623 = vld [vmem:[%s285 + $0x48] sm:$0xf]
      %v1624 = vld [vmem:[%s285 + $0x4c] sm:$0xf]
      %v1625 = vld [vmem:[%s285 + $0x50] sm:$0xf]
      %v1626 = vld [vmem:[%s285 + $0x54] sm:$0xf]
      %v1627 = vld [vmem:[%s285 + $0x58] sm:$0xf]
      %v1628 = vld [vmem:[%s285 + $0x5c] sm:$0xf]
      %v1629 = vld [vmem:[%s285 + $0x60] sm:$0xf]
      %v1630 = vld [vmem:[%s285 + $0x64] sm:$0xf]
      %v1631 = vld [vmem:[%s285 + $0x68] sm:$0xf]
      %v1632 = vld [vmem:[%s285 + $0x6c] sm:$0xf]
      %v1633 = vld [vmem:[%s285 + $0x70] sm:$0xf]
      %v1634 = vld [vmem:[%s285 + $0x74] sm:$0xf]
      %v1635 = vld [vmem:[%s285 + $0x78] sm:$0xf]
      %v1636 = vld [vmem:[%s285 + $0x7c] sm:$0xf]
      %v1637 = vld [vmem:[%s285 + $0x80] sm:$0xf]
      %v1638 = vld [vmem:[%s285 + $0x84] sm:$0xf]
      %v1639 = vld [vmem:[%s285 + $0x88] sm:$0xf]
      %v1640 = vld [vmem:[%s285 + $0x8c] sm:$0xf]
      %v1641 = vld [vmem:[%s285 + $0x90] sm:$0xf]
      %v1642 = vld [vmem:[%s285 + $0x94] sm:$0xf]
      %v1643 = vld [vmem:[%s285 + $0x98] sm:$0xf]
      %v1644 = vld [vmem:[%s285 + $0x9c] sm:$0xf]
      %v1645 = vld [vmem:[%s285 + $0xa0] sm:$0xf]
      %v1646 = vld [vmem:[%s285 + $0xa4] sm:$0xf]
      %v1647 = vld [vmem:[%s285 + $0xa8] sm:$0xf]
      %v1648 = vld [vmem:[%s285 + $0xac] sm:$0xf]
      %v1649 = vld [vmem:[%s285 + $0xb0] sm:$0xf]
      %v1650 = vld [vmem:[%s285 + $0xb4] sm:$0xf]
      %v1651 = vld [vmem:[%s285 + $0xb8] sm:$0xf]
      %v1652 = vld [vmem:[%s285 + $0xbc] sm:$0xf]
      %v1653 = vld [vmem:[%s3] sm:$0xf]
      %v1654 = vld [vmem:[%s3 + $0x4] sm:$0xf]
      %v1655 = vld [vmem:[%s3 + $0x8] sm:$0xf]
      %v1704 = vunpack.c.l.b16 %v1605
      %v1705 = vunpack.c.l.b16 %v1606
      %v1706 = vunpack.c.l.b16 %v1607
      %v1707 = vunpack.c.l.b16 %v1608
      %v1708 = vunpack.c.l.b16 %v1609
      %v1709 = vunpack.c.l.b16 %v1610
      %v1710 = vunpack.c.l.b16 %v1611
      %v1711 = vunpack.c.l.b16 %v1612
      %v1712 = vunpack.c.l.b16 %v1613
      %v1713 = vunpack.c.l.b16 %v1614
      %v1714 = vunpack.c.l.b16 %v1615
      %v1715 = vunpack.c.l.b16 %v1616
      %v1716 = vunpack.c.l.b16 %v1617
      %v1717 = vunpack.c.l.b16 %v1618
      %v1718 = vunpack.c.l.b16 %v1619
      %v1719 = vunpack.c.l.b16 %v1620
      %v1720 = vunpack.c.l.b16 %v1621
      %v1721 = vunpack.c.l.b16 %v1622
      %v1722 = vunpack.c.l.b16 %v1623
      %v1723 = vunpack.c.l.b16 %v1624
      %v1724 = vunpack.c.l.b16 %v1625
      %v1725 = vunpack.c.l.b16 %v1626
      %v1726 = vunpack.c.l.b16 %v1627
      %v1727 = vunpack.c.l.b16 %v1628
      %v1728 = vunpack.c.l.b16 %v1629
      %v1729 = vunpack.c.l.b16 %v1630
      %v1730 = vunpack.c.l.b16 %v1631
      %v1731 = vunpack.c.l.b16 %v1632
      %v1732 = vunpack.c.l.b16 %v1633
      %v1733 = vunpack.c.l.b16 %v1634
      %v1734 = vunpack.c.l.b16 %v1635
      %v1735 = vunpack.c.l.b16 %v1636
      %v1736 = vunpack.c.l.b16 %v1637
      %v1737 = vunpack.c.l.b16 %v1638
      %v1738 = vunpack.c.l.b16 %v1639
      %v1739 = vunpack.c.l.b16 %v1640
      %v1740 = vunpack.c.l.b16 %v1641
      %v1741 = vunpack.c.l.b16 %v1642
      %v1742 = vunpack.c.l.b16 %v1643
      %v1743 = vunpack.c.l.b16 %v1644
      %v1744 = vunpack.c.l.b16 %v1645
      %v1745 = vunpack.c.l.b16 %v1646
      %v1746 = vunpack.c.l.b16 %v1647
      %v1747 = vunpack.c.l.b16 %v1648
      %v1748 = vunpack.c.l.b16 %v1649
      %v1749 = vunpack.c.l.b16 %v1650
      %v1750 = vunpack.c.l.b16 %v1651
      %v1751 = vunpack.c.l.b16 %v1652
      %v1752 = vpack.c.b16 %v1705, %v1704
      %v1753 = vpack.c.b16 %v1707, %v1706
      %v1754 = vpack.c.b16 %v1709, %v1708
      %v1755 = vpack.c.b16 %v1711, %v1710
      %v1756 = vpack.c.b16 %v1713, %v1712
      %v1757 = vpack.c.b16 %v1715, %v1714
      %v1758 = vpack.c.b16 %v1717, %v1716
      %v1759 = vpack.c.b16 %v1719, %v1718
      %v1760 = vpack.c.b16 %v1721, %v1720
      %v1761 = vpack.c.b16 %v1723, %v1722
      %v1762 = vpack.c.b16 %v1725, %v1724
      %v1763 = vpack.c.b16 %v1727, %v1726
      %v1764 = vpack.c.b16 %v1729, %v1728
      %v1765 = vpack.c.b16 %v1731, %v1730
      %v1766 = vpack.c.b16 %v1733, %v1732
      %v1767 = vpack.c.b16 %v1735, %v1734
      %v1768 = vpack.c.b16 %v1737, %v1736
      %v1769 = vpack.c.b16 %v1739, %v1738
      %v1770 = vpack.c.b16 %v1741, %v1740
      %v1771 = vpack.c.b16 %v1743, %v1742
      %v1772 = vpack.c.b16 %v1745, %v1744
      %v1773 = vpack.c.b16 %v1747, %v1746
      %v1774 = vpack.c.b16 %v1749, %v1748
      %v1775 = vpack.c.b16 %v1751, %v1750
      %v1779 = vunpack.c.l.b16 %v1653
      %v1780 = vunpack.c.l.b16 %v1654
      %v1781 = vunpack.c.l.b16 %v1655
      %v1782 = vpack.c.b16 %v1780, %v1779
      %v1783 = vpack.c.b16 %v1781, %v1781
      %vm1785 = vcmask 195584
      %v1787 = vsel %vm1785, %v1752, 0
      %v1790 = vsel %vm1785, %v1753, 0
      %v1793 = vsel %vm1785, %v1754, 0
      %v1796 = vsel %vm1785, %v1755, 0
      %v1799 = vsel %vm1785, %v1756, 0
      %v1802 = vsel %vm1785, %v1757, 0
      %v1805 = vsel %vm1785, %v1758, 0
      %v1808 = vsel %vm1785, %v1759, 0
      %v1811 = vsel %vm1785, %v1760, 0
      %v1814 = vsel %vm1785, %v1761, 0
      %v1817 = vsel %vm1785, %v1762, 0
      %v1820 = vsel %vm1785, %v1763, 0
      %v1823 = vsel %vm1785, %v1764, 0
      %v1826 = vsel %vm1785, %v1765, 0
      %v1829 = vsel %vm1785, %v1766, 0
      %v1832 = vsel %vm1785, %v1767, 0
      %v1835 = vsel %vm1785, %v1768, 0
      %v1838 = vsel %vm1785, %v1769, 0
      %v1841 = vsel %vm1785, %v1770, 0
      %v1844 = vsel %vm1785, %v1771, 0
      %v1847 = vsel %vm1785, %v1772, 0
      %v1850 = vsel %vm1785, %v1773, 0
      %v1853 = vsel %vm1785, %v1774, 0
      %v1856 = vsel %vm1785, %v1775, 0
      %vm1858 = vcmask 1043456
      %v1860 = vsel %vm1858, %v1783, 0
      %1862 = vmatprep.subr.bf16.mxu0 0
      %1863 = vmatpush1.bf16.msra.mxu0 %v1782
      %1864 = vmatprep.subr.bf16.mxu0 0
      %1865 = vmatpush1.bf16.msra.mxu0 %v1860
      %1866 = vmatprep.subr.bf16.mxu0 0
      %1867 = vmatpush1.bf16.msra.mxu0 0
      %1868 = vmatprep.subr.bf16.mxu0 0
      %1869 = vmatpush1.bf16.msra.mxu0 0
      %1870 = vmatprep.subr.bf16.mxu0 0
      %1871 = vmatpush1.bf16.msra.mxu0 0
      %1872 = vmatprep.subr.bf16.mxu0 0
      %1873 = vmatpush1.bf16.msra.mxu0 0
      %1874 = vmatprep.subr.bf16.mxu0 0
      %1875 = vmatpush1.bf16.msra.mxu0 0
      %1876 = vmatprep.subr.bf16.mxu0 0
      %1877 = vmatpush1.bf16.msra.mxu0 0
      %1878 = vmatprep.subr.bf16.mxu0 0
      %1879 = vmatpush1.bf16.msra.mxu0 0
      %1880 = vmatprep.subr.bf16.mxu0 0
      %1881 = vmatpush1.bf16.msra.mxu0 0
      %1882 = vmatprep.subr.bf16.mxu0 0
      %1883 = vmatpush1.bf16.msra.mxu0 0
      %1884 = vmatprep.subr.bf16.mxu0 0
      %1885 = vmatpush1.bf16.msra.mxu0 0
      %1886 = vmatprep.subr.bf16.mxu0 0
      %1887 = vmatpush1.bf16.msra.mxu0 0
      %1888 = vmatprep.subr.bf16.mxu0 0
      %1889 = vmatpush1.bf16.msra.mxu0 0
      %1890 = vmatprep.subr.bf16.mxu0 0
      %1891 = vmatpush1.bf16.msra.mxu0 0
      %1892 = vmatprep.subr.bf16.mxu0 0
      %1893 = vmatpush1.bf16.msra.mxu0 0
      %1894 = vmatprep.mubr.bf16.mxu0 0
      %1895 = vmatmul.mubr.bf16.gmra.mrb[0].mxu0 %v1787
      %v1896 = vpop.f32.mrb[0].mxu0
      %v1897 = vadd.f32 0.0, %v1896
      %v1898 = vpop.f32.mrb[0].mxu0
      %v1899 = vpop.f32.mrb[0].mxu0
      %v1900 = vadd.f32 0.0, %v1899
      %v1901 = vpop.f32.mrb[0].mxu0
      %1902 = vmatprep.mubr.bf16.mxu0 0
      %1903 = vmatmul.mubr.bf16.gmra.mrb[0].mxu0 %v1790
      %v1904 = vpop.f32.mrb[0].mxu0
      %v1905 = vadd.f32 0.0, %v1904
      %v1906 = vpop.f32.mrb[0].mxu0
      %v1907 = vpop.f32.mrb[0].mxu0
      %v1908 = vadd.f32 0.0, %v1907
      %v1909 = vpop.f32.mrb[0].mxu0
      %1910 = vmatprep.mubr.bf16.mxu0 0
      %1911 = vmatmul.mubr.bf16.gmra.mrb[0].mxu0 %v1793
      %v1912 = vpop.f32.mrb[0].mxu0
      %v1913 = vadd.f32 0.0, %v1912
      %v1914 = vpop.f32.mrb[0].mxu0
      %v1915 = vpop.f32.mrb[0].mxu0
      %v1916 = vadd.f32 0.0, %v1915
      %v1917 = vpop.f32.mrb[0].mxu0
      %1918 = vmatprep.mubr.bf16.mxu0 0
      %1919 = vmatmul.mubr.bf16.gmra.mrb[0].mxu0 %v1796
      %v1920 = vpop.f32.mrb[0].mxu0
      %v1921 = vadd.f32 0.0, %v1920
      %v1922 = vpop.f32.mrb[0].mxu0
      %v1923 = vpop.f32.mrb[0].mxu0
      %v1924 = vadd.f32 0.0, %v1923
      %v1925 = vpop.f32.mrb[0].mxu0
      %1926 = vmatprep.mubr.bf16.mxu0 0
      %1927 = vmatmul.mubr.bf16.gmra.mrb[0].mxu0 %v1799
      %v1928 = vpop.f32.mrb[0].mxu0
      %v1929 = vadd.f32 0.0, %v1928
      %v1930 = vpop.f32.mrb[0].mxu0
      %v1931 = vpop.f32.mrb[0].mxu0
      %v1932 = vadd.f32 0.0, %v1931
      %v1933 = vpop.f32.mrb[0].mxu0
      %1934 = vmatprep.mubr.bf16.mxu0 0
      %1935 = vmatmul.mubr.bf16.gmra.mrb[0].mxu0 %v1802
      %v1936 = vpop.f32.mrb[0].mxu0
      %v1937 = vadd.f32 0.0, %v1936
      %v1938 = vpop.f32.mrb[0].mxu0
      %v1939 = vpop.f32.mrb[0].mxu0
      %v1940 = vadd.f32 0.0, %v1939
      %v1941 = vpop.f32.mrb[0].mxu0
      %1942 = vmatprep.mubr.bf16.mxu0 0
      %1943 = vmatmul.mubr.bf16.gmra.mrb[0].mxu0 %v1805
      %v1944 = vpop.f32.mrb[0].mxu0
      %v1945 = vadd.f32 0.0, %v1944
      %v1946 = vpop.f32.mrb[0].mxu0
      %v1947 = vpop.f32.mrb[0].mxu0
      %v1948 = vadd.f32 0.0, %v1947
      %v1949 = vpop.f32.mrb[0].mxu0
      %1950 = vmatprep.mubr.bf16.mxu0 0
      %1951 = vmatmul.mubr.bf16.gmra.mrb[0].mxu0 %v1808
      %v1952 = vpop.f32.mrb[0].mxu0
      %v1953 = vadd.f32 0.0, %v1952
      %v1954 = vpop.f32.mrb[0].mxu0
      %v1955 = vpop.f32.mrb[0].mxu0
      %v1956 = vadd.f32 0.0, %v1955
      %v1957 = vpop.f32.mrb[0].mxu0
      %1958 = vmatprep.mubr.bf16.mxu0 0
      %1959 = vmatmul.mubr.bf16.gmra.mrb[0].mxu0 %v1811
      %v1960 = vpop.f32.mrb[0].mxu0
      %v1961 = vadd.f32 0.0, %v1960
      %v1962 = vpop.f32.mrb[0].mxu0
      %v1963 = vpop.f32.mrb[0].mxu0
      %v1964 = vadd.f32 0.0, %v1963
      %v1965 = vpop.f32.mrb[0].mxu0
      %1966 = vmatprep.mubr.bf16.mxu0 0
      %1967 = vmatmul.mubr.bf16.gmra.mrb[0].mxu0 %v1814
      %v1968 = vpop.f32.mrb[0].mxu0
      %v1969 = vadd.f32 0.0, %v1968
      %v1970 = vpop.f32.mrb[0].mxu0
      %v1971 = vpop.f32.mrb[0].mxu0
      %v1972 = vadd.f32 0.0, %v1971
      %v1973 = vpop.f32.mrb[0].mxu0
      %1974 = vmatprep.mubr.bf16.mxu0 0
      %1975 = vmatmul.mubr.bf16.gmra.mrb[0].mxu0 %v1817
      %v1976 = vpop.f32.mrb[0].mxu0
      %v1977 = vadd.f32 0.0, %v1976
      %v1978 = vpop.f32.mrb[0].mxu0
      %v1979 = vpop.f32.mrb[0].mxu0
      %v1980 = vadd.f32 0.0, %v1979
      %v1981 = vpop.f32.mrb[0].mxu0
      %1982 = vmatprep.mubr.bf16.mxu0 0
      %1983 = vmatmul.mubr.bf16.gmra.mrb[0].mxu0 %v1820
      %v1984 = vpop.f32.mrb[0].mxu0
      %v1985 = vadd.f32 0.0, %v1984
      %v1986 = vpop.f32.mrb[0].mxu0
      %v1987 = vpop.f32.mrb[0].mxu0
      %v1988 = vadd.f32 0.0, %v1987
      %v1989 = vpop.f32.mrb[0].mxu0
      %1990 = vmatprep.mubr.bf16.mxu0 0
      %1991 = vmatmul.mubr.bf16.gmra.mrb[0].mxu0 %v1823
      %v1992 = vpop.f32.mrb[0].mxu0
      %v1993 = vadd.f32 0.0, %v1992
      %v1994 = vpop.f32.mrb[0].mxu0
      %v1995 = vpop.f32.mrb[0].mxu0
      %v1996 = vadd.f32 0.0, %v1995
      %v1997 = vpop.f32.mrb[0].mxu0
      %1998 = vmatprep.mubr.bf16.mxu0 0
      %1999 = vmatmul.mubr.bf16.gmra.mrb[0].mxu0 %v1826
      %v2000 = vpop.f32.mrb[0].mxu0
      %v2001 = vadd.f32 0.0, %v2000
      %v2002 = vpop.f32.mrb[0].mxu0
      %v2003 = vpop.f32.mrb[0].mxu0
      %v2004 = vadd.f32 0.0, %v2003
      %v2005 = vpop.f32.mrb[0].mxu0
      %2006 = vmatprep.mubr.bf16.mxu0 0
      %2007 = vmatmul.mubr.bf16.gmra.mrb[0].mxu0 %v1829
      %v2008 = vpop.f32.mrb[0].mxu0
      %v2009 = vadd.f32 0.0, %v2008
      %v2010 = vpop.f32.mrb[0].mxu0
      %v2011 = vpop.f32.mrb[0].mxu0
      %v2012 = vadd.f32 0.0, %v2011
      %v2013 = vpop.f32.mrb[0].mxu0
      %2014 = vmatprep.mubr.bf16.mxu0 0
      %2015 = vmatmul.mubr.bf16.gmra.mrb[0].mxu0 %v1832
      %v2016 = vpop.f32.mrb[0].mxu0
      %v2017 = vadd.f32 0.0, %v2016
      %v2018 = vpop.f32.mrb[0].mxu0
      %v2019 = vpop.f32.mrb[0].mxu0
      %v2020 = vadd.f32 0.0, %v2019
      %v2021 = vpop.f32.mrb[0].mxu0
      %2022 = vmatprep.mubr.bf16.mxu0 0
      %2023 = vmatmul.mubr.bf16.gmra.mrb[0].mxu0 %v1835
      %v2024 = vpop.f32.mrb[0].mxu0
      %v2025 = vadd.f32 0.0, %v2024
      %v2026 = vpop.f32.mrb[0].mxu0
      %v2027 = vpop.f32.mrb[0].mxu0
      %v2028 = vadd.f32 0.0, %v2027
      %v2029 = vpop.f32.mrb[0].mxu0
      %2030 = vmatprep.mubr.bf16.mxu0 0
      %2031 = vmatmul.mubr.bf16.gmra.mrb[0].mxu0 %v1838
      %v2032 = vpop.f32.mrb[0].mxu0
      %v2033 = vadd.f32 0.0, %v2032
      %v2034 = vpop.f32.mrb[0].mxu0
      %v2035 = vpop.f32.mrb[0].mxu0
      %v2036 = vadd.f32 0.0, %v2035
      %v2037 = vpop.f32.mrb[0].mxu0
      %2038 = vmatprep.mubr.bf16.mxu0 0
      %2039 = vmatmul.mubr.bf16.gmra.mrb[0].mxu0 %v1841
      %v2040 = vpop.f32.mrb[0].mxu0
      %v2041 = vadd.f32 0.0, %v2040
      %v2042 = vpop.f32.mrb[0].mxu0
      %v2043 = vpop.f32.mrb[0].mxu0
      %v2044 = vadd.f32 0.0, %v2043
      %v2045 = vpop.f32.mrb[0].mxu0
      %2046 = vmatprep.mubr.bf16.mxu0 0
      %2047 = vmatmul.mubr.bf16.gmra.mrb[0].mxu0 %v1844
      %v2048 = vpop.f32.mrb[0].mxu0
      %v2049 = vadd.f32 0.0, %v2048
      %v2050 = vpop.f32.mrb[0].mxu0
      %v2051 = vpop.f32.mrb[0].mxu0
      %v2052 = vadd.f32 0.0, %v2051
      %v2053 = vpop.f32.mrb[0].mxu0
      %2054 = vmatprep.mubr.bf16.mxu0 0
      %2055 = vmatmul.mubr.bf16.gmra.mrb[0].mxu0 %v1847
      %v2056 = vpop.f32.mrb[0].mxu0
      %v2057 = vadd.f32 0.0, %v2056
      %v2058 = vpop.f32.mrb[0].mxu0
      %v2059 = vpop.f32.mrb[0].mxu0
      %v2060 = vadd.f32 0.0, %v2059
      %v2061 = vpop.f32.mrb[0].mxu0
      %2062 = vmatprep.mubr.bf16.mxu0 0
      %2063 = vmatmul.mubr.bf16.gmra.mrb[0].mxu0 %v1850
      %v2064 = vpop.f32.mrb[0].mxu0
      %v2065 = vadd.f32 0.0, %v2064
      %v2066 = vpop.f32.mrb[0].mxu0
      %v2067 = vpop.f32.mrb[0].mxu0
      %v2068 = vadd.f32 0.0, %v2067
      %v2069 = vpop.f32.mrb[0].mxu0
      %2070 = vmatprep.mubr.bf16.mxu0 0
      %2071 = vmatmul.mubr.bf16.gmra.mrb[0].mxu0 %v1853
      %v2072 = vpop.f32.mrb[0].mxu0
      %v2073 = vadd.f32 0.0, %v2072
      %v2074 = vpop.f32.mrb[0].mxu0
      %v2075 = vpop.f32.mrb[0].mxu0
      %v2076 = vadd.f32 0.0, %v2075
      %v2077 = vpop.f32.mrb[0].mxu0
      %2078 = vmatprep.mubr.bf16.mxu0 0
      %2079 = vmatmul.mubr.bf16.gmra.mrb[0].mxu0 %v1856
      %v2080 = vpop.f32.mrb[0].mxu0
      %v2081 = vadd.f32 0.0, %v2080
      %v2082 = vpop.f32.mrb[0].mxu0
      %v2083 = vpop.f32.mrb[0].mxu0
      %v2084 = vadd.f32 0.0, %v2083
      %v2085 = vpop.f32.mrb[0].mxu0
      %2086 = vdwg.mxu0
      %v2087 = vadd.f32 %v1557, %v1897
      %v2088 = vadd.f32 %v1558, %v1900
      %v2089 = vadd.f32 %v1559, %v1905
      %v2090 = vadd.f32 %v1560, %v1908
      %v2091 = vadd.f32 %v1561, %v1913
      %v2092 = vadd.f32 %v1562, %v1916
      %v2093 = vadd.f32 %v1563, %v1921
      %v2094 = vadd.f32 %v1564, %v1924
      %v2095 = vadd.f32 %v1565, %v1929
      %v2096 = vadd.f32 %v1566, %v1932
      %v2097 = vadd.f32 %v1567, %v1937
      %v2098 = vadd.f32 %v1568, %v1940
      %v2099 = vadd.f32 %v1569, %v1945
      %v2100 = vadd.f32 %v1570, %v1948
      %v2101 = vadd.f32 %v1571, %v1953
      %v2102 = vadd.f32 %v1572, %v1956
      %v2103 = vadd.f32 %v1573, %v1961
      %v2104 = vadd.f32 %v1574, %v1964
      %v2105 = vadd.f32 %v1575, %v1969
      %v2106 = vadd.f32 %v1576, %v1972
      %v2107 = vadd.f32 %v1577, %v1977
      %v2108 = vadd.f32 %v1578, %v1980
      %v2109 = vadd.f32 %v1579, %v1985
      %v2110 = vadd.f32 %v1580, %v1988
      %v2111 = vadd.f32 %v1581, %v1993
      %v2112 = vadd.f32 %v1582, %v1996
      %v2113 = vadd.f32 %v1583, %v2001
      %v2114 = vadd.f32 %v1584, %v2004
      %v2115 = vadd.f32 %v1585, %v2009
      %v2116 = vadd.f32 %v1586, %v2012
      %v2117 = vadd.f32 %v1587, %v2017
      %v2118 = vadd.f32 %v1588, %v2020
      %v2119 = vadd.f32 %v1589, %v2025
      %v2120 = vadd.f32 %v1590, %v2028
      %v2121 = vadd.f32 %v1591, %v2033
      %v2122 = vadd.f32 %v1592, %v2036
      %v2123 = vadd.f32 %v1593, %v2041
      %v2124 = vadd.f32 %v1594, %v2044
      %v2125 = vadd.f32 %v1595, %v2049
      %v2126 = vadd.f32 %v1596, %v2052
      %v2127 = vadd.f32 %v1597, %v2057
      %v2128 = vadd.f32 %v1598, %v2060
      %v2129 = vadd.f32 %v1599, %v2065
      %v2130 = vadd.f32 %v1600, %v2068
      %v2131 = vadd.f32 %v1601, %v2073
      %v2132 = vadd.f32 %v1602, %v2076
      %v2133 = vadd.f32 %v1603, %v2081
      %v2134 = vadd.f32 %v1604, %v2084
      %v2135 = vld [vmem:[%s285 + $0x18] sm:$0xf]
      %v2136 = vld [vmem:[%s285 + $0x1c] sm:$0xf]
      %v2137 = vld [vmem:[%s285 + $0x20] sm:$0xf]
      %v2138 = vld [vmem:[%s285 + $0x24] sm:$0xf]
      %v2139 = vld [vmem:[%s285 + $0x28] sm:$0xf]
      %v2140 = vld [vmem:[%s285 + $0x2c] sm:$0xf]
      %v2141 = vld [vmem:[%s285 + $0x30] sm:$0xf]
      %v2142 = vld [vmem:[%s285 + $0x34] sm:$0xf]
      %v2143 = vld [vmem:[%s285 + $0x38] sm:$0xf]
      %v2144 = vld [vmem:[%s285 + $0x3c] sm:$0xf]
      %v2145 = vld [vmem:[%s285 + $0x40] sm:$0xf]
      %v2146 = vld [vmem:[%s285 + $0x44] sm:$0xf]
      %v2147 = vld [vmem:[%s285 + $0x48] sm:$0xf]
      %v2148 = vld [vmem:[%s285 + $0x4c] sm:$0xf]
      %v2149 = vld [vmem:[%s285 + $0x50] sm:$0xf]
      %v2150 = vld [vmem:[%s285 + $0x54] sm:$0xf]
      %v2151 = vld [vmem:[%s285 + $0x58] sm:$0xf]
      %v2152 = vld [vmem:[%s285 + $0x5c] sm:$0xf]
      %v2153 = vld [vmem:[%s285 + $0x60] sm:$0xf]
      %v2154 = vld [vmem:[%s285 + $0x64] sm:$0xf]
      %v2155 = vld [vmem:[%s285 + $0x68] sm:$0xf]
      %v2156 = vld [vmem:[%s285 + $0x6c] sm:$0xf]
      %v2157 = vld [vmem:[%s285 + $0x70] sm:$0xf]
      %v2158 = vld [vmem:[%s285 + $0x74] sm:$0xf]
      %v2159 = vld [vmem:[%s285 + $0x78] sm:$0xf]
      %v2160 = vld [vmem:[%s285 + $0x7c] sm:$0xf]
      %v2161 = vld [vmem:[%s285 + $0x80] sm:$0xf]
      %v2162 = vld [vmem:[%s285 + $0x84] sm:$0xf]
      %v2163 = vld [vmem:[%s285 + $0x88] sm:$0xf]
      %v2164 = vld [vmem:[%s285 + $0x8c] sm:$0xf]
      %v2165 = vld [vmem:[%s285 + $0x90] sm:$0xf]
      %v2166 = vld [vmem:[%s285 + $0x94] sm:$0xf]
      %v2167 = vld [vmem:[%s285 + $0x98] sm:$0xf]
      %v2168 = vld [vmem:[%s285 + $0x9c] sm:$0xf]
      %v2169 = vld [vmem:[%s285 + $0xa0] sm:$0xf]
      %v2170 = vld [vmem:[%s285 + $0xa4] sm:$0xf]
      %v2171 = vld [vmem:[%s285 + $0xa8] sm:$0xf]
      %v2172 = vld [vmem:[%s285 + $0xac] sm:$0xf]
      %v2173 = vld [vmem:[%s285 + $0xb0] sm:$0xf]
      %v2174 = vld [vmem:[%s285 + $0xb4] sm:$0xf]
      %v2175 = vld [vmem:[%s285 + $0xb8] sm:$0xf]
      %v2176 = vld [vmem:[%s285 + $0xbc] sm:$0xf]
      %v2177 = vld [vmem:[%s285 + $0xc0] sm:$0xf]
      %v2178 = vld [vmem:[%s285 + $0xc4] sm:$0xf]
      %v2179 = vld [vmem:[%s285 + $0xc8] sm:$0xf]
      %v2180 = vld [vmem:[%s285 + $0xcc] sm:$0xf]
      %v2181 = vld [vmem:[%s285 + $0xd0] sm:$0xf]
      %v2182 = vld [vmem:[%s285 + $0xd4] sm:$0xf]
      %s2183 = scalar_lea.vmem %s3, 12
      %v2184 = vld [vmem:[%s2183] sm:$0xf]
      %v2185 = vld [vmem:[%s2183 + $0x4] sm:$0xf]
      %v2186 = vld [vmem:[%s2183 + $0x8] sm:$0xf]
      %v2235 = vunpack.c.l.b16 %v2135
      %v2236 = vunpack.c.l.b16 %v2136
      %v2237 = vunpack.c.l.b16 %v2137
      %v2238 = vunpack.c.l.b16 %v2138
      %v2239 = vunpack.c.l.b16 %v2139
      %v2240 = vunpack.c.l.b16 %v2140
      %v2241 = vunpack.c.l.b16 %v2141
      %v2242 = vunpack.c.l.b16 %v2142
      %v2243 = vunpack.c.l.b16 %v2143
      %v2244 = vunpack.c.l.b16 %v2144
      %v2245 = vunpack.c.l.b16 %v2145
      %v2246 = vunpack.c.l.b16 %v2146
      %v2247 = vunpack.c.l.b16 %v2147
      %v2248 = vunpack.c.l.b16 %v2148
      %v2249 = vunpack.c.l.b16 %v2149
      %v2250 = vunpack.c.l.b16 %v2150
      %v2251 = vunpack.c.l.b16 %v2151
      %v2252 = vunpack.c.l.b16 %v2152
      %v2253 = vunpack.c.l.b16 %v2153
      %v2254 = vunpack.c.l.b16 %v2154
      %v2255 = vunpack.c.l.b16 %v2155
      %v2256 = vunpack.c.l.b16 %v2156
      %v2257 = vunpack.c.l.b16 %v2157
      %v2258 = vunpack.c.l.b16 %v2158
      %v2259 = vunpack.c.l.b16 %v2159
      %v2260 = vunpack.c.l.b16 %v2160
      %v2261 = vunpack.c.l.b16 %v2161
      %v2262 = vunpack.c.l.b16 %v2162
      %v2263 = vunpack.c.l.b16 %v2163
      %v2264 = vunpack.c.l.b16 %v2164
      %v2265 = vunpack.c.l.b16 %v2165
      %v2266 = vunpack.c.l.b16 %v2166
      %v2267 = vunpack.c.l.b16 %v2167
      %v2268 = vunpack.c.l.b16 %v2168
      %v2269 = vunpack.c.l.b16 %v2169
      %v2270 = vunpack.c.l.b16 %v2170
      %v2271 = vunpack.c.l.b16 %v2171
      %v2272 = vunpack.c.l.b16 %v2172
      %v2273 = vunpack.c.l.b16 %v2173
      %v2274 = vunpack.c.l.b16 %v2174
      %v2275 = vunpack.c.l.b16 %v2175
      %v2276 = vunpack.c.l.b16 %v2176
      %v2277 = vunpack.c.l.b16 %v2177
      %v2278 = vunpack.c.l.b16 %v2178
      %v2279 = vunpack.c.l.b16 %v2179
      %v2280 = vunpack.c.l.b16 %v2180
      %v2281 = vunpack.c.l.b16 %v2181
      %v2282 = vunpack.c.l.b16 %v2182
      %v2283 = vpack.c.b16 %v2236, %v2235
      %v2284 = vpack.c.b16 %v2238, %v2237
      %v2285 = vpack.c.b16 %v2240, %v2239
      %v2286 = vpack.c.b16 %v2242, %v2241
      %v2287 = vpack.c.b16 %v2244, %v2243
      %v2288 = vpack.c.b16 %v2246, %v2245
      %v2289 = vpack.c.b16 %v2248, %v2247
      %v2290 = vpack.c.b16 %v2250, %v2249
      %v2291 = vpack.c.b16 %v2252, %v2251
      %v2292 = vpack.c.b16 %v2254, %v2253
      %v2293 = vpack.c.b16 %v2256, %v2255
      %v2294 = vpack.c.b16 %v2258, %v2257
      %v2295 = vpack.c.b16 %v2260, %v2259
      %v2296 = vpack.c.b16 %v2262, %v2261
      %v2297 = vpack.c.b16 %v2264, %v2263
      %v2298 = vpack.c.b16 %v2266, %v2265
      %v2299 = vpack.c.b16 %v2268, %v2267
      %v2300 = vpack.c.b16 %v2270, %v2269
      %v2301 = vpack.c.b16 %v2272, %v2271
      %v2302 = vpack.c.b16 %v2274, %v2273
      %v2303 = vpack.c.b16 %v2276, %v2275
      %v2304 = vpack.c.b16 %v2278, %v2277
      %v2305 = vpack.c.b16 %v2280, %v2279
      %v2306 = vpack.c.b16 %v2282, %v2281
      %v2310 = vunpack.c.l.b16 %v2184
      %v2311 = vunpack.c.l.b16 %v2185
      %v2312 = vunpack.c.l.b16 %v2186
      %v2313 = vpack.c.b16 %v2311, %v2310
      %v2314 = vpack.c.b16 %v2312, %v2312
      %v2317 = vsel %vm1785, %v2283, 0
      %v2320 = vsel %vm1785, %v2284, 0
      %v2323 = vsel %vm1785, %v2285, 0
      %v2326 = vsel %vm1785, %v2286, 0
      %v2329 = vsel %vm1785, %v2287, 0
      %v2332 = vsel %vm1785, %v2288, 0
      %v2335 = vsel %vm1785, %v2289, 0
      %v2338 = vsel %vm1785, %v2290, 0
      %v2341 = vsel %vm1785, %v2291, 0
      %v2344 = vsel %vm1785, %v2292, 0
      %v2347 = vsel %vm1785, %v2293, 0
      %v2350 = vsel %vm1785, %v2294, 0
      %v2353 = vsel %vm1785, %v2295, 0
      %v2356 = vsel %vm1785, %v2296, 0
      %v2359 = vsel %vm1785, %v2297, 0
      %v2362 = vsel %vm1785, %v2298, 0
      %v2365 = vsel %vm1785, %v2299, 0
      %v2368 = vsel %vm1785, %v2300, 0
      %v2371 = vsel %vm1785, %v2301, 0
      %v2374 = vsel %vm1785, %v2302, 0
      %v2377 = vsel %vm1785, %v2303, 0
      %v2380 = vsel %vm1785, %v2304, 0
      %v2383 = vsel %vm1785, %v2305, 0
      %v2386 = vsel %vm1785, %v2306, 0
      %v2389 = vsel %vm1858, %v2314, 0
      %2391 = vmatprep.subr.bf16.mxu0 0
      %2392 = vmatpush1.bf16.msra.mxu0 %v2313
      %2393 = vmatprep.subr.bf16.mxu0 0
      %2394 = vmatpush1.bf16.msra.mxu0 %v2389
      %2395 = vmatprep.subr.bf16.mxu0 0
      %2396 = vmatpush1.bf16.msra.mxu0 0
      %2397 = vmatprep.subr.bf16.mxu0 0
      %2398 = vmatpush1.bf16.msra.mxu0 0
      %2399 = vmatprep.subr.bf16.mxu0 0
      %2400 = vmatpush1.bf16.msra.mxu0 0
      %2401 = vmatprep.subr.bf16.mxu0 0
      %2402 = vmatpush1.bf16.msra.mxu0 0
      %2403 = vmatprep.subr.bf16.mxu0 0
      %2404 = vmatpush1.bf16.msra.mxu0 0
      %2405 = vmatprep.subr.bf16.mxu0 0
      %2406 = vmatpush1.bf16.msra.mxu0 0
      %2407 = vmatprep.subr.bf16.mxu0 0
      %2408 = vmatpush1.bf16.msra.mxu0 0
      %2409 = vmatprep.subr.bf16.mxu0 0
      %2410 = vmatpush1.bf16.msra.mxu0 0
      %2411 = vmatprep.subr.bf16.mxu0 0
      %2412 = vmatpush1.bf16.msra.mxu0 0
      %2413 = vmatprep.subr.bf16.mxu0 0
      %2414 = vmatpush1.bf16.msra.mxu0 0
      %2415 = vmatprep.subr.bf16.mxu0 0
      %2416 = vmatpush1.bf16.msra.mxu0 0
      %2417 = vmatprep.subr.bf16.mxu0 0
      %2418 = vmatpush1.bf16.msra.mxu0 0
      %2419 = vmatprep.subr.bf16.mxu0 0
      %2420 = vmatpush1.bf16.msra.mxu0 0
      %2421 = vmatprep.subr.bf16.mxu0 0
      %2422 = vmatpush1.bf16.msra.mxu0 0
      %2423 = vmatprep.mubr.bf16.mxu0 0
      %2424 = vmatmul.mubr.bf16.gmra.mrb[0].mxu0 %v2317
      %v2425 = vpop.f32.mrb[0].mxu0
      %v2426 = vadd.f32 0.0, %v2425
      %v2427 = vpop.f32.mrb[0].mxu0
      %v2428 = vpop.f32.mrb[0].mxu0
      %v2429 = vadd.f32 0.0, %v2428
      %v2430 = vpop.f32.mrb[0].mxu0
      %2431 = vmatprep.mubr.bf16.mxu0 0
      %2432 = vmatmul.mubr.bf16.gmra.mrb[0].mxu0 %v2320
      %v2433 = vpop.f32.mrb[0].mxu0
      %v2434 = vadd.f32 0.0, %v2433
      %v2435 = vpop.f32.mrb[0].mxu0
      %v2436 = vpop.f32.mrb[0].mxu0
      %v2437 = vadd.f32 0.0, %v2436
      %v2438 = vpop.f32.mrb[0].mxu0
      %2439 = vmatprep.mubr.bf16.mxu0 0
      %2440 = vmatmul.mubr.bf16.gmra.mrb[0].mxu0 %v2323
      %v2441 = vpop.f32.mrb[0].mxu0
      %v2442 = vadd.f32 0.0, %v2441
      %v2443 = vpop.f32.mrb[0].mxu0
      %v2444 = vpop.f32.mrb[0].mxu0
      %v2445 = vadd.f32 0.0, %v2444
      %v2446 = vpop.f32.mrb[0].mxu0
      %2447 = vmatprep.mubr.bf16.mxu0 0
      %2448 = vmatmul.mubr.bf16.gmra.mrb[0].mxu0 %v2326
      %v2449 = vpop.f32.mrb[0].mxu0
      %v2450 = vadd.f32 0.0, %v2449
      %v2451 = vpop.f32.mrb[0].mxu0
      %v2452 = vpop.f32.mrb[0].mxu0
      %v2453 = vadd.f32 0.0, %v2452
      %v2454 = vpop.f32.mrb[0].mxu0
      %2455 = vmatprep.mubr.bf16.mxu0 0
      %2456 = vmatmul.mubr.bf16.gmra.mrb[0].mxu0 %v2329
      %v2457 = vpop.f32.mrb[0].mxu0
      %v2458 = vadd.f32 0.0, %v2457
      %v2459 = vpop.f32.mrb[0].mxu0
      %v2460 = vpop.f32.mrb[0].mxu0
      %v2461 = vadd.f32 0.0, %v2460
      %v2462 = vpop.f32.mrb[0].mxu0
      %2463 = vmatprep.mubr.bf16.mxu0 0
      %2464 = vmatmul.mubr.bf16.gmra.mrb[0].mxu0 %v2332
      %v2465 = vpop.f32.mrb[0].mxu0
      %v2466 = vadd.f32 0.0, %v2465
      %v2467 = vpop.f32.mrb[0].mxu0
      %v2468 = vpop.f32.mrb[0].mxu0
      %v2469 = vadd.f32 0.0, %v2468
      %v2470 = vpop.f32.mrb[0].mxu0
      %2471 = vmatprep.mubr.bf16.mxu0 0
      %2472 = vmatmul.mubr.bf16.gmra.mrb[0].mxu0 %v2335
      %v2473 = vpop.f32.mrb[0].mxu0
      %v2474 = vadd.f32 0.0, %v2473
      %v2475 = vpop.f32.mrb[0].mxu0
      %v2476 = vpop.f32.mrb[0].mxu0
      %v2477 = vadd.f32 0.0, %v2476
      %v2478 = vpop.f32.mrb[0].mxu0
      %2479 = vmatprep.mubr.bf16.mxu0 0
      %2480 = vmatmul.mubr.bf16.gmra.mrb[0].mxu0 %v2338
      %v2481 = vpop.f32.mrb[0].mxu0
      %v2482 = vadd.f32 0.0, %v2481
      %v2483 = vpop.f32.mrb[0].mxu0
      %v2484 = vpop.f32.mrb[0].mxu0
      %v2485 = vadd.f32 0.0, %v2484
      %v2486 = vpop.f32.mrb[0].mxu0
      %2487 = vmatprep.mubr.bf16.mxu0 0
      %2488 = vmatmul.mubr.bf16.gmra.mrb[0].mxu0 %v2341
      %v2489 = vpop.f32.mrb[0].mxu0
      %v2490 = vadd.f32 0.0, %v2489
      %v2491 = vpop.f32.mrb[0].mxu0
      %v2492 = vpop.f32.mrb[0].mxu0
      %v2493 = vadd.f32 0.0, %v2492
      %v2494 = vpop.f32.mrb[0].mxu0
      %2495 = vmatprep.mubr.bf16.mxu0 0
      %2496 = vmatmul.mubr.bf16.gmra.mrb[0].mxu0 %v2344
      %v2497 = vpop.f32.mrb[0].mxu0
      %v2498 = vadd.f32 0.0, %v2497
      %v2499 = vpop.f32.mrb[0].mxu0
      %v2500 = vpop.f32.mrb[0].mxu0
      %v2501 = vadd.f32 0.0, %v2500
      %v2502 = vpop.f32.mrb[0].mxu0
      %2503 = vmatprep.mubr.bf16.mxu0 0
      %2504 = vmatmul.mubr.bf16.gmra.mrb[0].mxu0 %v2347
      %v2505 = vpop.f32.mrb[0].mxu0
      %v2506 = vadd.f32 0.0, %v2505
      %v2507 = vpop.f32.mrb[0].mxu0
      %v2508 = vpop.f32.mrb[0].mxu0
      %v2509 = vadd.f32 0.0, %v2508
      %v2510 = vpop.f32.mrb[0].mxu0
      %2511 = vmatprep.mubr.bf16.mxu0 0
      %2512 = vmatmul.mubr.bf16.gmra.mrb[0].mxu0 %v2350
      %v2513 = vpop.f32.mrb[0].mxu0
      %v2514 = vadd.f32 0.0, %v2513
      %v2515 = vpop.f32.mrb[0].mxu0
      %v2516 = vpop.f32.mrb[0].mxu0
      %v2517 = vadd.f32 0.0, %v2516
      %v2518 = vpop.f32.mrb[0].mxu0
      %2519 = vmatprep.mubr.bf16.mxu0 0
      %2520 = vmatmul.mubr.bf16.gmra.mrb[0].mxu0 %v2353
      %v2521 = vpop.f32.mrb[0].mxu0
      %v2522 = vadd.f32 0.0, %v2521
      %v2523 = vpop.f32.mrb[0].mxu0
      %v2524 = vpop.f32.mrb[0].mxu0
      %v2525 = vadd.f32 0.0, %v2524
      %v2526 = vpop.f32.mrb[0].mxu0
      %2527 = vmatprep.mubr.bf16.mxu0 0
      %2528 = vmatmul.mubr.bf16.gmra.mrb[0].mxu0 %v2356
      %v2529 = vpop.f32.mrb[0].mxu0
      %v2530 = vadd.f32 0.0, %v2529
      %v2531 = vpop.f32.mrb[0].mxu0
      %v2532 = vpop.f32.mrb[0].mxu0
      %v2533 = vadd.f32 0.0, %v2532
      %v2534 = vpop.f32.mrb[0].mxu0
      %2535 = vmatprep.mubr.bf16.mxu0 0
      %2536 = vmatmul.mubr.bf16.gmra.mrb[0].mxu0 %v2359
      %v2537 = vpop.f32.mrb[0].mxu0
      %v2538 = vadd.f32 0.0, %v2537
      %v2539 = vpop.f32.mrb[0].mxu0
      %v2540 = vpop.f32.mrb[0].mxu0
      %v2541 = vadd.f32 0.0, %v2540
      %v2542 = vpop.f32.mrb[0].mxu0
      %2543 = vmatprep.mubr.bf16.mxu0 0
      %2544 = vmatmul.mubr.bf16.gmra.mrb[0].mxu0 %v2362
      %v2545 = vpop.f32.mrb[0].mxu0
      %v2546 = vadd.f32 0.0, %v2545
      %v2547 = vpop.f32.mrb[0].mxu0
      %v2548 = vpop.f32.mrb[0].mxu0
      %v2549 = vadd.f32 0.0, %v2548
      %v2550 = vpop.f32.mrb[0].mxu0
      %2551 = vmatprep.mubr.bf16.mxu0 0
      %2552 = vmatmul.mubr.bf16.gmra.mrb[0].mxu0 %v2365
      %v2553 = vpop.f32.mrb[0].mxu0
      %v2554 = vadd.f32 0.0, %v2553
      %v2555 = vpop.f32.mrb[0].mxu0
      %v2556 = vpop.f32.mrb[0].mxu0
      %v2557 = vadd.f32 0.0, %v2556
      %v2558 = vpop.f32.mrb[0].mxu0
      %2559 = vmatprep.mubr.bf16.mxu0 0
      %2560 = vmatmul.mubr.bf16.gmra.mrb[0].mxu0 %v2368
      %v2561 = vpop.f32.mrb[0].mxu0
      %v2562 = vadd.f32 0.0, %v2561
      %v2563 = vpop.f32.mrb[0].mxu0
      %v2564 = vpop.f32.mrb[0].mxu0
      %v2565 = vadd.f32 0.0, %v2564
      %v2566 = vpop.f32.mrb[0].mxu0
      %2567 = vmatprep.mubr.bf16.mxu0 0
      %2568 = vmatmul.mubr.bf16.gmra.mrb[0].mxu0 %v2371
      %v2569 = vpop.f32.mrb[0].mxu0
      %v2570 = vadd.f32 0.0, %v2569
      %v2571 = vpop.f32.mrb[0].mxu0
      %v2572 = vpop.f32.mrb[0].mxu0
      %v2573 = vadd.f32 0.0, %v2572
      %v2574 = vpop.f32.mrb[0].mxu0
      %2575 = vmatprep.mubr.bf16.mxu0 0
      %2576 = vmatmul.mubr.bf16.gmra.mrb[0].mxu0 %v2374
      %v2577 = vpop.f32.mrb[0].mxu0
      %v2578 = vadd.f32 0.0, %v2577
      %v2579 = vpop.f32.mrb[0].mxu0
      %v2580 = vpop.f32.mrb[0].mxu0
      %v2581 = vadd.f32 0.0, %v2580
      %v2582 = vpop.f32.mrb[0].mxu0
      %2583 = vmatprep.mubr.bf16.mxu0 0
      %2584 = vmatmul.mubr.bf16.gmra.mrb[0].mxu0 %v2377
      %v2585 = vpop.f32.mrb[0].mxu0
      %v2586 = vadd.f32 0.0, %v2585
      %v2587 = vpop.f32.mrb[0].mxu0
      %v2588 = vpop.f32.mrb[0].mxu0
      %v2589 = vadd.f32 0.0, %v2588
      %v2590 = vpop.f32.mrb[0].mxu0
      %2591 = vmatprep.mubr.bf16.mxu0 0
      %2592 = vmatmul.mubr.bf16.gmra.mrb[0].mxu0 %v2380
      %v2593 = vpop.f32.mrb[0].mxu0
      %v2594 = vadd.f32 0.0, %v2593
      %v2595 = vpop.f32.mrb[0].mxu0
      %v2596 = vpop.f32.mrb[0].mxu0
      %v2597 = vadd.f32 0.0, %v2596
      %v2598 = vpop.f32.mrb[0].mxu0
      %2599 = vmatprep.mubr.bf16.mxu0 0
      %2600 = vmatmul.mubr.bf16.gmra.mrb[0].mxu0 %v2383
      %v2601 = vpop.f32.mrb[0].mxu0
      %v2602 = vadd.f32 0.0, %v2601
      %v2603 = vpop.f32.mrb[0].mxu0
      %v2604 = vpop.f32.mrb[0].mxu0
      %v2605 = vadd.f32 0.0, %v2604
      %v2606 = vpop.f32.mrb[0].mxu0
      %2607 = vmatprep.mubr.bf16.mxu0 0
      %2608 = vmatmul.mubr.bf16.gmra.mrb[0].mxu0 %v2386
      %v2609 = vpop.f32.mrb[0].mxu0
      %v2610 = vadd.f32 0.0, %v2609
      %v2611 = vpop.f32.mrb[0].mxu0
      %v2612 = vpop.f32.mrb[0].mxu0
      %v2613 = vadd.f32 0.0, %v2612
      %v2614 = vpop.f32.mrb[0].mxu0
      %2615 = vdwg.mxu0
      %v2616 = vadd.f32 %v2087, %v2426
      %v2617 = vadd.f32 %v2088, %v2429
      %v2618 = vadd.f32 %v2089, %v2434
      %v2619 = vadd.f32 %v2090, %v2437
      %v2620 = vadd.f32 %v2091, %v2442
      %v2621 = vadd.f32 %v2092, %v2445
      %v2622 = vadd.f32 %v2093, %v2450
      %v2623 = vadd.f32 %v2094, %v2453
      %v2624 = vadd.f32 %v2095, %v2458
      %v2625 = vadd.f32 %v2096, %v2461
      %v2626 = vadd.f32 %v2097, %v2466
      %v2627 = vadd.f32 %v2098, %v2469
      %v2628 = vadd.f32 %v2099, %v2474
      %v2629 = vadd.f32 %v2100, %v2477
      %v2630 = vadd.f32 %v2101, %v2482
      %v2631 = vadd.f32 %v2102, %v2485
      %v2632 = vadd.f32 %v2103, %v2490
      %v2633 = vadd.f32 %v2104, %v2493
      %v2634 = vadd.f32 %v2105, %v2498
      %v2635 = vadd.f32 %v2106, %v2501
      %v2636 = vadd.f32 %v2107, %v2506
      %v2637 = vadd.f32 %v2108, %v2509
      %v2638 = vadd.f32 %v2109, %v2514
      %v2639 = vadd.f32 %v2110, %v2517
      %v2640 = vadd.f32 %v2111, %v2522
      %v2641 = vadd.f32 %v2112, %v2525
      %v2642 = vadd.f32 %v2113, %v2530
      %v2643 = vadd.f32 %v2114, %v2533
      %v2644 = vadd.f32 %v2115, %v2538
      %v2645 = vadd.f32 %v2116, %v2541
      %v2646 = vadd.f32 %v2117, %v2546
      %v2647 = vadd.f32 %v2118, %v2549
      %v2648 = vadd.f32 %v2119, %v2554
      %v2649 = vadd.f32 %v2120, %v2557
      %v2650 = vadd.f32 %v2121, %v2562
      %v2651 = vadd.f32 %v2122, %v2565
      %v2652 = vadd.f32 %v2123, %v2570
      %v2653 = vadd.f32 %v2124, %v2573
      %v2654 = vadd.f32 %v2125, %v2578
      %v2655 = vadd.f32 %v2126, %v2581
      %v2656 = vadd.f32 %v2127, %v2586
      %v2657 = vadd.f32 %v2128, %v2589
      %v2658 = vadd.f32 %v2129, %v2594
      %v2659 = vadd.f32 %v2130, %v2597
      %v2660 = vadd.f32 %v2131, %v2602
      %v2661 = vadd.f32 %v2132, %v2605
      %v2662 = vadd.f32 %v2133, %v2610
      %v2663 = vadd.f32 %v2134, %v2613
      %v2664 = vld [vmem:[%s285 + $0x30] sm:$0xf]
      %v2665 = vld [vmem:[%s285 + $0x34] sm:$0xf]
      %v2666 = vld [vmem:[%s285 + $0x38] sm:$0xf]
      %v2667 = vld [vmem:[%s285 + $0x3c] sm:$0xf]
      %v2668 = vld [vmem:[%s285 + $0x40] sm:$0xf]
      %v2669 = vld [vmem:[%s285 + $0x44] sm:$0xf]
      %v2670 = vld [vmem:[%s285 + $0x48] sm:$0xf]
      %v2671 = vld [vmem:[%s285 + $0x4c] sm:$0xf]
      %v2672 = vld [vmem:[%s285 + $0x50] sm:$0xf]
      %v2673 = vld [vmem:[%s285 + $0x54] sm:$0xf]
      %v2674 = vld [vmem:[%s285 + $0x58] sm:$0xf]
      %v2675 = vld [vmem:[%s285 + $0x5c] sm:$0xf]
      %v2676 = vld [vmem:[%s285 + $0x60] sm:$0xf]
      %v2677 = vld [vmem:[%s285 + $0x64] sm:$0xf]
      %v2678 = vld [vmem:[%s285 + $0x68] sm:$0xf]
      %v2679 = vld [vmem:[%s285 + $0x6c] sm:$0xf]
      %v2680 = vld [vmem:[%s285 + $0x70] sm:$0xf]
      %v2681 = vld [vmem:[%s285 + $0x74] sm:$0xf]
      %v2682 = vld [vmem:[%s285 + $0x78] sm:$0xf]
      %v2683 = vld [vmem:[%s285 + $0x7c] sm:$0xf]
      %v2684 = vld [vmem:[%s285 + $0x80] sm:$0xf]
      %v2685 = vld [vmem:[%s285 + $0x84] sm:$0xf]
      %v2686 = vld [vmem:[%s285 + $0x88] sm:$0xf]
      %v2687 = vld [vmem:[%s285 + $0x8c] sm:$0xf]
      %v2688 = vld [vmem:[%s285 + $0x90] sm:$0xf]
      %v2689 = vld [vmem:[%s285 + $0x94] sm:$0xf]
      %v2690 = vld [vmem:[%s285 + $0x98] sm:$0xf]
      %v2691 = vld [vmem:[%s285 + $0x9c] sm:$0xf]
      %v2692 = vld [vmem:[%s285 + $0xa0] sm:$0xf]
      %v2693 = vld [vmem:[%s285 + $0xa4] sm:$0xf]
      %v2694 = vld [vmem:[%s285 + $0xa8] sm:$0xf]
      %v2695 = vld [vmem:[%s285 + $0xac] sm:$0xf]
      %v2696 = vld [vmem:[%s285 + $0xb0] sm:$0xf]
      %v2697 = vld [vmem:[%s285 + $0xb4] sm:$0xf]
      %v2698 = vld [vmem:[%s285 + $0xb8] sm:$0xf]
      %v2699 = vld [vmem:[%s285 + $0xbc] sm:$0xf]
      %v2700 = vld [vmem:[%s285 + $0xc0] sm:$0xf]
      %v2701 = vld [vmem:[%s285 + $0xc4] sm:$0xf]
      %v2702 = vld [vmem:[%s285 + $0xc8] sm:$0xf]
      %v2703 = vld [vmem:[%s285 + $0xcc] sm:$0xf]
      %v2704 = vld [vmem:[%s285 + $0xd0] sm:$0xf]
      %v2705 = vld [vmem:[%s285 + $0xd4] sm:$0xf]
      %v2706 = vld [vmem:[%s285 + $0xd8] sm:$0xf]
      %v2707 = vld [vmem:[%s285 + $0xdc] sm:$0xf]
      %v2708 = vld [vmem:[%s285 + $0xe0] sm:$0xf]
      %v2709 = vld [vmem:[%s285 + $0xe4] sm:$0xf]
      %v2710 = vld [vmem:[%s285 + $0xe8] sm:$0xf]
      %v2711 = vld [vmem:[%s285 + $0xec] sm:$0xf]
      %s2712 = scalar_lea.vmem %s3, 24
      %v2713 = vld [vmem:[%s2712] sm:$0xf]
      %v2714 = vld [vmem:[%s2712 + $0x4] sm:$0xf]
      %v2715 = vld [vmem:[%s2712 + $0x8] sm:$0xf]
      %v2764 = vunpack.c.l.b16 %v2664
      %v2765 = vunpack.c.l.b16 %v2665
      %v2766 = vunpack.c.l.b16 %v2666
      %v2767 = vunpack.c.l.b16 %v2667
      %v2768 = vunpack.c.l.b16 %v2668
      %v2769 = vunpack.c.l.b16 %v2669
      %v2770 = vunpack.c.l.b16 %v2670
      %v2771 = vunpack.c.l.b16 %v2671
      %v2772 = vunpack.c.l.b16 %v2672
      %v2773 = vunpack.c.l.b16 %v2673
      %v2774 = vunpack.c.l.b16 %v2674
      %v2775 = vunpack.c.l.b16 %v2675
      %v2776 = vunpack.c.l.b16 %v2676
      %v2777 = vunpack.c.l.b16 %v2677
      %v2778 = vunpack.c.l.b16 %v2678
      %v2779 = vunpack.c.l.b16 %v2679
      %v2780 = vunpack.c.l.b16 %v2680
      %v2781 = vunpack.c.l.b16 %v2681
      %v2782 = vunpack.c.l.b16 %v2682
      %v2783 = vunpack.c.l.b16 %v2683
      %v2784 = vunpack.c.l.b16 %v2684
      %v2785 = vunpack.c.l.b16 %v2685
      %v2786 = vunpack.c.l.b16 %v2686
      %v2787 = vunpack.c.l.b16 %v2687
      %v2788 = vunpack.c.l.b16 %v2688
      %v2789 = vunpack.c.l.b16 %v2689
      %v2790 = vunpack.c.l.b16 %v2690
      %v2791 = vunpack.c.l.b16 %v2691
      %v2792 = vunpack.c.l.b16 %v2692
      %v2793 = vunpack.c.l.b16 %v2693
      %v2794 = vunpack.c.l.b16 %v2694
      %v2795 = vunpack.c.l.b16 %v2695
      %v2796 = vunpack.c.l.b16 %v2696
      %v2797 = vunpack.c.l.b16 %v2697
      %v2798 = vunpack.c.l.b16 %v2698
      %v2799 = vunpack.c.l.b16 %v2699
      %v2800 = vunpack.c.l.b16 %v2700
      %v2801 = vunpack.c.l.b16 %v2701
      %v2802 = vunpack.c.l.b16 %v2702
      %v2803 = vunpack.c.l.b16 %v2703
      %v2804 = vunpack.c.l.b16 %v2704
      %v2805 = vunpack.c.l.b16 %v2705
      %v2806 = vunpack.c.l.b16 %v2706
      %v2807 = vunpack.c.l.b16 %v2707
      %v2808 = vunpack.c.l.b16 %v2708
      %v2809 = vunpack.c.l.b16 %v2709
      %v2810 = vunpack.c.l.b16 %v2710
      %v2811 = vunpack.c.l.b16 %v2711
      %v2812 = vpack.c.b16 %v2765, %v2764
      %v2813 = vpack.c.b16 %v2767, %v2766
      %v2814 = vpack.c.b16 %v2769, %v2768
      %v2815 = vpack.c.b16 %v2771, %v2770
      %v2816 = vpack.c.b16 %v2773, %v2772
      %v2817 = vpack.c.b16 %v2775, %v2774
      %v2818 = vpack.c.b16 %v2777, %v2776
      %v2819 = vpack.c.b16 %v2779, %v2778
      %v2820 = vpack.c.b16 %v2781, %v2780
      %v2821 = vpack.c.b16 %v2783, %v2782
      %v2822 = vpack.c.b16 %v2785, %v2784
      %v2823 = vpack.c.b16 %v2787, %v2786
      %v2824 = vpack.c.b16 %v2789, %v2788
      %v2825 = vpack.c.b16 %v2791, %v2790
      %v2826 = vpack.c.b16 %v2793, %v2792
      %v2827 = vpack.c.b16 %v2795, %v2794
      %v2828 = vpack.c.b16 %v2797, %v2796
      %v2829 = vpack.c.b16 %v2799, %v2798
      %v2830 = vpack.c.b16 %v2801, %v2800
      %v2831 = vpack.c.b16 %v2803, %v2802
      %v2832 = vpack.c.b16 %v2805, %v2804
      %v2833 = vpack.c.b16 %v2807, %v2806
      %v2834 = vpack.c.b16 %v2809, %v2808
      %v2835 = vpack.c.b16 %v2811, %v2810
      %v2839 = vunpack.c.l.b16 %v2713
      %v2840 = vunpack.c.l.b16 %v2714
      %v2841 = vunpack.c.l.b16 %v2715
      %v2842 = vpack.c.b16 %v2840, %v2839
      %v2843 = vpack.c.b16 %v2841, %v2841
      %v2846 = vsel %vm1785, %v2812, 0
      %v2849 = vsel %vm1785, %v2813, 0
      %v2852 = vsel %vm1785, %v2814, 0
      %v2855 = vsel %vm1785, %v2815, 0
      %v2858 = vsel %vm1785, %v2816, 0
      %v2861 = vsel %vm1785, %v2817, 0
      %v2864 = vsel %vm1785, %v2818, 0
      %v2867 = vsel %vm1785, %v2819, 0
      %v2870 = vsel %vm1785, %v2820, 0
      %v2873 = vsel %vm1785, %v2821, 0
      %v2876 = vsel %vm1785, %v2822, 0
      %v2879 = vsel %vm1785, %v2823, 0
      %v2882 = vsel %vm1785, %v2824, 0
      %v2885 = vsel %vm1785, %v2825, 0
      %v2888 = vsel %vm1785, %v2826, 0
      %v2891 = vsel %vm1785, %v2827, 0
      %v2894 = vsel %vm1785, %v2828, 0
      %v2897 = vsel %vm1785, %v2829, 0
      %v2900 = vsel %vm1785, %v2830, 0
      %v2903 = vsel %vm1785, %v2831, 0
      %v2906 = vsel %vm1785, %v2832, 0
      %v2909 = vsel %vm1785, %v2833, 0
      %v2912 = vsel %vm1785, %v2834, 0
      %v2915 = vsel %vm1785, %v2835, 0
      %v2918 = vsel %vm1858, %v2843, 0
      %2920 = vmatprep.subr.bf16.mxu0 0
      %2921 = vmatpush1.bf16.msra.mxu0 %v2842
      %2922 = vmatprep.subr.bf16.mxu0 0
      %2923 = vmatpush1.bf16.msra.mxu0 %v2918
      %2924 = vmatprep.subr.bf16.mxu0 0
      %2925 = vmatpush1.bf16.msra.mxu0 0
      %2926 = vmatprep.subr.bf16.mxu0 0
      %2927 = vmatpush1.bf16.msra.mxu0 0
      %2928 = vmatprep.subr.bf16.mxu0 0
      %2929 = vmatpush1.bf16.msra.mxu0 0
      %2930 = vmatprep.subr.bf16.mxu0 0
      %2931 = vmatpush1.bf16.msra.mxu0 0
      %2932 = vmatprep.subr.bf16.mxu0 0
      %2933 = vmatpush1.bf16.msra.mxu0 0
      %2934 = vmatprep.subr.bf16.mxu0 0
      %2935 = vmatpush1.bf16.msra.mxu0 0
      %2936 = vmatprep.subr.bf16.mxu0 0
      %2937 = vmatpush1.bf16.msra.mxu0 0
      %2938 = vmatprep.subr.bf16.mxu0 0
      %2939 = vmatpush1.bf16.msra.mxu0 0
      %2940 = vmatprep.subr.bf16.mxu0 0
      %2941 = vmatpush1.bf16.msra.mxu0 0
      %2942 = vmatprep.subr.bf16.mxu0 0
      %2943 = vmatpush1.bf16.msra.mxu0 0
      %2944 = vmatprep.subr.bf16.mxu0 0
      %2945 = vmatpush1.bf16.msra.mxu0 0
      %2946 = vmatprep.subr.bf16.mxu0 0
      %2947 = vmatpush1.bf16.msra.mxu0 0
      %2948 = vmatprep.subr.bf16.mxu0 0
      %2949 = vmatpush1.bf16.msra.mxu0 0
      %2950 = vmatprep.subr.bf16.mxu0 0
      %2951 = vmatpush1.bf16.msra.mxu0 0
      %2952 = vmatprep.mubr.bf16.mxu0 0
      %2953 = vmatmul.mubr.bf16.gmra.mrb[0].mxu0 %v2846
      %v2954 = vpop.f32.mrb[0].mxu0
      %v2955 = vadd.f32 0.0, %v2954
      %v2956 = vpop.f32.mrb[0].mxu0
      %v2957 = vpop.f32.mrb[0].mxu0
      %v2958 = vadd.f32 0.0, %v2957
      %v2959 = vpop.f32.mrb[0].mxu0
      %2960 = vmatprep.mubr.bf16.mxu0 0
      %2961 = vmatmul.mubr.bf16.gmra.mrb[0].mxu0 %v2849
      %v2962 = vpop.f32.mrb[0].mxu0
      %v2963 = vadd.f32 0.0, %v2962
      %v2964 = vpop.f32.mrb[0].mxu0
      %v2965 = vpop.f32.mrb[0].mxu0
      %v2966 = vadd.f32 0.0, %v2965
      %v2967 = vpop.f32.mrb[0].mxu0
      %2968 = vmatprep.mubr.bf16.mxu0 0
      %2969 = vmatmul.mubr.bf16.gmra.mrb[0].mxu0 %v2852
      %v2970 = vpop.f32.mrb[0].mxu0
      %v2971 = vadd.f32 0.0, %v2970
      %v2972 = vpop.f32.mrb[0].mxu0
      %v2973 = vpop.f32.mrb[0].mxu0
      %v2974 = vadd.f32 0.0, %v2973
      %v2975 = vpop.f32.mrb[0].mxu0
      %2976 = vmatprep.mubr.bf16.mxu0 0
      %2977 = vmatmul.mubr.bf16.gmra.mrb[0].mxu0 %v2855
      %v2978 = vpop.f32.mrb[0].mxu0
      %v2979 = vadd.f32 0.0, %v2978
      %v2980 = vpop.f32.mrb[0].mxu0
      %v2981 = vpop.f32.mrb[0].mxu0
      %v2982 = vadd.f32 0.0, %v2981
      %v2983 = vpop.f32.mrb[0].mxu0
      %2984 = vmatprep.mubr.bf16.mxu0 0
      %2985 = vmatmul.mubr.bf16.gmra.mrb[0].mxu0 %v2858
      %v2986 = vpop.f32.mrb[0].mxu0
      %v2987 = vadd.f32 0.0, %v2986
      %v2988 = vpop.f32.mrb[0].mxu0
      %v2989 = vpop.f32.mrb[0].mxu0
      %v2990 = vadd.f32 0.0, %v2989
      %v2991 = vpop.f32.mrb[0].mxu0
      %2992 = vmatprep.mubr.bf16.mxu0 0
      %2993 = vmatmul.mubr.bf16.gmra.mrb[0].mxu0 %v2861
      %v2994 = vpop.f32.mrb[0].mxu0
      %v2995 = vadd.f32 0.0, %v2994
      %v2996 = vpop.f32.mrb[0].mxu0
      %v2997 = vpop.f32.mrb[0].mxu0
      %v2998 = vadd.f32 0.0, %v2997
      %v2999 = vpop.f32.mrb[0].mxu0
      %3000 = vmatprep.mubr.bf16.mxu0 0
      %3001 = vmatmul.mubr.bf16.gmra.mrb[0].mxu0 %v2864
      %v3002 = vpop.f32.mrb[0].mxu0
      %v3003 = vadd.f32 0.0, %v3002
      %v3004 = vpop.f32.mrb[0].mxu0
      %v3005 = vpop.f32.mrb[0].mxu0
      %v3006 = vadd.f32 0.0, %v3005
      %v3007 = vpop.f32.mrb[0].mxu0
      %3008 = vmatprep.mubr.bf16.mxu0 0
      %3009 = vmatmul.mubr.bf16.gmra.mrb[0].mxu0 %v2867
      %v3010 = vpop.f32.mrb[0].mxu0
      %v3011 = vadd.f32 0.0, %v3010
      %v3012 = vpop.f32.mrb[0].mxu0
      %v3013 = vpop.f32.mrb[0].mxu0
      %v3014 = vadd.f32 0.0, %v3013
      %v3015 = vpop.f32.mrb[0].mxu0
      %3016 = vmatprep.mubr.bf16.mxu0 0
      %3017 = vmatmul.mubr.bf16.gmra.mrb[0].mxu0 %v2870
      %v3018 = vpop.f32.mrb[0].mxu0
      %v3019 = vadd.f32 0.0, %v3018
      %v3020 = vpop.f32.mrb[0].mxu0
      %v3021 = vpop.f32.mrb[0].mxu0
      %v3022 = vadd.f32 0.0, %v3021
      %v3023 = vpop.f32.mrb[0].mxu0
      %3024 = vmatprep.mubr.bf16.mxu0 0
      %3025 = vmatmul.mubr.bf16.gmra.mrb[0].mxu0 %v2873
      %v3026 = vpop.f32.mrb[0].mxu0
      %v3027 = vadd.f32 0.0, %v3026
      %v3028 = vpop.f32.mrb[0].mxu0
      %v3029 = vpop.f32.mrb[0].mxu0
      %v3030 = vadd.f32 0.0, %v3029
      %v3031 = vpop.f32.mrb[0].mxu0
      %3032 = vmatprep.mubr.bf16.mxu0 0
      %3033 = vmatmul.mubr.bf16.gmra.mrb[0].mxu0 %v2876
      %v3034 = vpop.f32.mrb[0].mxu0
      %v3035 = vadd.f32 0.0, %v3034
      %v3036 = vpop.f32.mrb[0].mxu0
      %v3037 = vpop.f32.mrb[0].mxu0
      %v3038 = vadd.f32 0.0, %v3037
      %v3039 = vpop.f32.mrb[0].mxu0
      %3040 = vmatprep.mubr.bf16.mxu0 0
      %3041 = vmatmul.mubr.bf16.gmra.mrb[0].mxu0 %v2879
      %v3042 = vpop.f32.mrb[0].mxu0
      %v3043 = vadd.f32 0.0, %v3042
      %v3044 = vpop.f32.mrb[0].mxu0
      %v3045 = vpop.f32.mrb[0].mxu0
      %v3046 = vadd.f32 0.0, %v3045
      %v3047 = vpop.f32.mrb[0].mxu0
      %3048 = vmatprep.mubr.bf16.mxu0 0
      %3049 = vmatmul.mubr.bf16.gmra.mrb[0].mxu0 %v2882
      %v3050 = vpop.f32.mrb[0].mxu0
      %v3051 = vadd.f32 0.0, %v3050
      %v3052 = vpop.f32.mrb[0].mxu0
      %v3053 = vpop.f32.mrb[0].mxu0
      %v3054 = vadd.f32 0.0, %v3053
      %v3055 = vpop.f32.mrb[0].mxu0
      %3056 = vmatprep.mubr.bf16.mxu0 0
      %3057 = vmatmul.mubr.bf16.gmra.mrb[0].mxu0 %v2885
      %v3058 = vpop.f32.mrb[0].mxu0
      %v3059 = vadd.f32 0.0, %v3058
      %v3060 = vpop.f32.mrb[0].mxu0
      %v3061 = vpop.f32.mrb[0].mxu0
      %v3062 = vadd.f32 0.0, %v3061
      %v3063 = vpop.f32.mrb[0].mxu0
      %3064 = vmatprep.mubr.bf16.mxu0 0
      %3065 = vmatmul.mubr.bf16.gmra.mrb[0].mxu0 %v2888
      %v3066 = vpop.f32.mrb[0].mxu0
      %v3067 = vadd.f32 0.0, %v3066
      %v3068 = vpop.f32.mrb[0].mxu0
      %v3069 = vpop.f32.mrb[0].mxu0
      %v3070 = vadd.f32 0.0, %v3069
      %v3071 = vpop.f32.mrb[0].mxu0
      %3072 = vmatprep.mubr.bf16.mxu0 0
      %3073 = vmatmul.mubr.bf16.gmra.mrb[0].mxu0 %v2891
      %v3074 = vpop.f32.mrb[0].mxu0
      %v3075 = vadd.f32 0.0, %v3074
      %v3076 = vpop.f32.mrb[0].mxu0
      %v3077 = vpop.f32.mrb[0].mxu0
      %v3078 = vadd.f32 0.0, %v3077
      %v3079 = vpop.f32.mrb[0].mxu0
      %3080 = vmatprep.mubr.bf16.mxu0 0
      %3081 = vmatmul.mubr.bf16.gmra.mrb[0].mxu0 %v2894
      %v3082 = vpop.f32.mrb[0].mxu0
      %v3083 = vadd.f32 0.0, %v3082
      %v3084 = vpop.f32.mrb[0].mxu0
      %v3085 = vpop.f32.mrb[0].mxu0
      %v3086 = vadd.f32 0.0, %v3085
      %v3087 = vpop.f32.mrb[0].mxu0
      %3088 = vmatprep.mubr.bf16.mxu0 0
      %3089 = vmatmul.mubr.bf16.gmra.mrb[0].mxu0 %v2897
      %v3090 = vpop.f32.mrb[0].mxu0
      %v3091 = vadd.f32 0.0, %v3090
      %v3092 = vpop.f32.mrb[0].mxu0
      %v3093 = vpop.f32.mrb[0].mxu0
      %v3094 = vadd.f32 0.0, %v3093
      %v3095 = vpop.f32.mrb[0].mxu0
      %3096 = vmatprep.mubr.bf16.mxu0 0
      %3097 = vmatmul.mubr.bf16.gmra.mrb[0].mxu0 %v2900
      %v3098 = vpop.f32.mrb[0].mxu0
      %v3099 = vadd.f32 0.0, %v3098
      %v3100 = vpop.f32.mrb[0].mxu0
      %v3101 = vpop.f32.mrb[0].mxu0
      %v3102 = vadd.f32 0.0, %v3101
      %v3103 = vpop.f32.mrb[0].mxu0
      %3104 = vmatprep.mubr.bf16.mxu0 0
      %3105 = vmatmul.mubr.bf16.gmra.mrb[0].mxu0 %v2903
      %v3106 = vpop.f32.mrb[0].mxu0
      %v3107 = vadd.f32 0.0, %v3106
      %v3108 = vpop.f32.mrb[0].mxu0
      %v3109 = vpop.f32.mrb[0].mxu0
      %v3110 = vadd.f32 0.0, %v3109
      %v3111 = vpop.f32.mrb[0].mxu0
      %3112 = vmatprep.mubr.bf16.mxu0 0
      %3113 = vmatmul.mubr.bf16.gmra.mrb[0].mxu0 %v2906
      %v3114 = vpop.f32.mrb[0].mxu0
      %v3115 = vadd.f32 0.0, %v3114
      %v3116 = vpop.f32.mrb[0].mxu0
      %v3117 = vpop.f32.mrb[0].mxu0
      %v3118 = vadd.f32 0.0, %v3117
      %v3119 = vpop.f32.mrb[0].mxu0
      %3120 = vmatprep.mubr.bf16.mxu0 0
      %3121 = vmatmul.mubr.bf16.gmra.mrb[0].mxu0 %v2909
      %v3122 = vpop.f32.mrb[0].mxu0
      %v3123 = vadd.f32 0.0, %v3122
      %v3124 = vpop.f32.mrb[0].mxu0
      %v3125 = vpop.f32.mrb[0].mxu0
      %v3126 = vadd.f32 0.0, %v3125
      %v3127 = vpop.f32.mrb[0].mxu0
      %3128 = vmatprep.mubr.bf16.mxu0 0
      %3129 = vmatmul.mubr.bf16.gmra.mrb[0].mxu0 %v2912
      %v3130 = vpop.f32.mrb[0].mxu0
      %v3131 = vadd.f32 0.0, %v3130
      %v3132 = vpop.f32.mrb[0].mxu0
      %v3133 = vpop.f32.mrb[0].mxu0
      %v3134 = vadd.f32 0.0, %v3133
      %v3135 = vpop.f32.mrb[0].mxu0
      %3136 = vmatprep.mubr.bf16.mxu0 0
      %3137 = vmatmul.mubr.bf16.gmra.mrb[0].mxu0 %v2915
      %v3138 = vpop.f32.mrb[0].mxu0
      %v3139 = vadd.f32 0.0, %v3138
      %v3140 = vpop.f32.mrb[0].mxu0
      %v3141 = vpop.f32.mrb[0].mxu0
      %v3142 = vadd.f32 0.0, %v3141
      %v3143 = vpop.f32.mrb[0].mxu0
      %3144 = vdwg.mxu0
      %v3145 = vadd.f32 %v2616, %v2955
      %v3146 = vadd.f32 %v2617, %v2958
      %v3147 = vadd.f32 %v2618, %v2963
      %v3148 = vadd.f32 %v2619, %v2966
      %v3149 = vadd.f32 %v2620, %v2971
      %v3150 = vadd.f32 %v2621, %v2974
      %v3151 = vadd.f32 %v2622, %v2979
      %v3152 = vadd.f32 %v2623, %v2982
      %v3153 = vadd.f32 %v2624, %v2987
      %v3154 = vadd.f32 %v2625, %v2990
      %v3155 = vadd.f32 %v2626, %v2995
      %v3156 = vadd.f32 %v2627, %v2998
      %v3157 = vadd.f32 %v2628, %v3003
      %v3158 = vadd.f32 %v2629, %v3006
      %v3159 = vadd.f32 %v2630, %v3011
      %v3160 = vadd.f32 %v2631, %v3014
      %v3161 = vadd.f32 %v2632, %v3019
      %v3162 = vadd.f32 %v2633, %v3022
      %v3163 = vadd.f32 %v2634, %v3027
      %v3164 = vadd.f32 %v2635, %v3030
      %v3165 = vadd.f32 %v2636, %v3035
      %v3166 = vadd.f32 %v2637, %v3038
      %v3167 = vadd.f32 %v2638, %v3043
      %v3168 = vadd.f32 %v2639, %v3046
      %v3169 = vadd.f32 %v2640, %v3051
      %v3170 = vadd.f32 %v2641, %v3054
      %v3171 = vadd.f32 %v2642, %v3059
      %v3172 = vadd.f32 %v2643, %v3062
      %v3173 = vadd.f32 %v2644, %v3067
      %v3174 = vadd.f32 %v2645, %v3070
      %v3175 = vadd.f32 %v2646, %v3075
      %v3176 = vadd.f32 %v2647, %v3078
      %v3177 = vadd.f32 %v2648, %v3083
      %v3178 = vadd.f32 %v2649, %v3086
      %v3179 = vadd.f32 %v2650, %v3091
      %v3180 = vadd.f32 %v2651, %v3094
      %v3181 = vadd.f32 %v2652, %v3099
      %v3182 = vadd.f32 %v2653, %v3102
      %v3183 = vadd.f32 %v2654, %v3107
      %v3184 = vadd.f32 %v2655, %v3110
      %v3185 = vadd.f32 %v2656, %v3115
      %v3186 = vadd.f32 %v2657, %v3118
      %v3187 = vadd.f32 %v2658, %v3123
      %v3188 = vadd.f32 %v2659, %v3126
      %v3189 = vadd.f32 %v2660, %v3131
      %v3190 = vadd.f32 %v2661, %v3134
      %v3191 = vadd.f32 %v2662, %v3139
      %v3192 = vadd.f32 %v2663, %v3142
      %v3193 = vld [vmem:[%s4] sm:$0x1]
      %v3195 = vlaneseq
      %v3196 = vshrl.u32 %v3195, 7
      %v3197 = vsub.s32 0, %v3196
      %v3198 = vrot.slane %v3193, %v3197
      %v3200 = vadd.f32 %v3145, %v3198
      %v3201 = vadd.f32 %v3146, %v3198
      %v3202 = vadd.f32 %v3147, %v3198
      %v3203 = vadd.f32 %v3148, %v3198
      %v3204 = vadd.f32 %v3149, %v3198
      %v3205 = vadd.f32 %v3150, %v3198
      %v3206 = vadd.f32 %v3151, %v3198
      %v3207 = vadd.f32 %v3152, %v3198
      %v3208 = vadd.f32 %v3153, %v3198
      %v3209 = vadd.f32 %v3154, %v3198
      %v3210 = vadd.f32 %v3155, %v3198
      %v3211 = vadd.f32 %v3156, %v3198
      %v3212 = vadd.f32 %v3157, %v3198
      %v3213 = vadd.f32 %v3158, %v3198
      %v3214 = vadd.f32 %v3159, %v3198
      %v3215 = vadd.f32 %v3160, %v3198
      %v3216 = vadd.f32 %v3161, %v3198
      %v3217 = vadd.f32 %v3162, %v3198
      %v3218 = vadd.f32 %v3163, %v3198
      %v3219 = vadd.f32 %v3164, %v3198
      %v3220 = vadd.f32 %v3165, %v3198
      %v3221 = vadd.f32 %v3166, %v3198
      %v3222 = vadd.f32 %v3167, %v3198
      %v3223 = vadd.f32 %v3168, %v3198
      %v3224 = vadd.f32 %v3169, %v3198
      %v3225 = vadd.f32 %v3170, %v3198
      %v3226 = vadd.f32 %v3171, %v3198
      %v3227 = vadd.f32 %v3172, %v3198
      %v3228 = vadd.f32 %v3173, %v3198
      %v3229 = vadd.f32 %v3174, %v3198
      %v3230 = vadd.f32 %v3175, %v3198
      %v3231 = vadd.f32 %v3176, %v3198
      %v3232 = vadd.f32 %v3177, %v3198
      %v3233 = vadd.f32 %v3178, %v3198
      %v3234 = vadd.f32 %v3179, %v3198
      %v3235 = vadd.f32 %v3180, %v3198
      %v3236 = vadd.f32 %v3181, %v3198
      %v3237 = vadd.f32 %v3182, %v3198
      %v3238 = vadd.f32 %v3183, %v3198
      %v3239 = vadd.f32 %v3184, %v3198
      %v3240 = vadd.f32 %v3185, %v3198
      %v3241 = vadd.f32 %v3186, %v3198
      %v3242 = vadd.f32 %v3187, %v3198
      %v3243 = vadd.f32 %v3188, %v3198
      %v3244 = vadd.f32 %v3189, %v3198
      %v3245 = vadd.f32 %v3190, %v3198
      %v3246 = vadd.f32 %v3191, %v3198
      %v3247 = vadd.f32 %v3192, %v3198
      %v3248 = vmax.f32 %v3200, 0.0
      %v3249 = vmax.f32 %v3201, 0.0
      %v3250 = vmax.f32 %v3202, 0.0
      %v3251 = vmax.f32 %v3203, 0.0
      %v3252 = vmax.f32 %v3204, 0.0
      %v3253 = vmax.f32 %v3205, 0.0
      %v3254 = vmax.f32 %v3206, 0.0
      %v3255 = vmax.f32 %v3207, 0.0
      %v3256 = vmax.f32 %v3208, 0.0
      %v3257 = vmax.f32 %v3209, 0.0
      %v3258 = vmax.f32 %v3210, 0.0
      %v3259 = vmax.f32 %v3211, 0.0
      %v3260 = vmax.f32 %v3212, 0.0
      %v3261 = vmax.f32 %v3213, 0.0
      %v3262 = vmax.f32 %v3214, 0.0
      %v3263 = vmax.f32 %v3215, 0.0
      %v3264 = vmax.f32 %v3216, 0.0
      %v3265 = vmax.f32 %v3217, 0.0
      %v3266 = vmax.f32 %v3218, 0.0
      %v3267 = vmax.f32 %v3219, 0.0
      %v3268 = vmax.f32 %v3220, 0.0
      %v3269 = vmax.f32 %v3221, 0.0
      %v3270 = vmax.f32 %v3222, 0.0
      %v3271 = vmax.f32 %v3223, 0.0
      %v3272 = vmax.f32 %v3224, 0.0
      %v3273 = vmax.f32 %v3225, 0.0
      %v3274 = vmax.f32 %v3226, 0.0
      %v3275 = vmax.f32 %v3227, 0.0
      %v3276 = vmax.f32 %v3228, 0.0
      %v3277 = vmax.f32 %v3229, 0.0
      %v3278 = vmax.f32 %v3230, 0.0
      %v3279 = vmax.f32 %v3231, 0.0
      %v3280 = vmax.f32 %v3232, 0.0
      %v3281 = vmax.f32 %v3233, 0.0
      %v3282 = vmax.f32 %v3234, 0.0
      %v3283 = vmax.f32 %v3235, 0.0
      %v3284 = vmax.f32 %v3236, 0.0
      %v3285 = vmax.f32 %v3237, 0.0
      %v3286 = vmax.f32 %v3238, 0.0
      %v3287 = vmax.f32 %v3239, 0.0
      %v3288 = vmax.f32 %v3240, 0.0
      %v3289 = vmax.f32 %v3241, 0.0
      %v3290 = vmax.f32 %v3242, 0.0
      %v3291 = vmax.f32 %v3243, 0.0
      %v3292 = vmax.f32 %v3244, 0.0
      %v3293 = vmax.f32 %v3245, 0.0
      %v3294 = vmax.f32 %v3246, 0.0
      %v3295 = vmax.f32 %v3247, 0.0
      %vm3296 = vcmask 523264
      %3297 = vst.msk [vmem:[%s294] sm:$0xff] %vm3296, %v3248
      %3298 = vst.msk [vmem:[%s294 + $0x8] sm:$0xff] %vm3296, %v3249
      %3299 = vst.msk [vmem:[%s294 + $0x10] sm:$0xff] %vm3296, %v3250
      %3300 = vst.msk [vmem:[%s294 + $0x18] sm:$0xff] %vm3296, %v3251
      %3301 = vst.msk [vmem:[%s294 + $0x20] sm:$0xff] %vm3296, %v3252
      %3302 = vst.msk [vmem:[%s294 + $0x28] sm:$0xff] %vm3296, %v3253
      %3303 = vst.msk [vmem:[%s294 + $0x30] sm:$0xff] %vm3296, %v3254
      %3304 = vst.msk [vmem:[%s294 + $0x38] sm:$0xff] %vm3296, %v3255
      %3305 = vst.msk [vmem:[%s294 + $0x40] sm:$0xff] %vm3296, %v3256
      %3306 = vst.msk [vmem:[%s294 + $0x48] sm:$0xff] %vm3296, %v3257
      %3307 = vst.msk [vmem:[%s294 + $0x50] sm:$0xff] %vm3296, %v3258
      %3308 = vst.msk [vmem:[%s294 + $0x58] sm:$0xff] %vm3296, %v3259
      %3309 = vst.msk [vmem:[%s294 + $0x60] sm:$0xff] %vm3296, %v3260
      %3310 = vst.msk [vmem:[%s294 + $0x68] sm:$0xff] %vm3296, %v3261
      %3311 = vst.msk [vmem:[%s294 + $0x70] sm:$0xff] %vm3296, %v3262
      %3312 = vst.msk [vmem:[%s294 + $0x78] sm:$0xff] %vm3296, %v3263
      %3313 = vst.msk [vmem:[%s294 + $0x80] sm:$0xff] %vm3296, %v3264
      %3314 = vst.msk [vmem:[%s294 + $0x88] sm:$0xff] %vm3296, %v3265
      %3315 = vst.msk [vmem:[%s294 + $0x90] sm:$0xff] %vm3296, %v3266
      %3316 = vst.msk [vmem:[%s294 + $0x98] sm:$0xff] %vm3296, %v3267
      %3317 = vst.msk [vmem:[%s294 + $0xa0] sm:$0xff] %vm3296, %v3268
      %3318 = vst.msk [vmem:[%s294 + $0xa8] sm:$0xff] %vm3296, %v3269
      %3319 = vst.msk [vmem:[%s294 + $0xb0] sm:$0xff] %vm3296, %v3270
      %3320 = vst.msk [vmem:[%s294 + $0xb8] sm:$0xff] %vm3296, %v3271
      %3321 = vst.msk [vmem:[%s294 + $0xc0] sm:$0xff] %vm3296, %v3272
      %3322 = vst.msk [vmem:[%s294 + $0xc8] sm:$0xff] %vm3296, %v3273
      %3323 = vst.msk [vmem:[%s294 + $0xd0] sm:$0xff] %vm3296, %v3274
      %3324 = vst.msk [vmem:[%s294 + $0xd8] sm:$0xff] %vm3296, %v3275
      %3325 = vst.msk [vmem:[%s294 + $0xe0] sm:$0xff] %vm3296, %v3276
      %3326 = vst.msk [vmem:[%s294 + $0xe8] sm:$0xff] %vm3296, %v3277
      %3327 = vst.msk [vmem:[%s294 + $0xf0] sm:$0xff] %vm3296, %v3278
      %3328 = vst.msk [vmem:[%s294 + $0xf8] sm:$0xff] %vm3296, %v3279
      %3329 = vst.msk [vmem:[%s294 + $0x100] sm:$0xff] %vm3296, %v3280
      %3330 = vst.msk [vmem:[%s294 + $0x108] sm:$0xff] %vm3296, %v3281
      %3331 = vst.msk [vmem:[%s294 + $0x110] sm:$0xff] %vm3296, %v3282
      %3332 = vst.msk [vmem:[%s294 + $0x118] sm:$0xff] %vm3296, %v3283
      %3333 = vst.msk [vmem:[%s294 + $0x120] sm:$0xff] %vm3296, %v3284
      %3334 = vst.msk [vmem:[%s294 + $0x128] sm:$0xff] %vm3296, %v3285
      %3335 = vst.msk [vmem:[%s294 + $0x130] sm:$0xff] %vm3296, %v3286
      %3336 = vst.msk [vmem:[%s294 + $0x138] sm:$0xff] %vm3296, %v3287
      %3337 = vst.msk [vmem:[%s294 + $0x140] sm:$0xff] %vm3296, %v3288
      %3338 = vst.msk [vmem:[%s294 + $0x148] sm:$0xff] %vm3296, %v3289
      %3339 = vst.msk [vmem:[%s294 + $0x150] sm:$0xff] %vm3296, %v3290
      %3340 = vst.msk [vmem:[%s294 + $0x158] sm:$0xff] %vm3296, %v3291
      %3341 = vst.msk [vmem:[%s294 + $0x160] sm:$0xff] %vm3296, %v3292
      %3342 = vst.msk [vmem:[%s294 + $0x168] sm:$0xff] %vm3296, %v3293
      %3343 = vst.msk [vmem:[%s294 + $0x170] sm:$0xff] %vm3296, %v3294
      %3344 = vst.msk [vmem:[%s294 + $0x178] sm:$0xff] %vm3296, %v3295
      %s3345 = smul.u32 48, %s21
      %p3346 = scmp.lt.s32.totalorder %s20, 0
      %s3347 = scalar_select %p3346, %s20, 0
      %p3348 = scmp.lt.s32.totalorder %s3345, 95
      %s3349 = scalar_select %p3348, %s3345, 95
      %s3350 = smul.addr %s3347, 96
      %s3351 = sadd.s32 %s3349, %s3350
      %s3352 = smul.addr %s3351, 8
      %s3353 = scalar_lea.vmem %s5, %s3352
      // Predicated region
      $region41: #{tpu_custom_call.1} parent=39 // pred_check
        %p3354 = pneg %p167
      $region42: #{tpu_custom_call.1} parent=39 // pred_check_branch
        %3356 = sbr.rel (%p3354) target = $region44
      $region43: #{tpu_custom_call.1} parent=39 // pred_region
        %s3357 = smul.u32 48, %s21
      $region44: #{tpu_custom_call.1} parent=39 // pred_fallthru
        _
    $region40: #{tpu_custom_call.1} parent=5 // pred_fallthru
      _
    %p3358 = scmp.le.s32.totalorder 2, %s11
    // Predicated region
    $region45: #{tpu_custom_call.1} parent=5 // pred_check
      %p3359 = pneg %p3358
    $region46: #{tpu_custom_call.1} parent=5 // pred_check_branch
      %3361 = sbr.rel (%p3359) target = $region48
    $region47: #{tpu_custom_call.1} parent=5 // pred_region
      %s3362 = ssub.s32 %s11, 2
      // Predicated region
      $region49: #{tpu_custom_call.1} parent=47 // pred_check
        %p3363 = pneg %p173
      $region50: #{tpu_custom_call.1} parent=47 // pred_check_branch
        %3365 = sbr.rel (%p3363) target = $region52
      $region51: #{tpu_custom_call.1} parent=47 // pred_region
        %s3366 = smul.u32 48, %s23
        %p3367 = scmp.lt.s32.totalorder %s22, 0
        %s3368 = scalar_select %p3367, %s22, 0
        %p3369 = scmp.lt.s32.totalorder %s3366, 95
        %s3370 = scalar_select %p3369, %s3366, 95
        %s3371 = smul.addr %s3368, 96
        %s3372 = sadd.s32 %s3370, %s3371
        %s3373 = smul.addr %s3372, 8
        %s3374 = scalar_lea.vmem %s5, %s3373
      $region52: #{tpu_custom_call.1} parent=47 // pred_fallthru
        _
    $region48: #{tpu_custom_call.1} parent=5 // pred_fallthru
      _
  $region6: #{tpu_custom_call.1} parent=0 // loop_footer
    %s15 = sadd.s32 1, %s11
  $region7: #{tpu_custom_call.1} parent=0 // loop_footer_branch
    %10 = sbr.rel target = $region3
  $region8: #{tpu_custom_call.1} parent=0 // loop_exit
    _

</llo_original>
